<compile_context>
chip_gen: v7x
topology: tpu7x:2x2x1
jax: 0.10.0
libtpu: 0.0.40
codegen_flags: <defaults>
</compile_context>

<pallas_src>
import functools

import jax
import jax.numpy as jnp
import numpy as np
from jax import lax
from jax.experimental import pallas as pl
from jax.experimental.pallas import tpu as pltpu


# ------------------------------ Pallas kernel -------------------------------

def _ela_kernel(x_ref,
                mh_ref, mw_ref,
                cw0_ref, cw1_ref, cw2_ref,
                bns_ref, bnb_ref, w1x1_ref, fc1_ref, fc2_ref,
                wh_ref, ww_ref,
                o_ref,
                hmap_ref, wmap_ref,
                *, kernel_sizes, H, W, Cc):
    jc = pl.program_id(1)
    C = hmap_ref.shape[0]

    # ---- once per batch element: pools -> multi-scale dwconv -> BN -> 1x1 ----
    @pl.when(jc == 0)
    def _():
        x_all = x_ref[0]                                     # (C, HWp), x dtype
        mh = mh_ref[...]                                     # (H, HWp), x dtype
        mw = mw_ref[...]                                     # (W, HWp), x dtype

        # Directional average pools: contract the flat-spatial axis of x with
        # the host-built 0/1 masks (NT dot_general on the MXU).  Only the
        # small pooled (C,H)/(C,W) descriptors are promoted to f32.
        nt = (((1,), (1,)), ((), ()))
        h_pool = lax.dot_general(x_all, mh, nt,
                                 preferred_element_type=jnp.float32) * (1.0 / W)
        w_pool = lax.dot_general(x_all, mw, nt,
                                 preferred_element_type=jnp.float32) * (1.0 / H)

        bn_s = bns_ref[...]                                  # (C, 1) folded BN
        bn_b = bnb_ref[...]                                  # (C, 1)

        def multi_scale(pool, length):
            # Shared depthwise convs (k = 3, 7, 11) + folded inference BN.
            # TODO(synk): BatchNorm1d is folded with running statistics
            # (inference mode); training-mode batch statistics would couple
            # batch elements across grid steps.
            outs = []
            for cw_ref, k in zip((cw0_ref, cw1_ref, cw2_ref), kernel_sizes):
                cw = cw_ref[...]                             # (C, k) f32
                pad = k // 2
                zeros = jnp.zeros((C, pad), jnp.float32)
                padded = jnp.concatenate([zeros, pool, zeros], axis=1)
                acc = jnp.zeros((C, length), jnp.float32)
                for t in range(k):                           # static unroll
                    acc = acc + cw[:, t:t + 1] * padded[:, t:t + length]
                outs.append(acc * bn_s + bn_b)
            return jnp.concatenate(outs, axis=0)             # (3C, length)

        cat_h = multi_scale(h_pool, H)                       # (3C, H)
        cat_w = multi_scale(w_pool, W)                       # (3C, W)
        # Both branches' 1x1 convs packed into a single MXU matmul.
        y_all = jnp.dot(w1x1_ref[...],
                        jnp.concatenate([cat_h, cat_w], axis=1),
                        preferred_element_type=jnp.float32)  # (C, H+W)
        y_h = y_all[:, :H]                                   # (C, H)
        y_w = y_all[:, H:]                                   # (C, W)

        wh = wh_ref[...]                                     # (1, 1)
        ww = ww_ref[...]                                     # (1, 1)

        # SE gate: fc1 -> swish -> fc2 -> sigmoid on the spatial mean of the
        # combined map (mean of the broadcast sum == sum of the 1-D means).
        ch = (wh * jnp.mean(y_h, axis=1, keepdims=True)
              + ww * jnp.mean(y_w, axis=1, keepdims=True))   # (C, 1)
        z = jnp.dot(fc1_ref[...], ch, preferred_element_type=jnp.float32)
        z = z * jax.nn.sigmoid(z)                            # Swish
        se = jax.nn.sigmoid(
            jnp.dot(fc2_ref[...], z, preferred_element_type=jnp.float32))  # (C,1)

        # Fold branch weights + SE gate into the per-axis maps so the hot
        # gating loop is load -> two small dots -> multiply -> store.
        # TODO(synk): the PyTorch forward cats (b,c,h,1) with (b,c,1,w) on
        # dim=1 (shape-invalid for h,w > 1; the resulting 2c channels would
        # also break fc1 and the final multiply). Implemented the evident
        # intent as the broadcast combine weight_h * y_h + weight_w * y_w.
        hmap_ref[...] = wh * y_h * se                        # (C, H)
        wmap_ref[...] = ww * y_w * se                        # (C, W)

    # ---- every grid step: gate one lane-dense (Cc, HWp) channel slab ----
    c0 = pl.multiple_of(jc * Cc, Cc)
    mh = mh_ref[...]                                         # (H, HWp), resident
    mw = mw_ref[...]                                         # (W, HWp), resident
    hmap = hmap_ref[pl.ds(c0, Cc), :].astype(mh.dtype)       # (Cc, H)
    wmap = wmap_ref[pl.ds(c0, Cc), :].astype(mw.dtype)       # (Cc, W)

    # Expand the small per-axis maps onto the flat spatial axis via the
    # host-precomputed 0/1 masks (MXU slot is otherwise idle here).
    gate = (jnp.dot(hmap, mh, preferred_element_type=jnp.float32)
            + jnp.dot(wmap, mw, preferred_element_type=jnp.float32))  # (Cc,HWp)

    x_chunk = x_ref[0, pl.ds(c0, Cc), :]                     # (Cc, HWp), x dtype
    # Gating in f32; only the product is cast to the output dtype.
    o_ref[0] = (x_chunk.astype(jnp.float32) * gate).astype(o_ref.dtype)


# ------------------------------ host wrapper ---------------------------------

def _pick_channel_chunk(C, HWp, itemsize, target_bytes=2 * 1024 * 1024):
    """Smallest divisor-of-C chunk, sublane-aligned for the dtype's packing
    (f32->8, bf16->16, int8->32), whose (Cc, HWp) slab is >= target bytes."""
    align = max(8, 32 // max(int(itemsize), 1))
    if C % align != 0:
        return C
    for cc in range(align, C + 1, align):
        if C % cc == 0 and cc * HWp * itemsize >= target_bytes:
            return cc
    return C


def _vmem_capacity_bytes():
    try:
        return int(pltpu.get_tpu_info().vmem_capacity_bytes)
    except Exception:
        return 64 * 1024 * 1024          # conservative (v7x per-TensorCore)


def multi_scale_ela(x, params, *, kernel_sizes=(3, 7, 11)):
    B, C, H, W = x.shape
    HW = H * W
    HWp = ((HW + 127) // 128) * 128      # lane-dense flat spatial axis
    itemsize = np.dtype(x.dtype).itemsize
    Cc = _pick_channel_chunk(C, HWp, itemsize)
    n_chunks = C // Cc

    x_flat = x.reshape(B, C, HW)         # free relabel of contiguous NCHW
    if HWp != HW:
        x_flat = jnp.pad(x_flat, ((0, 0), (0, 0), (0, HWp - HW)))

    # Host-built 0/1 masks, reused for directional pooling AND gate expansion;
    # zero in the padded spatial tail, kept in x's dtype (no in-kernel upcast).
    p = np.arange(HWp)
    mask_h = (p[None, :] // W == np.arange(H)[:, None]) & (p[None, :] < HW)
    mask_w = (p[None, :] % W == np.arange(W)[:, None]) & (p[None, :] < HW)
    mask_h = jnp.asarray(mask_h, x.dtype)                    # (H, HWp)
    mask_w = jnp.asarray(mask_w, x.dtype)                    # (W, HWp)

    weights = [
        mask_h, mask_w,
        params["conv_w"][0], params["conv_w"][1], params["conv_w"][2],
        params["bn_scale"], params["bn_bias"], params["w1x1"],
        params["fc1_w"], params["fc2_w"],
        params["weight_h"], params["weight_w"],
    ]

    def resident(arr):
        # Constant block index -> Pallas keeps the small constant resident in
        # VMEM instead of re-DMAing it every grid step.
        return pl.BlockSpec(arr.shape, lambda b, jc: (0,) * arr.ndim)

    # -------- device-aware VMEM budget (v5e/v6e 128 MiB, v7x 64 MiB) --------
    cap = _vmem_capacity_bytes()
    budget = int(cap * 0.85)             # leave headroom for compiler scratch
    x_block = C * HWp * itemsize
    out_block = Cc * HWp * itemsize
    weight_bytes = sum(int(np.prod(w.shape)) * np.dtype(w.dtype).itemsize
                       for w in weights)
    scratch_bytes = (C * H + C * W) * 4
    fixed = 2 * out_block + 2 * weight_bytes + scratch_bytes

    x_spec_kwargs = {}
    x_buffers = 2
    if 2 * x_block + fixed > budget:
        # x's block index is invariant across the chunk axis, so single
        # buffering only forfeits cheap cross-batch prefetch.
        x_spec_kwargs["pipeline_mode"] = pl.Buffered(1)
        x_buffers = 1
        # TODO(synk): if even one (C, HWp) x buffer exceeds the budget, switch
        # x to memory_space=pl.ANY and stream (Cc, HWp) chunks with a
        # chunk-wise pooling-accumulation pass.
    need = x_buffers * x_block + fixed
    vmem_limit = int(min(budget, max(32 * 1024 * 1024, int(need * 1.5))))

    kernel = functools.partial(_ela_kernel, kernel_sizes=tuple(kernel_sizes),
                               H=H, W=W, Cc=Cc)

    out_flat = pl.pallas_call(
        kernel,
        out_shape=jax.ShapeDtypeStruct((B, C, HWp), x.dtype),
        grid=(B, n_chunks),
        in_specs=[pl.BlockSpec((1, C, HWp), lambda b, jc: (b, 0, 0),
                               **x_spec_kwargs)]
                 + [resident(w) for w in weights],
        out_specs=pl.BlockSpec((1, Cc, HWp), lambda b, jc: (b, jc, 0)),
        scratch_shapes=[pltpu.VMEM((C, H), jnp.float32),
                        pltpu.VMEM((C, W), jnp.float32)],
        # TODO(synk): on v7x (2 TCs) a B == 1 call leaves one core idle; the
        # jc == 0 branch math would need to leave the grid before the chunk
        # axis could itself be marked parallel.
        compiler_params=pltpu.CompilerParams(
            dimension_semantics=("parallel", "arbitrary"),
            vmem_limit_bytes=vmem_limit),
    )(x_flat, *weights)

    if HWp != HW:
        out_flat = out_flat[:, :, :HW]
    return out_flat.reshape(B, C, H, W)


# --------------------------- pure-JAX reference ------------------------------

def ref_forward(x, p, kernel_sizes=(3, 7, 11)):
    B, C, H, W = x.shape
    hp = jax.lax.Precision.HIGHEST
    bn_s = p["bn_scale"].reshape(1, C, 1)
    bn_b = p["bn_bias"].reshape(1, C, 1)

    def multi_scale(v):                                      # (B, C, L)
        L = v.shape[-1]
        outs = []
        for w_, k in zip(p["conv_w"], kernel_sizes):
            pad = k // 2
            vp = jnp.pad(v, ((0, 0), (0, 0), (pad, pad)))
            o = jnp.zeros_like(v)
            for t in range(k):
                o = o + w_[None, :, t:t + 1] * vp[:, :, t:t + L]
            outs.append(o * bn_s + bn_b)
        cat = jnp.concatenate(outs, axis=1)                  # (B, 3C, L)
        return jnp.einsum("oc,bcl->bol", p["w1x1"], cat, precision=hp)

    y_h = multi_scale(x.mean(3))                             # (B, C, H)
    y_w = multi_scale(x.mean(2))                             # (B, C, W)

    wh = p["weight_h"][0, 0]
    ww = p["weight_w"][0, 0]
    ch = wh * y_h.mean(-1) + ww * y_w.mean(-1)               # (B, C)
    z = jnp.einsum("rc,bc->br", p["fc1_w"], ch, precision=hp)
    z = z * jax.nn.sigmoid(z)                                # Swish
    s = jax.nn.sigmoid(jnp.einsum("cr,br->bc", p["fc2_w"], z, precision=hp))
    comb = (wh * y_h[:, :, :, None] + ww * y_w[:, :, None, :]) * s[:, :, None, None]
    return x * comb


# --------------------------------- params ------------------------------------

def make_params(key, C, kernel_sizes=(3, 7, 11), reduction=16, eps=1e-5):
    Cr = max(C // reduction, 1)
    n = len(kernel_sizes)
    ks = jax.random.split(key, 10)
    conv_w = [0.1 * jax.random.normal(ks[i], (C, k), jnp.float32)
              for i, k in enumerate(kernel_sizes)]
    gamma = 1.0 + 0.1 * jax.random.normal(ks[3], (C,), jnp.float32)
    beta = 0.1 * jax.random.normal(ks[4], (C,), jnp.float32)
    run_mean = 0.1 * jax.random.normal(ks[5], (C,), jnp.float32)
    run_var = jnp.abs(1.0 + 0.1 * jax.random.normal(ks[6], (C,), jnp.float32))
    bn_scale = gamma / jnp.sqrt(run_var + eps)
    bn_bias = beta - run_mean * bn_scale
    return {
        "conv_w": conv_w,
        "bn_scale": bn_scale.reshape(C, 1),
        "bn_bias": bn_bias.reshape(C, 1),
        "w1x1": 0.15 * jax.random.normal(ks[7], (C, n * C), jnp.float32),
        "fc1_w": 0.2 * jax.random.normal(ks[8], (Cr, C), jnp.float32),
        "fc2_w": 0.2 * jax.random.normal(ks[9], (C, Cr), jnp.float32),
        "weight_h": jnp.full((1, 1), 1.0, jnp.float32),
        "weight_w": jnp.full((1, 1), 0.9, jnp.float32),
    }


# ----------------------------------- main -------------------------------------

if __name__ == "__main__":
    B, C, H, W = 2, 32, 16, 16          # reduction=16 -> SE hidden dim = 2
    kernel_sizes = (3, 7, 11)

    key = jax.random.PRNGKey(0)
    kx, kp = jax.random.split(key)
    x = jax.random.normal(kx, (B, C, H, W), jnp.float32)
    params = make_params(kp, C, kernel_sizes=kernel_sizes, reduction=16)

    out = jax.block_until_ready(multi_scale_ela(x, params, kernel_sizes=kernel_sizes))
    ref = jax.block_until_ready(ref_forward(x, params, kernel_sizes=kernel_sizes))

    np.testing.assert_allclose(np.asarray(out), np.asarray(ref),
                               atol=5e-4, rtol=5e-4)
    print("KERNEL_OK")
</pallas_src>

<mosaic_0001>
module attributes {stable_mosaic.version = 11 : i64} {
  func.func @_ela_kernel(%arg0: i32, %arg1: i32, %arg2: memref<1x32x256xf32, #tpu.memory_space<vmem>>, %arg3: memref<16x256xf32, #tpu.memory_space<vmem>>, %arg4: memref<16x256xf32, #tpu.memory_space<vmem>>, %arg5: memref<32x3xf32, #tpu.memory_space<vmem>>, %arg6: memref<32x7xf32, #tpu.memory_space<vmem>>, %arg7: memref<32x11xf32, #tpu.memory_space<vmem>>, %arg8: memref<32x1xf32, #tpu.memory_space<vmem>>, %arg9: memref<32x1xf32, #tpu.memory_space<vmem>>, %arg10: memref<32x96xf32, #tpu.memory_space<vmem>>, %arg11: memref<2x32xf32, #tpu.memory_space<vmem>>, %arg12: memref<32x2xf32, #tpu.memory_space<vmem>>, %arg13: memref<1x1xf32, #tpu.memory_space<vmem>>, %arg14: memref<1x1xf32, #tpu.memory_space<vmem>>, %arg15: memref<1x32x256xf32, #tpu.memory_space<vmem>>, %arg16: memref<32x16xf32, #tpu.memory_space<vmem>>, %arg17: memref<32x16xf32, #tpu.memory_space<vmem>>) attributes {dimension_semantics = [#tpu.dimension_semantics<parallel>, #tpu.dimension_semantics<arbitrary>], iteration_bounds = array<i64: 2, 1>, scalar_prefetch = 0 : i64, scratch_operands = 2 : i64, tpu.core_type = #tpu.core_type<tc>, window_params = [{transform_indices = @transform_0, window_bounds = array<i64: 1, 32, 256>}, {pipeline_mode = #tpu.pipeline_mode<synchronous>, transform_indices = @transform_1, window_bounds = array<i64: 16, 256>}, {pipeline_mode = #tpu.pipeline_mode<synchronous>, transform_indices = @transform_2, window_bounds = array<i64: 16, 256>}, {pipeline_mode = #tpu.pipeline_mode<synchronous>, transform_indices = @transform_3, window_bounds = array<i64: 32, 3>}, {pipeline_mode = #tpu.pipeline_mode<synchronous>, transform_indices = @transform_4, window_bounds = array<i64: 32, 7>}, {pipeline_mode = #tpu.pipeline_mode<synchronous>, transform_indices = @transform_5, window_bounds = array<i64: 32, 11>}, {pipeline_mode = #tpu.pipeline_mode<synchronous>, transform_indices = @transform_6, window_bounds = array<i64: 32, 1>}, {pipeline_mode = #tpu.pipeline_mode<synchronous>, transform_indices = @transform_7, window_bounds = array<i64: 32, 1>}, {pipeline_mode = #tpu.pipeline_mode<synchronous>, transform_indices = @transform_8, window_bounds = array<i64: 32, 96>}, {pipeline_mode = #tpu.pipeline_mode<synchronous>, transform_indices = @transform_9, window_bounds = array<i64: 2, 32>}, {pipeline_mode = #tpu.pipeline_mode<synchronous>, transform_indices = @transform_10, window_bounds = array<i64: 32, 2>}, {pipeline_mode = #tpu.pipeline_mode<synchronous>, transform_indices = @transform_11, window_bounds = array<i64: 1, 1>}, {pipeline_mode = #tpu.pipeline_mode<synchronous>, transform_indices = @transform_12, window_bounds = array<i64: 1, 1>}, {transform_indices = @transform_13, window_bounds = array<i64: 1, 32, 256>}]} {
    %c0_i32 = arith.constant 0 : i32
    %0 = arith.cmpi eq, %arg1, %c0_i32 : i32
    %1 = arith.extui %0 : i1 to i32
    %c0_i32_0 = arith.constant 0 : i32
    %2 = arith.cmpi ne, %1, %c0_i32_0 : i32
    scf.if %2 {
      %c0_12 = arith.constant 0 : index
      %c0_13 = arith.constant 0 : index
      %c0_14 = arith.constant 0 : index
      %21 = vector.load %arg2[%c0_12, %c0_13, %c0_14] : memref<1x32x256xf32, #tpu.memory_space<vmem>>, vector<1x32x256xf32>
      %22 = vector.shape_cast %21 : vector<1x32x256xf32> to vector<32x256xf32>
      %c0_15 = arith.constant 0 : index
      %c0_16 = arith.constant 0 : index
      %23 = vector.load %arg3[%c0_15, %c0_16] : memref<16x256xf32, #tpu.memory_space<vmem>>, vector<16x256xf32>
      %c0_17 = arith.constant 0 : index
      %c0_18 = arith.constant 0 : index
      %24 = vector.load %arg4[%c0_17, %c0_18] : memref<16x256xf32, #tpu.memory_space<vmem>>, vector<16x256xf32>
      %cst_19 = arith.constant dense<0.000000e+00> : vector<32x16xf32>
      %25 = tpu.matmul %22, %23, %cst_19 {dimension_numbers = #tpu.dot_dimension_numbers<[1], [1], [0], [0], [0, 0, 1, 0], [], []>} : vector<32x256xf32>, vector<16x256xf32>, vector<32x16xf32> -> vector<32x16xf32>
      %cst_20 = arith.constant 6.250000e-02 : f32
      %26 = vector.broadcast %cst_20 : f32 to vector<32x16xf32>
      %27 = arith.mulf %25, %26 : vector<32x16xf32>
      %cst_21 = arith.constant dense<0.000000e+00> : vector<32x16xf32>
      %28 = tpu.matmul %22, %24, %cst_21 {dimension_numbers = #tpu.dot_dimension_numbers<[1], [1], [0], [0], [0, 0, 1, 0], [], []>} : vector<32x256xf32>, vector<16x256xf32>, vector<32x16xf32> -> vector<32x16xf32>
      %cst_22 = arith.constant 6.250000e-02 : f32
      %29 = vector.broadcast %cst_22 : f32 to vector<32x16xf32>
      %30 = arith.mulf %28, %29 : vector<32x16xf32>
      %c0_23 = arith.constant 0 : index
      %c0_24 = arith.constant 0 : index
      %31 = vector.load %arg8[%c0_23, %c0_24] : memref<32x1xf32, #tpu.memory_space<vmem>>, vector<32x1xf32>
      %c0_25 = arith.constant 0 : index
      %c0_26 = arith.constant 0 : index
      %32 = vector.load %arg9[%c0_25, %c0_26] : memref<32x1xf32, #tpu.memory_space<vmem>>, vector<32x1xf32>
      %c0_27 = arith.constant 0 : index
      %c0_28 = arith.constant 0 : index
      %33 = vector.load %arg5[%c0_27, %c0_28] : memref<32x3xf32, #tpu.memory_space<vmem>>, vector<32x3xf32>
      %cst_29 = arith.constant 0.000000e+00 : f32
      %34 = vector.broadcast %cst_29 : f32 to vector<32x1xf32>
      %35 = tpu.concatenate %34, %27, %34 in 1 : vector<32x1xf32>, vector<32x16xf32>, vector<32x1xf32> -> vector<32x18xf32>
      %cst_30 = arith.constant 0.000000e+00 : f32
      %36 = vector.broadcast %cst_30 : f32 to vector<32x16xf32>
      %37 = vector.extract_strided_slice %33 {offsets = [0, 0], sizes = [32, 1], strides = [1, 1]} : vector<32x3xf32> to vector<32x1xf32>
      %38 = vector.extract_strided_slice %35 {offsets = [0, 0], sizes = [32, 16], strides = [1, 1]} : vector<32x18xf32> to vector<32x16xf32>
      %39 = vector.broadcast %37 : vector<32x1xf32> to vector<32x16xf32>
      %40 = arith.mulf %39, %38 : vector<32x16xf32>
      %41 = arith.addf %36, %40 : vector<32x16xf32>
      %42 = vector.extract_strided_slice %33 {offsets = [0, 1], sizes = [32, 1], strides = [1, 1]} : vector<32x3xf32> to vector<32x1xf32>
      %43 = vector.extract_strided_slice %35 {offsets = [0, 1], sizes = [32, 16], strides = [1, 1]} : vector<32x18xf32> to vector<32x16xf32>
      %44 = vector.broadcast %42 : vector<32x1xf32> to vector<32x16xf32>
      %45 = arith.mulf %44, %43 : vector<32x16xf32>
      %46 = arith.addf %41, %45 : vector<32x16xf32>
      %47 = vector.extract_strided_slice %33 {offsets = [0, 2], sizes = [32, 1], strides = [1, 1]} : vector<32x3xf32> to vector<32x1xf32>
      %48 = vector.extract_strided_slice %35 {offsets = [0, 2], sizes = [32, 16], strides = [1, 1]} : vector<32x18xf32> to vector<32x16xf32>
      %49 = vector.broadcast %47 : vector<32x1xf32> to vector<32x16xf32>
      %50 = arith.mulf %49, %48 : vector<32x16xf32>
      %51 = arith.addf %46, %50 : vector<32x16xf32>
      %52 = vector.broadcast %31 : vector<32x1xf32> to vector<32x16xf32>
      %53 = arith.mulf %51, %52 : vector<32x16xf32>
      %54 = vector.broadcast %32 : vector<32x1xf32> to vector<32x16xf32>
      %55 = arith.addf %53, %54 : vector<32x16xf32>
      %c0_31 = arith.constant 0 : index
      %c0_32 = arith.constant 0 : index
      %56 = vector.load %arg6[%c0_31, %c0_32] : memref<32x7xf32, #tpu.memory_space<vmem>>, vector<32x7xf32>
      %cst_33 = arith.constant 0.000000e+00 : f32
      %57 = vector.broadcast %cst_33 : f32 to vector<32x3xf32>
      %58 = tpu.concatenate %57, %27, %57 in 1 : vector<32x3xf32>, vector<32x16xf32>, vector<32x3xf32> -> vector<32x22xf32>
      %cst_34 = arith.constant 0.000000e+00 : f32
      %59 = vector.broadcast %cst_34 : f32 to vector<32x16xf32>
      %60 = vector.extract_strided_slice %56 {offsets = [0, 0], sizes = [32, 1], strides = [1, 1]} : vector<32x7xf32> to vector<32x1xf32>
      %61 = vector.extract_strided_slice %58 {offsets = [0, 0], sizes = [32, 16], strides = [1, 1]} : vector<32x22xf32> to vector<32x16xf32>
      %62 = vector.broadcast %60 : vector<32x1xf32> to vector<32x16xf32>
      %63 = arith.mulf %62, %61 : vector<32x16xf32>
      %64 = arith.addf %59, %63 : vector<32x16xf32>
      %65 = vector.extract_strided_slice %56 {offsets = [0, 1], sizes = [32, 1], strides = [1, 1]} : vector<32x7xf32> to vector<32x1xf32>
      %66 = vector.extract_strided_slice %58 {offsets = [0, 1], sizes = [32, 16], strides = [1, 1]} : vector<32x22xf32> to vector<32x16xf32>
      %67 = vector.broadcast %65 : vector<32x1xf32> to vector<32x16xf32>
      %68 = arith.mulf %67, %66 : vector<32x16xf32>
      %69 = arith.addf %64, %68 : vector<32x16xf32>
      %70 = vector.extract_strided_slice %56 {offsets = [0, 2], sizes = [32, 1], strides = [1, 1]} : vector<32x7xf32> to vector<32x1xf32>
      %71 = vector.extract_strided_slice %58 {offsets = [0, 2], sizes = [32, 16], strides = [1, 1]} : vector<32x22xf32> to vector<32x16xf32>
      %72 = vector.broadcast %70 : vector<32x1xf32> to vector<32x16xf32>
      %73 = arith.mulf %72, %71 : vector<32x16xf32>
      %74 = arith.addf %69, %73 : vector<32x16xf32>
      %75 = vector.extract_strided_slice %56 {offsets = [0, 3], sizes = [32, 1], strides = [1, 1]} : vector<32x7xf32> to vector<32x1xf32>
      %76 = vector.extract_strided_slice %58 {offsets = [0, 3], sizes = [32, 16], strides = [1, 1]} : vector<32x22xf32> to vector<32x16xf32>
      %77 = vector.broadcast %75 : vector<32x1xf32> to vector<32x16xf32>
      %78 = arith.mulf %77, %76 : vector<32x16xf32>
      %79 = arith.addf %74, %78 : vector<32x16xf32>
      %80 = vector.extract_strided_slice %56 {offsets = [0, 4], sizes = [32, 1], strides = [1, 1]} : vector<32x7xf32> to vector<32x1xf32>
      %81 = vector.extract_strided_slice %58 {offsets = [0, 4], sizes = [32, 16], strides = [1, 1]} : vector<32x22xf32> to vector<32x16xf32>
      %82 = vector.broadcast %80 : vector<32x1xf32> to vector<32x16xf32>
      %83 = arith.mulf %82, %81 : vector<32x16xf32>
      %84 = arith.addf %79, %83 : vector<32x16xf32>
      %85 = vector.extract_strided_slice %56 {offsets = [0, 5], sizes = [32, 1], strides = [1, 1]} : vector<32x7xf32> to vector<32x1xf32>
      %86 = vector.extract_strided_slice %58 {offsets = [0, 5], sizes = [32, 16], strides = [1, 1]} : vector<32x22xf32> to vector<32x16xf32>
      %87 = vector.broadcast %85 : vector<32x1xf32> to vector<32x16xf32>
      %88 = arith.mulf %87, %86 : vector<32x16xf32>
      %89 = arith.addf %84, %88 : vector<32x16xf32>
      %90 = vector.extract_strided_slice %56 {offsets = [0, 6], sizes = [32, 1], strides = [1, 1]} : vector<32x7xf32> to vector<32x1xf32>
      %91 = vector.extract_strided_slice %58 {offsets = [0, 6], sizes = [32, 16], strides = [1, 1]} : vector<32x22xf32> to vector<32x16xf32>
      %92 = vector.broadcast %90 : vector<32x1xf32> to vector<32x16xf32>
      %93 = arith.mulf %92, %91 : vector<32x16xf32>
      %94 = arith.addf %89, %93 : vector<32x16xf32>
      %95 = vector.broadcast %31 : vector<32x1xf32> to vector<32x16xf32>
      %96 = arith.mulf %94, %95 : vector<32x16xf32>
      %97 = vector.broadcast %32 : vector<32x1xf32> to vector<32x16xf32>
      %98 = arith.addf %96, %97 : vector<32x16xf32>
      %c0_35 = arith.constant 0 : index
      %c0_36 = arith.constant 0 : index
      %99 = vector.load %arg7[%c0_35, %c0_36] : memref<32x11xf32, #tpu.memory_space<vmem>>, vector<32x11xf32>
      %cst_37 = arith.constant 0.000000e+00 : f32
      %100 = vector.broadcast %cst_37 : f32 to vector<32x5xf32>
      %101 = tpu.concatenate %100, %27, %100 in 1 : vector<32x5xf32>, vector<32x16xf32>, vector<32x5xf32> -> vector<32x26xf32>
      %cst_38 = arith.constant 0.000000e+00 : f32
      %102 = vector.broadcast %cst_38 : f32 to vector<32x16xf32>
      %103 = vector.extract_strided_slice %99 {offsets = [0, 0], sizes = [32, 1], strides = [1, 1]} : vector<32x11xf32> to vector<32x1xf32>
      %104 = vector.extract_strided_slice %101 {offsets = [0, 0], sizes = [32, 16], strides = [1, 1]} : vector<32x26xf32> to vector<32x16xf32>
      %105 = vector.broadcast %103 : vector<32x1xf32> to vector<32x16xf32>
      %106 = arith.mulf %105, %104 : vector<32x16xf32>
      %107 = arith.addf %102, %106 : vector<32x16xf32>
      %108 = vector.extract_strided_slice %99 {offsets = [0, 1], sizes = [32, 1], strides = [1, 1]} : vector<32x11xf32> to vector<32x1xf32>
      %109 = vector.extract_strided_slice %101 {offsets = [0, 1], sizes = [32, 16], strides = [1, 1]} : vector<32x26xf32> to vector<32x16xf32>
      %110 = vector.broadcast %108 : vector<32x1xf32> to vector<32x16xf32>
      %111 = arith.mulf %110, %109 : vector<32x16xf32>
      %112 = arith.addf %107, %111 : vector<32x16xf32>
      %113 = vector.extract_strided_slice %99 {offsets = [0, 2], sizes = [32, 1], strides = [1, 1]} : vector<32x11xf32> to vector<32x1xf32>
      %114 = vector.extract_strided_slice %101 {offsets = [0, 2], sizes = [32, 16], strides = [1, 1]} : vector<32x26xf32> to vector<32x16xf32>
      %115 = vector.broadcast %113 : vector<32x1xf32> to vector<32x16xf32>
      %116 = arith.mulf %115, %114 : vector<32x16xf32>
      %117 = arith.addf %112, %116 : vector<32x16xf32>
      %118 = vector.extract_strided_slice %99 {offsets = [0, 3], sizes = [32, 1], strides = [1, 1]} : vector<32x11xf32> to vector<32x1xf32>
      %119 = vector.extract_strided_slice %101 {offsets = [0, 3], sizes = [32, 16], strides = [1, 1]} : vector<32x26xf32> to vector<32x16xf32>
      %120 = vector.broadcast %118 : vector<32x1xf32> to vector<32x16xf32>
      %121 = arith.mulf %120, %119 : vector<32x16xf32>
      %122 = arith.addf %117, %121 : vector<32x16xf32>
      %123 = vector.extract_strided_slice %99 {offsets = [0, 4], sizes = [32, 1], strides = [1, 1]} : vector<32x11xf32> to vector<32x1xf32>
      %124 = vector.extract_strided_slice %101 {offsets = [0, 4], sizes = [32, 16], strides = [1, 1]} : vector<32x26xf32> to vector<32x16xf32>
      %125 = vector.broadcast %123 : vector<32x1xf32> to vector<32x16xf32>
      %126 = arith.mulf %125, %124 : vector<32x16xf32>
      %127 = arith.addf %122, %126 : vector<32x16xf32>
      %128 = vector.extract_strided_slice %99 {offsets = [0, 5], sizes = [32, 1], strides = [1, 1]} : vector<32x11xf32> to vector<32x1xf32>
      %129 = vector.extract_strided_slice %101 {offsets = [0, 5], sizes = [32, 16], strides = [1, 1]} : vector<32x26xf32> to vector<32x16xf32>
      %130 = vector.broadcast %128 : vector<32x1xf32> to vector<32x16xf32>
      %131 = arith.mulf %130, %129 : vector<32x16xf32>
      %132 = arith.addf %127, %131 : vector<32x16xf32>
      %133 = vector.extract_strided_slice %99 {offsets = [0, 6], sizes = [32, 1], strides = [1, 1]} : vector<32x11xf32> to vector<32x1xf32>
      %134 = vector.extract_strided_slice %101 {offsets = [0, 6], sizes = [32, 16], strides = [1, 1]} : vector<32x26xf32> to vector<32x16xf32>
      %135 = vector.broadcast %133 : vector<32x1xf32> to vector<32x16xf32>
      %136 = arith.mulf %135, %134 : vector<32x16xf32>
      %137 = arith.addf %132, %136 : vector<32x16xf32>
      %138 = vector.extract_strided_slice %99 {offsets = [0, 7], sizes = [32, 1], strides = [1, 1]} : vector<32x11xf32> to vector<32x1xf32>
      %139 = vector.extract_strided_slice %101 {offsets = [0, 7], sizes = [32, 16], strides = [1, 1]} : vector<32x26xf32> to vector<32x16xf32>
      %140 = vector.broadcast %138 : vector<32x1xf32> to vector<32x16xf32>
      %141 = arith.mulf %140, %139 : vector<32x16xf32>
      %142 = arith.addf %137, %141 : vector<32x16xf32>
      %143 = vector.extract_strided_slice %99 {offsets = [0, 8], sizes = [32, 1], strides = [1, 1]} : vector<32x11xf32> to vector<32x1xf32>
      %144 = vector.extract_strided_slice %101 {offsets = [0, 8], sizes = [32, 16], strides = [1, 1]} : vector<32x26xf32> to vector<32x16xf32>
      %145 = vector.broadcast %143 : vector<32x1xf32> to vector<32x16xf32>
      %146 = arith.mulf %145, %144 : vector<32x16xf32>
      %147 = arith.addf %142, %146 : vector<32x16xf32>
      %148 = vector.extract_strided_slice %99 {offsets = [0, 9], sizes = [32, 1], strides = [1, 1]} : vector<32x11xf32> to vector<32x1xf32>
      %149 = vector.extract_strided_slice %101 {offsets = [0, 9], sizes = [32, 16], strides = [1, 1]} : vector<32x26xf32> to vector<32x16xf32>
      %150 = vector.broadcast %148 : vector<32x1xf32> to vector<32x16xf32>
      %151 = arith.mulf %150, %149 : vector<32x16xf32>
      %152 = arith.addf %147, %151 : vector<32x16xf32>
      %153 = vector.extract_strided_slice %99 {offsets = [0, 10], sizes = [32, 1], strides = [1, 1]} : vector<32x11xf32> to vector<32x1xf32>
      %154 = vector.extract_strided_slice %101 {offsets = [0, 10], sizes = [32, 16], strides = [1, 1]} : vector<32x26xf32> to vector<32x16xf32>
      %155 = vector.broadcast %153 : vector<32x1xf32> to vector<32x16xf32>
      %156 = arith.mulf %155, %154 : vector<32x16xf32>
      %157 = arith.addf %152, %156 : vector<32x16xf32>
      %158 = vector.broadcast %31 : vector<32x1xf32> to vector<32x16xf32>
      %159 = arith.mulf %157, %158 : vector<32x16xf32>
      %160 = vector.broadcast %32 : vector<32x1xf32> to vector<32x16xf32>
      %161 = arith.addf %159, %160 : vector<32x16xf32>
      %162 = tpu.concatenate %55, %98, %161 in 0 : vector<32x16xf32>, vector<32x16xf32>, vector<32x16xf32> -> vector<96x16xf32>
      %c0_39 = arith.constant 0 : index
      %c0_40 = arith.constant 0 : index
      %163 = vector.load %arg5[%c0_39, %c0_40] : memref<32x3xf32, #tpu.memory_space<vmem>>, vector<32x3xf32>
      %cst_41 = arith.constant 0.000000e+00 : f32
      %164 = vector.broadcast %cst_41 : f32 to vector<32x1xf32>
      %165 = tpu.concatenate %164, %30, %164 in 1 : vector<32x1xf32>, vector<32x16xf32>, vector<32x1xf32> -> vector<32x18xf32>
      %cst_42 = arith.constant 0.000000e+00 : f32
      %166 = vector.broadcast %cst_42 : f32 to vector<32x16xf32>
      %167 = vector.extract_strided_slice %163 {offsets = [0, 0], sizes = [32, 1], strides = [1, 1]} : vector<32x3xf32> to vector<32x1xf32>
      %168 = vector.extract_strided_slice %165 {offsets = [0, 0], sizes = [32, 16], strides = [1, 1]} : vector<32x18xf32> to vector<32x16xf32>
      %169 = vector.broadcast %167 : vector<32x1xf32> to vector<32x16xf32>
      %170 = arith.mulf %169, %168 : vector<32x16xf32>
      %171 = arith.addf %166, %170 : vector<32x16xf32>
      %172 = vector.extract_strided_slice %163 {offsets = [0, 1], sizes = [32, 1], strides = [1, 1]} : vector<32x3xf32> to vector<32x1xf32>
      %173 = vector.extract_strided_slice %165 {offsets = [0, 1], sizes = [32, 16], strides = [1, 1]} : vector<32x18xf32> to vector<32x16xf32>
      %174 = vector.broadcast %172 : vector<32x1xf32> to vector<32x16xf32>
      %175 = arith.mulf %174, %173 : vector<32x16xf32>
      %176 = arith.addf %171, %175 : vector<32x16xf32>
      %177 = vector.extract_strided_slice %163 {offsets = [0, 2], sizes = [32, 1], strides = [1, 1]} : vector<32x3xf32> to vector<32x1xf32>
      %178 = vector.extract_strided_slice %165 {offsets = [0, 2], sizes = [32, 16], strides = [1, 1]} : vector<32x18xf32> to vector<32x16xf32>
      %179 = vector.broadcast %177 : vector<32x1xf32> to vector<32x16xf32>
      %180 = arith.mulf %179, %178 : vector<32x16xf32>
      %181 = arith.addf %176, %180 : vector<32x16xf32>
      %182 = vector.broadcast %31 : vector<32x1xf32> to vector<32x16xf32>
      %183 = arith.mulf %181, %182 : vector<32x16xf32>
      %184 = vector.broadcast %32 : vector<32x1xf32> to vector<32x16xf32>
      %185 = arith.addf %183, %184 : vector<32x16xf32>
      %c0_43 = arith.constant 0 : index
      %c0_44 = arith.constant 0 : index
      %186 = vector.load %arg6[%c0_43, %c0_44] : memref<32x7xf32, #tpu.memory_space<vmem>>, vector<32x7xf32>
      %cst_45 = arith.constant 0.000000e+00 : f32
      %187 = vector.broadcast %cst_45 : f32 to vector<32x3xf32>
      %188 = tpu.concatenate %187, %30, %187 in 1 : vector<32x3xf32>, vector<32x16xf32>, vector<32x3xf32> -> vector<32x22xf32>
      %cst_46 = arith.constant 0.000000e+00 : f32
      %189 = vector.broadcast %cst_46 : f32 to vector<32x16xf32>
      %190 = vector.extract_strided_slice %186 {offsets = [0, 0], sizes = [32, 1], strides = [1, 1]} : vector<32x7xf32> to vector<32x1xf32>
      %191 = vector.extract_strided_slice %188 {offsets = [0, 0], sizes = [32, 16], strides = [1, 1]} : vector<32x22xf32> to vector<32x16xf32>
      %192 = vector.broadcast %190 : vector<32x1xf32> to vector<32x16xf32>
      %193 = arith.mulf %192, %191 : vector<32x16xf32>
      %194 = arith.addf %189, %193 : vector<32x16xf32>
      %195 = vector.extract_strided_slice %186 {offsets = [0, 1], sizes = [32, 1], strides = [1, 1]} : vector<32x7xf32> to vector<32x1xf32>
      %196 = vector.extract_strided_slice %188 {offsets = [0, 1], sizes = [32, 16], strides = [1, 1]} : vector<32x22xf32> to vector<32x16xf32>
      %197 = vector.broadcast %195 : vector<32x1xf32> to vector<32x16xf32>
      %198 = arith.mulf %197, %196 : vector<32x16xf32>
      %199 = arith.addf %194, %198 : vector<32x16xf32>
      %200 = vector.extract_strided_slice %186 {offsets = [0, 2], sizes = [32, 1], strides = [1, 1]} : vector<32x7xf32> to vector<32x1xf32>
      %201 = vector.extract_strided_slice %188 {offsets = [0, 2], sizes = [32, 16], strides = [1, 1]} : vector<32x22xf32> to vector<32x16xf32>
      %202 = vector.broadcast %200 : vector<32x1xf32> to vector<32x16xf32>
      %203 = arith.mulf %202, %201 : vector<32x16xf32>
      %204 = arith.addf %199, %203 : vector<32x16xf32>
      %205 = vector.extract_strided_slice %186 {offsets = [0, 3], sizes = [32, 1], strides = [1, 1]} : vector<32x7xf32> to vector<32x1xf32>
      %206 = vector.extract_strided_slice %188 {offsets = [0, 3], sizes = [32, 16], strides = [1, 1]} : vector<32x22xf32> to vector<32x16xf32>
      %207 = vector.broadcast %205 : vector<32x1xf32> to vector<32x16xf32>
      %208 = arith.mulf %207, %206 : vector<32x16xf32>
      %209 = arith.addf %204, %208 : vector<32x16xf32>
      %210 = vector.extract_strided_slice %186 {offsets = [0, 4], sizes = [32, 1], strides = [1, 1]} : vector<32x7xf32> to vector<32x1xf32>
      %211 = vector.extract_strided_slice %188 {offsets = [0, 4], sizes = [32, 16], strides = [1, 1]} : vector<32x22xf32> to vector<32x16xf32>
      %212 = vector.broadcast %210 : vector<32x1xf32> to vector<32x16xf32>
      %213 = arith.mulf %212, %211 : vector<32x16xf32>
      %214 = arith.addf %209, %213 : vector<32x16xf32>
      %215 = vector.extract_strided_slice %186 {offsets = [0, 5], sizes = [32, 1], strides = [1, 1]} : vector<32x7xf32> to vector<32x1xf32>
      %216 = vector.extract_strided_slice %188 {offsets = [0, 5], sizes = [32, 16], strides = [1, 1]} : vector<32x22xf32> to vector<32x16xf32>
      %217 = vector.broadcast %215 : vector<32x1xf32> to vector<32x16xf32>
      %218 = arith.mulf %217, %216 : vector<32x16xf32>
      %219 = arith.addf %214, %218 : vector<32x16xf32>
      %220 = vector.extract_strided_slice %186 {offsets = [0, 6], sizes = [32, 1], strides = [1, 1]} : vector<32x7xf32> to vector<32x1xf32>
      %221 = vector.extract_strided_slice %188 {offsets = [0, 6], sizes = [32, 16], strides = [1, 1]} : vector<32x22xf32> to vector<32x16xf32>
      %222 = vector.broadcast %220 : vector<32x1xf32> to vector<32x16xf32>
      %223 = arith.mulf %222, %221 : vector<32x16xf32>
      %224 = arith.addf %219, %223 : vector<32x16xf32>
      %225 = vector.broadcast %31 : vector<32x1xf32> to vector<32x16xf32>
      %226 = arith.mulf %224, %225 : vector<32x16xf32>
      %227 = vector.broadcast %32 : vector<32x1xf32> to vector<32x16xf32>
      %228 = arith.addf %226, %227 : vector<32x16xf32>
      %c0_47 = arith.constant 0 : index
      %c0_48 = arith.constant 0 : index
      %229 = vector.load %arg7[%c0_47, %c0_48] : memref<32x11xf32, #tpu.memory_space<vmem>>, vector<32x11xf32>
      %cst_49 = arith.constant 0.000000e+00 : f32
      %230 = vector.broadcast %cst_49 : f32 to vector<32x5xf32>
      %231 = tpu.concatenate %230, %30, %230 in 1 : vector<32x5xf32>, vector<32x16xf32>, vector<32x5xf32> -> vector<32x26xf32>
      %cst_50 = arith.constant 0.000000e+00 : f32
      %232 = vector.broadcast %cst_50 : f32 to vector<32x16xf32>
      %233 = vector.extract_strided_slice %229 {offsets = [0, 0], sizes = [32, 1], strides = [1, 1]} : vector<32x11xf32> to vector<32x1xf32>
      %234 = vector.extract_strided_slice %231 {offsets = [0, 0], sizes = [32, 16], strides = [1, 1]} : vector<32x26xf32> to vector<32x16xf32>
      %235 = vector.broadcast %233 : vector<32x1xf32> to vector<32x16xf32>
      %236 = arith.mulf %235, %234 : vector<32x16xf32>
      %237 = arith.addf %232, %236 : vector<32x16xf32>
      %238 = vector.extract_strided_slice %229 {offsets = [0, 1], sizes = [32, 1], strides = [1, 1]} : vector<32x11xf32> to vector<32x1xf32>
      %239 = vector.extract_strided_slice %231 {offsets = [0, 1], sizes = [32, 16], strides = [1, 1]} : vector<32x26xf32> to vector<32x16xf32>
      %240 = vector.broadcast %238 : vector<32x1xf32> to vector<32x16xf32>
      %241 = arith.mulf %240, %239 : vector<32x16xf32>
      %242 = arith.addf %237, %241 : vector<32x16xf32>
      %243 = vector.extract_strided_slice %229 {offsets = [0, 2], sizes = [32, 1], strides = [1, 1]} : vector<32x11xf32> to vector<32x1xf32>
      %244 = vector.extract_strided_slice %231 {offsets = [0, 2], sizes = [32, 16], strides = [1, 1]} : vector<32x26xf32> to vector<32x16xf32>
      %245 = vector.broadcast %243 : vector<32x1xf32> to vector<32x16xf32>
      %246 = arith.mulf %245, %244 : vector<32x16xf32>
      %247 = arith.addf %242, %246 : vector<32x16xf32>
      %248 = vector.extract_strided_slice %229 {offsets = [0, 3], sizes = [32, 1], strides = [1, 1]} : vector<32x11xf32> to vector<32x1xf32>
      %249 = vector.extract_strided_slice %231 {offsets = [0, 3], sizes = [32, 16], strides = [1, 1]} : vector<32x26xf32> to vector<32x16xf32>
      %250 = vector.broadcast %248 : vector<32x1xf32> to vector<32x16xf32>
      %251 = arith.mulf %250, %249 : vector<32x16xf32>
      %252 = arith.addf %247, %251 : vector<32x16xf32>
      %253 = vector.extract_strided_slice %229 {offsets = [0, 4], sizes = [32, 1], strides = [1, 1]} : vector<32x11xf32> to vector<32x1xf32>
      %254 = vector.extract_strided_slice %231 {offsets = [0, 4], sizes = [32, 16], strides = [1, 1]} : vector<32x26xf32> to vector<32x16xf32>
      %255 = vector.broadcast %253 : vector<32x1xf32> to vector<32x16xf32>
      %256 = arith.mulf %255, %254 : vector<32x16xf32>
      %257 = arith.addf %252, %256 : vector<32x16xf32>
      %258 = vector.extract_strided_slice %229 {offsets = [0, 5], sizes = [32, 1], strides = [1, 1]} : vector<32x11xf32> to vector<32x1xf32>
      %259 = vector.extract_strided_slice %231 {offsets = [0, 5], sizes = [32, 16], strides = [1, 1]} : vector<32x26xf32> to vector<32x16xf32>
      %260 = vector.broadcast %258 : vector<32x1xf32> to vector<32x16xf32>
      %261 = arith.mulf %260, %259 : vector<32x16xf32>
      %262 = arith.addf %257, %261 : vector<32x16xf32>
      %263 = vector.extract_strided_slice %229 {offsets = [0, 6], sizes = [32, 1], strides = [1, 1]} : vector<32x11xf32> to vector<32x1xf32>
      %264 = vector.extract_strided_slice %231 {offsets = [0, 6], sizes = [32, 16], strides = [1, 1]} : vector<32x26xf32> to vector<32x16xf32>
      %265 = vector.broadcast %263 : vector<32x1xf32> to vector<32x16xf32>
      %266 = arith.mulf %265, %264 : vector<32x16xf32>
      %267 = arith.addf %262, %266 : vector<32x16xf32>
      %268 = vector.extract_strided_slice %229 {offsets = [0, 7], sizes = [32, 1], strides = [1, 1]} : vector<32x11xf32> to vector<32x1xf32>
      %269 = vector.extract_strided_slice %231 {offsets = [0, 7], sizes = [32, 16], strides = [1, 1]} : vector<32x26xf32> to vector<32x16xf32>
      %270 = vector.broadcast %268 : vector<32x1xf32> to vector<32x16xf32>
      %271 = arith.mulf %270, %269 : vector<32x16xf32>
      %272 = arith.addf %267, %271 : vector<32x16xf32>
      %273 = vector.extract_strided_slice %229 {offsets = [0, 8], sizes = [32, 1], strides = [1, 1]} : vector<32x11xf32> to vector<32x1xf32>
      %274 = vector.extract_strided_slice %231 {offsets = [0, 8], sizes = [32, 16], strides = [1, 1]} : vector<32x26xf32> to vector<32x16xf32>
      %275 = vector.broadcast %273 : vector<32x1xf32> to vector<32x16xf32>
      %276 = arith.mulf %275, %274 : vector<32x16xf32>
      %277 = arith.addf %272, %276 : vector<32x16xf32>
      %278 = vector.extract_strided_slice %229 {offsets = [0, 9], sizes = [32, 1], strides = [1, 1]} : vector<32x11xf32> to vector<32x1xf32>
      %279 = vector.extract_strided_slice %231 {offsets = [0, 9], sizes = [32, 16], strides = [1, 1]} : vector<32x26xf32> to vector<32x16xf32>
      %280 = vector.broadcast %278 : vector<32x1xf32> to vector<32x16xf32>
      %281 = arith.mulf %280, %279 : vector<32x16xf32>
      %282 = arith.addf %277, %281 : vector<32x16xf32>
      %283 = vector.extract_strided_slice %229 {offsets = [0, 10], sizes = [32, 1], strides = [1, 1]} : vector<32x11xf32> to vector<32x1xf32>
      %284 = vector.extract_strided_slice %231 {offsets = [0, 10], sizes = [32, 16], strides = [1, 1]} : vector<32x26xf32> to vector<32x16xf32>
      %285 = vector.broadcast %283 : vector<32x1xf32> to vector<32x16xf32>
      %286 = arith.mulf %285, %284 : vector<32x16xf32>
      %287 = arith.addf %282, %286 : vector<32x16xf32>
      %288 = vector.broadcast %31 : vector<32x1xf32> to vector<32x16xf32>
      %289 = arith.mulf %287, %288 : vector<32x16xf32>
      %290 = vector.broadcast %32 : vector<32x1xf32> to vector<32x16xf32>
      %291 = arith.addf %289, %290 : vector<32x16xf32>
      %292 = tpu.concatenate %185, %228, %291 in 0 : vector<32x16xf32>, vector<32x16xf32>, vector<32x16xf32> -> vector<96x16xf32>
      %c0_51 = arith.constant 0 : index
      %c0_52 = arith.constant 0 : index
      %293 = vector.load %arg10[%c0_51, %c0_52] : memref<32x96xf32, #tpu.memory_space<vmem>>, vector<32x96xf32>
      %294 = tpu.concatenate %162, %292 in 1 : vector<96x16xf32>, vector<96x16xf32> -> vector<96x32xf32>
      %cst_53 = arith.constant dense<0.000000e+00> : vector<32x32xf32>
      %295 = tpu.matmul %293, %294, %cst_53 {dimension_numbers = #tpu.dot_dimension_numbers<[1], [0], [0], [1], [0, 0, 1, 1], [], []>} : vector<32x96xf32>, vector<96x32xf32>, vector<32x32xf32> -> vector<32x32xf32>
      %296 = vector.extract_strided_slice %295 {offsets = [0, 0], sizes = [32, 16], strides = [1, 1]} : vector<32x32xf32> to vector<32x16xf32>
      %297 = vector.extract_strided_slice %295 {offsets = [0, 16], sizes = [32, 16], strides = [1, 1]} : vector<32x32xf32> to vector<32x16xf32>
      %c0_54 = arith.constant 0 : index
      %c0_55 = arith.constant 0 : index
      %298 = vector.load %arg13[%c0_54, %c0_55] : memref<1x1xf32, #tpu.memory_space<vmem>>, vector<1x1xf32>
      %c0_56 = arith.constant 0 : index
      %c0_57 = arith.constant 0 : index
      %299 = vector.load %arg14[%c0_56, %c0_57] : memref<1x1xf32, #tpu.memory_space<vmem>>, vector<1x1xf32>
      %cst_58 = arith.constant dense<0.000000e+00> : vector<32xf32>
      %300 = vector.multi_reduction <add>, %296, %cst_58 [1] : vector<32x16xf32> to vector<32xf32>
      %301 = vector.shape_cast %300 : vector<32xf32> to vector<32x1xf32>
      %cst_59 = arith.constant 1.600000e+01 : f32
      %302 = vector.broadcast %cst_59 : f32 to vector<32x1xf32>
      %303 = arith.divf %301, %302 : vector<32x1xf32>
      %304 = vector.broadcast %298 : vector<1x1xf32> to vector<32x1xf32>
      %305 = arith.mulf %304, %303 : vector<32x1xf32>
      %cst_60 = arith.constant dense<0.000000e+00> : vector<32xf32>
      %306 = vector.multi_reduction <add>, %297, %cst_60 [1] : vector<32x16xf32> to vector<32xf32>
      %307 = vector.shape_cast %306 : vector<32xf32> to vector<32x1xf32>
      %cst_61 = arith.constant 1.600000e+01 : f32
      %308 = vector.broadcast %cst_61 : f32 to vector<32x1xf32>
      %309 = arith.divf %307, %308 : vector<32x1xf32>
      %310 = vector.broadcast %299 : vector<1x1xf32> to vector<32x1xf32>
      %311 = arith.mulf %310, %309 : vector<32x1xf32>
      %312 = arith.addf %305, %311 : vector<32x1xf32>
      %c0_62 = arith.constant 0 : index
      %c0_63 = arith.constant 0 : index
      %313 = vector.load %arg11[%c0_62, %c0_63] : memref<2x32xf32, #tpu.memory_space<vmem>>, vector<2x32xf32>
      %cst_64 = arith.constant dense<0.000000e+00> : vector<2x1xf32>
      %314 = tpu.matmul %313, %312, %cst_64 {dimension_numbers = #tpu.dot_dimension_numbers<[1], [0], [0], [1], [0, 0, 1, 1], [], []>} : vector<2x32xf32>, vector<32x1xf32>, vector<2x1xf32> -> vector<2x1xf32>
      %315 = arith.negf %314 : vector<2x1xf32>
      %316 = math.exp %315 : vector<2x1xf32>
      %cst_65 = arith.constant 1.000000e+00 : f32
      %317 = vector.broadcast %cst_65 : f32 to vector<2x1xf32>
      %318 = arith.addf %317, %316 : vector<2x1xf32>
      %319 = arith.divf %317, %318 : vector<2x1xf32>
      %320 = arith.mulf %314, %319 : vector<2x1xf32>
      %c0_66 = arith.constant 0 : index
      %c0_67 = arith.constant 0 : index
      %321 = vector.load %arg12[%c0_66, %c0_67] : memref<32x2xf32, #tpu.memory_space<vmem>>, vector<32x2xf32>
      %cst_68 = arith.constant dense<0.000000e+00> : vector<32x1xf32>
      %322 = tpu.matmul %321, %320, %cst_68 {dimension_numbers = #tpu.dot_dimension_numbers<[1], [0], [0], [1], [0, 0, 1, 1], [], []>} : vector<32x2xf32>, vector<2x1xf32>, vector<32x1xf32> -> vector<32x1xf32>
      %323 = arith.negf %322 : vector<32x1xf32>
      %324 = math.exp %323 : vector<32x1xf32>
      %cst_69 = arith.constant 1.000000e+00 : f32
      %325 = vector.broadcast %cst_69 : f32 to vector<32x1xf32>
      %326 = arith.addf %325, %324 : vector<32x1xf32>
      %327 = arith.divf %325, %326 : vector<32x1xf32>
      %328 = vector.broadcast %298 : vector<1x1xf32> to vector<32x16xf32>
      %329 = arith.mulf %328, %296 : vector<32x16xf32>
      %330 = vector.broadcast %327 : vector<32x1xf32> to vector<32x16xf32>
      %331 = arith.mulf %329, %330 : vector<32x16xf32>
      %c0_70 = arith.constant 0 : index
      %c0_71 = arith.constant 0 : index
      %332 = vector.load %arg16[%c0_70, %c0_71] : memref<32x16xf32, #tpu.memory_space<vmem>>, vector<32x16xf32>
      tpu.vector_store %arg16[%c0_70, %c0_71], %331 {strides = array<i32>} : memref<32x16xf32, #tpu.memory_space<vmem>>, vector<32x16xf32>,
      %333 = vector.broadcast %299 : vector<1x1xf32> to vector<32x16xf32>
      %334 = arith.mulf %333, %297 : vector<32x16xf32>
      %335 = vector.broadcast %327 : vector<32x1xf32> to vector<32x16xf32>
      %336 = arith.mulf %334, %335 : vector<32x16xf32>
      %c0_72 = arith.constant 0 : index
      %c0_73 = arith.constant 0 : index
      %337 = vector.load %arg17[%c0_72, %c0_73] : memref<32x16xf32, #tpu.memory_space<vmem>>, vector<32x16xf32>
      tpu.vector_store %arg17[%c0_72, %c0_73], %336 {strides = array<i32>} : memref<32x16xf32, #tpu.memory_space<vmem>>, vector<32x16xf32>,
    } else {
    }
    %c32_i32 = arith.constant 32 : i32
    %3 = arith.muli %arg1, %c32_i32 : i32
    %4 = tpu.assume_multiple %3, 32 : i32
    %c0 = arith.constant 0 : index
    %c0_1 = arith.constant 0 : index
    %5 = vector.load %arg3[%c0, %c0_1] : memref<16x256xf32, #tpu.memory_space<vmem>>, vector<16x256xf32>
    %c0_2 = arith.constant 0 : index
    %c0_3 = arith.constant 0 : index
    %6 = vector.load %arg4[%c0_2, %c0_3] : memref<16x256xf32, #tpu.memory_space<vmem>>, vector<16x256xf32>
    %7 = arith.index_cast %4 : i32 to index
    %c0_4 = arith.constant 0 : index
    %8 = vector.load %arg16[%7, %c0_4] : memref<32x16xf32, #tpu.memory_space<vmem>>, vector<32x16xf32>
    %9 = arith.index_cast %4 : i32 to index
    %c0_5 = arith.constant 0 : index
    %10 = vector.load %arg17[%9, %c0_5] : memref<32x16xf32, #tpu.memory_space<vmem>>, vector<32x16xf32>
    %cst = arith.constant dense<0.000000e+00> : vector<32x256xf32>
    %11 = tpu.matmul %8, %5, %cst {dimension_numbers = #tpu.dot_dimension_numbers<[1], [0], [0], [1], [0, 0, 1, 1], [], []>} : vector<32x16xf32>, vector<16x256xf32>, vector<32x256xf32> -> vector<32x256xf32>
    %cst_6 = arith.constant dense<0.000000e+00> : vector<32x256xf32>
    %12 = tpu.matmul %10, %6, %cst_6 {dimension_numbers = #tpu.dot_dimension_numbers<[1], [0], [0], [1], [0, 0, 1, 1], [], []>} : vector<32x16xf32>, vector<16x256xf32>, vector<32x256xf32> -> vector<32x256xf32>
    %13 = arith.addf %11, %12 : vector<32x256xf32>
    %c0_7 = arith.constant 0 : index
    %14 = arith.index_cast %4 : i32 to index
    %c0_8 = arith.constant 0 : index
    %15 = vector.load %arg2[%c0_7, %14, %c0_8] : memref<1x32x256xf32, #tpu.memory_space<vmem>>, vector<1x32x256xf32>
    %16 = vector.shape_cast %15 : vector<1x32x256xf32> to vector<32x256xf32>
    %17 = arith.mulf %16, %13 : vector<32x256xf32>
    %c0_9 = arith.constant 0 : index
    %c0_10 = arith.constant 0 : index
    %c0_11 = arith.constant 0 : index
    %18 = vector.load %arg15[%c0_9, %c0_10, %c0_11] : memref<1x32x256xf32, #tpu.memory_space<vmem>>, vector<1x32x256xf32>
    %19 = vector.shape_cast %18 : vector<1x32x256xf32> to vector<32x256xf32>
    %20 = vector.shape_cast %17 : vector<32x256xf32> to vector<1x32x256xf32>
    tpu.vector_store %arg15[%c0_9, %c0_10, %c0_11], %20 {strides = array<i32>} : memref<1x32x256xf32, #tpu.memory_space<vmem>>, vector<1x32x256xf32>,
    return
  }
  func.func @transform_0(%arg0: i32, %arg1: i32) -> (i32, i32, i32) {
    %c0_i32 = arith.constant 0 : i32
    %c0_i32_0 = arith.constant 0 : i32
    %c0_i32_1 = arith.constant 0 : i32
    return %arg0, %c0_i32, %c0_i32_0 : i32, i32, i32
  }
  func.func @transform_1(%arg0: i32, %arg1: i32) -> (i32, i32) {
    %c0_i32 = arith.constant 0 : i32
    %c0_i32_0 = arith.constant 0 : i32
    %c0_i32_1 = arith.constant 0 : i32
    return %c0_i32, %c0_i32_0 : i32, i32
  }
  func.func @transform_2(%arg0: i32, %arg1: i32) -> (i32, i32) {
    %c0_i32 = arith.constant 0 : i32
    %c0_i32_0 = arith.constant 0 : i32
    %c0_i32_1 = arith.constant 0 : i32
    return %c0_i32, %c0_i32_0 : i32, i32
  }
  func.func @transform_3(%arg0: i32, %arg1: i32) -> (i32, i32) {
    %c0_i32 = arith.constant 0 : i32
    %c0_i32_0 = arith.constant 0 : i32
    %c0_i32_1 = arith.constant 0 : i32
    return %c0_i32, %c0_i32_0 : i32, i32
  }
  func.func @transform_4(%arg0: i32, %arg1: i32) -> (i32, i32) {
    %c0_i32 = arith.constant 0 : i32
    %c0_i32_0 = arith.constant 0 : i32
    %c0_i32_1 = arith.constant 0 : i32
    return %c0_i32, %c0_i32_0 : i32, i32
  }
  func.func @transform_5(%arg0: i32, %arg1: i32) -> (i32, i32) {
    %c0_i32 = arith.constant 0 : i32
    %c0_i32_0 = arith.constant 0 : i32
    %c0_i32_1 = arith.constant 0 : i32
    return %c0_i32, %c0_i32_0 : i32, i32
  }
  func.func @transform_6(%arg0: i32, %arg1: i32) -> (i32, i32) {
    %c0_i32 = arith.constant 0 : i32
    %c0_i32_0 = arith.constant 0 : i32
    %c0_i32_1 = arith.constant 0 : i32
    return %c0_i32, %c0_i32_0 : i32, i32
  }
  func.func @transform_7(%arg0: i32, %arg1: i32) -> (i32, i32) {
    %c0_i32 = arith.constant 0 : i32
    %c0_i32_0 = arith.constant 0 : i32
    %c0_i32_1 = arith.constant 0 : i32
    return %c0_i32, %c0_i32_0 : i32, i32
  }
  func.func @transform_8(%arg0: i32, %arg1: i32) -> (i32, i32) {
    %c0_i32 = arith.constant 0 : i32
    %c0_i32_0 = arith.constant 0 : i32
    %c0_i32_1 = arith.constant 0 : i32
    return %c0_i32, %c0_i32_0 : i32, i32
  }
  func.func @transform_9(%arg0: i32, %arg1: i32) -> (i32, i32) {
    %c0_i32 = arith.constant 0 : i32
    %c0_i32_0 = arith.constant 0 : i32
    %c0_i32_1 = arith.constant 0 : i32
    return %c0_i32, %c0_i32_0 : i32, i32
  }
  func.func @transform_10(%arg0: i32, %arg1: i32) -> (i32, i32) {
    %c0_i32 = arith.constant 0 : i32
    %c0_i32_0 = arith.constant 0 : i32
    %c0_i32_1 = arith.constant 0 : i32
    return %c0_i32, %c0_i32_0 : i32, i32
  }
  func.func @transform_11(%arg0: i32, %arg1: i32) -> (i32, i32) {
    %c0_i32 = arith.constant 0 : i32
    %c0_i32_0 = arith.constant 0 : i32
    %c0_i32_1 = arith.constant 0 : i32
    return %c0_i32, %c0_i32_0 : i32, i32
  }
  func.func @transform_12(%arg0: i32, %arg1: i32) -> (i32, i32) {
    %c0_i32 = arith.constant 0 : i32
    %c0_i32_0 = arith.constant 0 : i32
    %c0_i32_1 = arith.constant 0 : i32
    return %c0_i32, %c0_i32_0 : i32, i32
  }
  func.func @transform_13(%arg0: i32, %arg1: i32) -> (i32, i32, i32) {
    %c0_i32 = arith.constant 0 : i32
    %c0_i32_0 = arith.constant 0 : i32
    return %arg0, %arg1, %c0_i32 : i32, i32, i32
  }
}

</mosaic_0001>

<llo_original>
// kernel: tpu_custom_call.1
$region0: #{tpu_custom_call.1}
  #allocation0 [shape = 'u32[]', space=smem, size = 0x4, offset = 0x4, fixed_abs, tag = 'smem constant byte address 0x4 - core index']
  #allocation1 [shape = 'u32[144,128]{1,0:T(1,128)}', space=vmem, size = 0x12000, scoped, tag = 'internal scratch']
  #allocation2 [shape = 'f32[32,16]{1,0:T(8,128)}', space=vmem, size = 0x4000, scoped, tag = 'scratch operand']
  #allocation3 [shape = 'f32[32,16]{1,0:T(8,128)}', space=vmem, size = 0x4000, scoped, tag = 'scratch operand']
  #allocation4 [shape = 'f32[1,1]{1,0:T(1,128)S(1)}', space=vmem, size = 0x200, scoped, tag = 'scoped memory for tpu_custom_call.1']
  #allocation5 [shape = 'f32[1,1]{1,0:T(1,128)S(1)}', space=vmem, size = 0x200, scoped, tag = 'scoped memory for tpu_custom_call.1']
  %s0 = inlined_call_operand.vmem [shape: f32[2,32,256], index: 0, kind: input, shape index: {}]
  %s1 = inlined_call_operand.vmem [shape: f32[16,256], index: 1, kind: input, shape index: {}]
  %s2 = inlined_call_operand.vmem [shape: f32[16,256], index: 2, kind: input, shape index: {}]
  %s3 = inlined_call_operand.vmem [shape: f32[32,3], index: 3, kind: input, shape index: {}]
  %s4 = inlined_call_operand.vmem [shape: f32[32,7], index: 4, kind: input, shape index: {}]
  %s5 = inlined_call_operand.vmem [shape: f32[32,11], index: 5, kind: input, shape index: {}]
  %s6 = inlined_call_operand.vmem [shape: f32[32,1], index: 6, kind: input, shape index: {}]
  %s7 = inlined_call_operand.vmem [shape: f32[32,1], index: 7, kind: input, shape index: {}]
  %s8 = inlined_call_operand.vmem [shape: f32[32,96], index: 8, kind: input, shape index: {}]
  %s9 = inlined_call_operand.vmem [shape: f32[2,32], index: 9, kind: input, shape index: {}]
  %s10 = inlined_call_operand.vmem [shape: f32[32,2], index: 10, kind: input, shape index: {}]
  %s11 = inlined_call_operand.<no memory space> [shape: f32[1,1], index: 11, kind: input, shape index: {}]
  %s12 = inlined_call_operand.<no memory space> [shape: f32[1,1], index: 12, kind: input, shape index: {}]
  %s13 = inlined_call_operand.hbm [shape: f32[2,32,256], index: 13, kind: output, shape index: {}]
  %s14 = sld [smem:[#allocation0]]
  $region89: #{tpu_custom_call.1} parent=0
    _
  %s16 = ssub.s32 1, %s14
  %s17 = scalar_select 0, %s16, %s14
  %v18 = vstv %s11
  %19 = vst [vmem:[#allocation4] sm:$0x1] %v18
  %v20 = vstv %s12
  %21 = vst [vmem:[#allocation5] sm:$0x1] %v20
  $region1: #{tpu_custom_call.1} parent=0
    #allocation6 [shape = 'u8[65536]{0}', space=vmem, size = 0x10000, scoped, tag = 'output window, operand 0']
    #allocation7 [shape = 's32[2]{0}', space=sflag, size = 0x8, scoped, tag = 'scoped memory for tpu_custom_call.1']
    %22 = vsyncpa [#allocation7], 0
    %s23 = scalar_lea.sflag [#allocation7], 1
    %24 = vsyncpa %s23, 0
    loop: start=0, step=1, limit=4
    $region2: #{tpu_custom_call.1} parent=1 // loop_pre_header
      _
    $region3: #{tpu_custom_call.1} parent=1 // loop_header
      %s26 = sphi 0, %s30
      %p27 = scmp.ge.s32.totalorder %s26, 4
      %s33 = sphi 0, %s45
      %s34 = sphi 0, %s41
      %s35 = sphi 0, %s33
      %s36 = sphi 0, %s34
      %s37 = sphi 0, %s35
      %s38 = sphi 0, %s36
      %s48 = sphi 0, %s50
      %s51 = sphi 0, %s48
      %s52 = sphi 0, %s51
      %s68 = sphi 0, %s52
      %s72 = sphi 0, %s72
      %s74 = sphi 0, %s72
      %s75 = sphi 0, %s74
      %s89 = sphi 0, %s75
      %s93 = sphi 0, %s93
      %s95 = sphi 0, %s93
      %s96 = sphi 0, %s95
      %s110 = sphi 0, %s96
      %s114 = sphi 0, %s114
      %s116 = sphi 0, %s114
      %s117 = sphi 0, %s116
      %s131 = sphi 0, %s117
      %s135 = sphi 0, %s135
      %s137 = sphi 0, %s135
      %s138 = sphi 0, %s137
      %s152 = sphi 0, %s138
      %s156 = sphi 0, %s156
      %s158 = sphi 0, %s156
      %s159 = sphi 0, %s158
      %s173 = sphi 0, %s159
      %s177 = sphi 0, %s177
      %s179 = sphi 0, %s177
      %s180 = sphi 0, %s179
      %s194 = sphi 0, %s180
      %s198 = sphi 0, %s198
      %s200 = sphi 0, %s198
      %s201 = sphi 0, %s200
      %s215 = sphi 0, %s201
      %s219 = sphi 0, %s219
      %s221 = sphi 0, %s219
      %s222 = sphi 0, %s221
      %s236 = sphi 0, %s222
      %s240 = sphi 0, %s240
      %s242 = sphi 0, %s240
      %s243 = sphi 0, %s242
      %s257 = sphi 0, %s243
      %s261 = sphi 0, %s261
      %s263 = sphi 0, %s261
      %s264 = sphi 0, %s263
      %s278 = sphi 0, %s264
      %s282 = sphi 0, %s282
      %s284 = sphi 0, %s282
      %s285 = sphi 0, %s284
      %s299 = sphi 0, %s285
      %s303 = sphi 0, %s303
      %s305 = sphi 0, %s303
      %s306 = sphi 0, %s305
      %s320 = sphi 0, %s306
      %s328 = sphi 0, %s330
      %s331 = sphi 0, %s328
      %s332 = sphi 0, %s331
      %s348 = sphi 0, %s332
    $region4: #{tpu_custom_call.1} parent=1 // loop_header_branch
      %29 = sbr.rel (%p27) target = $region8
    $region5: #{tpu_custom_call.1} parent=1 // loop_body
      %s31 = ssub.s32 %s26, 1
      %s32 = ssub.s32 %s26, 2
      %s39 = sadd.s32 1, %s34
      %p40 = scmp.ge.s32.totalorder %s39, 1
      %s41 = scalar_select %p40, 0, %s39
      %s42 = sadd.s32 1, %s33
      %s43 = scalar_select %p40, %s42, %s33
      %p44 = scmp.ge.s32.totalorder %s43, 2
      %s45 = scalar_select %p44, 0, %s43
      %s46 = ssub.s32 %s33, %s45
      %p47 = scmp.eq.s32.totalorder %s46, 0
      %s49 = sadd.s32 %s48, 1
      %s50 = scalar_select %p47, %s48, %s49
      %p53 = pneg %p47
      %p54 = scmp.eq.s32.totalorder %s26, 1
      %p55 = por %p53, %p54
      %p56 = scmp.ne.s32.totalorder %s48, %s51
      %p57 = scmp.eq.s32.totalorder %s26, 0
      %p58 = por %p56, %p57
      %p59 = scmp.ne.s32.totalorder %s48, %s51
      %p60 = scmp.eq.s32.totalorder %s31, 1
      %p61 = por %p59, %p60
      %p62 = scmp.ne.s32.totalorder %s51, %s52
      %p63 = scmp.eq.s32.totalorder %s31, 0
      %p64 = por %p62, %p63
      %p65 = scmp.ne.s32.totalorder %s51, %s52
      %p66 = scmp.eq.s32.totalorder %s32, 1
      %p67 = por %p65, %p66
      %p69 = scmp.ne.s32.totalorder %s52, %s68
      %p70 = scmp.eq.s32.totalorder %s32, 0
      %p71 = por %p69, %p70
      %s73 = sadd.s32 %s72, 1
      %p76 = scmp.eq.s32.totalorder %s26, 1
      %p77 = scmp.ne.s32.totalorder %s72, %s74
      %p78 = scmp.eq.s32.totalorder %s26, 0
      %p79 = por %p77, %p78
      %p80 = scmp.ne.s32.totalorder %s72, %s74
      %p81 = scmp.eq.s32.totalorder %s31, 1
      %p82 = por %p80, %p81
      %p83 = scmp.ne.s32.totalorder %s74, %s75
      %p84 = scmp.eq.s32.totalorder %s31, 0
      %p85 = por %p83, %p84
      %p86 = scmp.ne.s32.totalorder %s74, %s75
      %p87 = scmp.eq.s32.totalorder %s32, 1
      %p88 = por %p86, %p87
      %p90 = scmp.ne.s32.totalorder %s75, %s89
      %p91 = scmp.eq.s32.totalorder %s32, 0
      %p92 = por %p90, %p91
      %s94 = sadd.s32 %s93, 1
      %p97 = scmp.eq.s32.totalorder %s26, 1
      %p98 = scmp.ne.s32.totalorder %s93, %s95
      %p99 = scmp.eq.s32.totalorder %s26, 0
      %p100 = por %p98, %p99
      %p101 = scmp.ne.s32.totalorder %s93, %s95
      %p102 = scmp.eq.s32.totalorder %s31, 1
      %p103 = por %p101, %p102
      %p104 = scmp.ne.s32.totalorder %s95, %s96
      %p105 = scmp.eq.s32.totalorder %s31, 0
      %p106 = por %p104, %p105
      %p107 = scmp.ne.s32.totalorder %s95, %s96
      %p108 = scmp.eq.s32.totalorder %s32, 1
      %p109 = por %p107, %p108
      %p111 = scmp.ne.s32.totalorder %s96, %s110
      %p112 = scmp.eq.s32.totalorder %s32, 0
      %p113 = por %p111, %p112
      %s115 = sadd.s32 %s114, 1
      %p118 = scmp.eq.s32.totalorder %s26, 1
      %p119 = scmp.ne.s32.totalorder %s114, %s116
      %p120 = scmp.eq.s32.totalorder %s26, 0
      %p121 = por %p119, %p120
      %p122 = scmp.ne.s32.totalorder %s114, %s116
      %p123 = scmp.eq.s32.totalorder %s31, 1
      %p124 = por %p122, %p123
      %p125 = scmp.ne.s32.totalorder %s116, %s117
      %p126 = scmp.eq.s32.totalorder %s31, 0
      %p127 = por %p125, %p126
      %p128 = scmp.ne.s32.totalorder %s116, %s117
      %p129 = scmp.eq.s32.totalorder %s32, 1
      %p130 = por %p128, %p129
      %p132 = scmp.ne.s32.totalorder %s117, %s131
      %p133 = scmp.eq.s32.totalorder %s32, 0
      %p134 = por %p132, %p133
      %s136 = sadd.s32 %s135, 1
      %p139 = scmp.eq.s32.totalorder %s26, 1
      %p140 = scmp.ne.s32.totalorder %s135, %s137
      %p141 = scmp.eq.s32.totalorder %s26, 0
      %p142 = por %p140, %p141
      %p143 = scmp.ne.s32.totalorder %s135, %s137
      %p144 = scmp.eq.s32.totalorder %s31, 1
      %p145 = por %p143, %p144
      %p146 = scmp.ne.s32.totalorder %s137, %s138
      %p147 = scmp.eq.s32.totalorder %s31, 0
      %p148 = por %p146, %p147
      %p149 = scmp.ne.s32.totalorder %s137, %s138
      %p150 = scmp.eq.s32.totalorder %s32, 1
      %p151 = por %p149, %p150
      %p153 = scmp.ne.s32.totalorder %s138, %s152
      %p154 = scmp.eq.s32.totalorder %s32, 0
      %p155 = por %p153, %p154
      %s157 = sadd.s32 %s156, 1
      %p160 = scmp.eq.s32.totalorder %s26, 1
      %p161 = scmp.ne.s32.totalorder %s156, %s158
      %p162 = scmp.eq.s32.totalorder %s26, 0
      %p163 = por %p161, %p162
      %p164 = scmp.ne.s32.totalorder %s156, %s158
      %p165 = scmp.eq.s32.totalorder %s31, 1
      %p166 = por %p164, %p165
      %p167 = scmp.ne.s32.totalorder %s158, %s159
      %p168 = scmp.eq.s32.totalorder %s31, 0
      %p169 = por %p167, %p168
      %p170 = scmp.ne.s32.totalorder %s158, %s159
      %p171 = scmp.eq.s32.totalorder %s32, 1
      %p172 = por %p170, %p171
      %p174 = scmp.ne.s32.totalorder %s159, %s173
      %p175 = scmp.eq.s32.totalorder %s32, 0
      %p176 = por %p174, %p175
      %s178 = sadd.s32 %s177, 1
      %p181 = scmp.eq.s32.totalorder %s26, 1
      %p182 = scmp.ne.s32.totalorder %s177, %s179
      %p183 = scmp.eq.s32.totalorder %s26, 0
      %p184 = por %p182, %p183
      %p185 = scmp.ne.s32.totalorder %s177, %s179
      %p186 = scmp.eq.s32.totalorder %s31, 1
      %p187 = por %p185, %p186
      %p188 = scmp.ne.s32.totalorder %s179, %s180
      %p189 = scmp.eq.s32.totalorder %s31, 0
      %p190 = por %p188, %p189
      %p191 = scmp.ne.s32.totalorder %s179, %s180
      %p192 = scmp.eq.s32.totalorder %s32, 1
      %p193 = por %p191, %p192
      %p195 = scmp.ne.s32.totalorder %s180, %s194
      %p196 = scmp.eq.s32.totalorder %s32, 0
      %p197 = por %p195, %p196
      %s199 = sadd.s32 %s198, 1
      %p202 = scmp.eq.s32.totalorder %s26, 1
      %p203 = scmp.ne.s32.totalorder %s198, %s200
      %p204 = scmp.eq.s32.totalorder %s26, 0
      %p205 = por %p203, %p204
      %p206 = scmp.ne.s32.totalorder %s198, %s200
      %p207 = scmp.eq.s32.totalorder %s31, 1
      %p208 = por %p206, %p207
      %p209 = scmp.ne.s32.totalorder %s200, %s201
      %p210 = scmp.eq.s32.totalorder %s31, 0
      %p211 = por %p209, %p210
      %p212 = scmp.ne.s32.totalorder %s200, %s201
      %p213 = scmp.eq.s32.totalorder %s32, 1
      %p214 = por %p212, %p213
      %p216 = scmp.ne.s32.totalorder %s201, %s215
      %p217 = scmp.eq.s32.totalorder %s32, 0
      %p218 = por %p216, %p217
      %s220 = sadd.s32 %s219, 1
      %p223 = scmp.eq.s32.totalorder %s26, 1
      %p224 = scmp.ne.s32.totalorder %s219, %s221
      %p225 = scmp.eq.s32.totalorder %s26, 0
      %p226 = por %p224, %p225
      %p227 = scmp.ne.s32.totalorder %s219, %s221
      %p228 = scmp.eq.s32.totalorder %s31, 1
      %p229 = por %p227, %p228
      %p230 = scmp.ne.s32.totalorder %s221, %s222
      %p231 = scmp.eq.s32.totalorder %s31, 0
      %p232 = por %p230, %p231
      %p233 = scmp.ne.s32.totalorder %s221, %s222
      %p234 = scmp.eq.s32.totalorder %s32, 1
      %p235 = por %p233, %p234
      %p237 = scmp.ne.s32.totalorder %s222, %s236
      %p238 = scmp.eq.s32.totalorder %s32, 0
      %p239 = por %p237, %p238
      %s241 = sadd.s32 %s240, 1
      %p244 = scmp.eq.s32.totalorder %s26, 1
      %p245 = scmp.ne.s32.totalorder %s240, %s242
      %p246 = scmp.eq.s32.totalorder %s26, 0
      %p247 = por %p245, %p246
      %p248 = scmp.ne.s32.totalorder %s240, %s242
      %p249 = scmp.eq.s32.totalorder %s31, 1
      %p250 = por %p248, %p249
      %p251 = scmp.ne.s32.totalorder %s242, %s243
      %p252 = scmp.eq.s32.totalorder %s31, 0
      %p253 = por %p251, %p252
      %p254 = scmp.ne.s32.totalorder %s242, %s243
      %p255 = scmp.eq.s32.totalorder %s32, 1
      %p256 = por %p254, %p255
      %p258 = scmp.ne.s32.totalorder %s243, %s257
      %p259 = scmp.eq.s32.totalorder %s32, 0
      %p260 = por %p258, %p259
      %s262 = sadd.s32 %s261, 1
      %p265 = scmp.eq.s32.totalorder %s26, 1
      %p266 = scmp.ne.s32.totalorder %s261, %s263
      %p267 = scmp.eq.s32.totalorder %s26, 0
      %p268 = por %p266, %p267
      %p269 = scmp.ne.s32.totalorder %s261, %s263
      %p270 = scmp.eq.s32.totalorder %s31, 1
      %p271 = por %p269, %p270
      %p272 = scmp.ne.s32.totalorder %s263, %s264
      %p273 = scmp.eq.s32.totalorder %s31, 0
      %p274 = por %p272, %p273
      %p275 = scmp.ne.s32.totalorder %s263, %s264
      %p276 = scmp.eq.s32.totalorder %s32, 1
      %p277 = por %p275, %p276
      %p279 = scmp.ne.s32.totalorder %s264, %s278
      %p280 = scmp.eq.s32.totalorder %s32, 0
      %p281 = por %p279, %p280
      %s283 = sadd.s32 %s282, 1
      %p286 = scmp.eq.s32.totalorder %s26, 1
      %p287 = scmp.ne.s32.totalorder %s282, %s284
      %p288 = scmp.eq.s32.totalorder %s26, 0
      %p289 = por %p287, %p288
      %p290 = scmp.ne.s32.totalorder %s282, %s284
      %p291 = scmp.eq.s32.totalorder %s31, 1
      %p292 = por %p290, %p291
      %p293 = scmp.ne.s32.totalorder %s284, %s285
      %p294 = scmp.eq.s32.totalorder %s31, 0
      %p295 = por %p293, %p294
      %p296 = scmp.ne.s32.totalorder %s284, %s285
      %p297 = scmp.eq.s32.totalorder %s32, 1
      %p298 = por %p296, %p297
      %p300 = scmp.ne.s32.totalorder %s285, %s299
      %p301 = scmp.eq.s32.totalorder %s32, 0
      %p302 = por %p300, %p301
      %s304 = sadd.s32 %s303, 1
      %p307 = scmp.eq.s32.totalorder %s26, 1
      %p308 = scmp.ne.s32.totalorder %s303, %s305
      %p309 = scmp.eq.s32.totalorder %s26, 0
      %p310 = por %p308, %p309
      %p311 = scmp.ne.s32.totalorder %s303, %s305
      %p312 = scmp.eq.s32.totalorder %s31, 1
      %p313 = por %p311, %p312
      %p314 = scmp.ne.s32.totalorder %s305, %s306
      %p315 = scmp.eq.s32.totalorder %s31, 0
      %p316 = por %p314, %p315
      %p317 = scmp.ne.s32.totalorder %s305, %s306
      %p318 = scmp.eq.s32.totalorder %s32, 1
      %p319 = por %p317, %p318
      %p321 = scmp.ne.s32.totalorder %s306, %s320
      %p322 = scmp.eq.s32.totalorder %s32, 0
      %p323 = por %p321, %p322
      %s324 = ssub.s32 %s33, %s45
      %s325 = ssub.s32 %s34, %s41
      %s326 = sor.u32 %s324, %s325
      %p327 = scmp.eq.s32.totalorder %s326, 0
      %s329 = sadd.s32 %s328, 1
      %s330 = scalar_select %p327, %s328, %s329
      %p333 = pneg %p327
      %p334 = scmp.eq.s32.totalorder %s26, 1
      %p335 = por %p333, %p334
      %p336 = scmp.ne.s32.totalorder %s328, %s331
      %p337 = scmp.eq.s32.totalorder %s26, 0
      %p338 = por %p336, %p337
      %p339 = scmp.ne.s32.totalorder %s328, %s331
      %p340 = scmp.eq.s32.totalorder %s31, 1
      %p341 = por %p339, %p340
      %p342 = scmp.ne.s32.totalorder %s331, %s332
      %p343 = scmp.eq.s32.totalorder %s31, 0
      %p344 = por %p342, %p343
      %p345 = scmp.ne.s32.totalorder %s331, %s332
      %p346 = scmp.eq.s32.totalorder %s32, 1
      %p347 = por %p345, %p346
      %p349 = scmp.ne.s32.totalorder %s332, %s348
      %p350 = scmp.eq.s32.totalorder %s32, 0
      %p351 = por %p349, %p350
      %p352 = scmp.le.s32.totalorder 1, %s26
      %p353 = scmp.lt.s32.totalorder %s26, 3
      %p354 = pnand %p352, %p353
      %p355 = pneg %p354
      // Predicated region
      $region9: #{tpu_custom_call.1} parent=5 // pred_check
        _
      $region10: #{tpu_custom_call.1} parent=5 // pred_check_branch
        %357 = sbr.rel (%p354) target = $region12
      $region11: #{tpu_custom_call.1} parent=5 // pred_region
        %s358 = ssub.s32 %s26, 1
        // Predicated region
        $region13: #{tpu_custom_call.1} parent=11 // pred_check
          %p359 = pneg %p85
        $region14: #{tpu_custom_call.1} parent=11 // pred_check_branch
          %361 = sbr.rel (%p359) target = $region16
        $region15: #{tpu_custom_call.1} parent=11 // pred_region
          _
        $region16: #{tpu_custom_call.1} parent=11 // pred_fallthru
          _
        // Predicated region
        $region17: #{tpu_custom_call.1} parent=11 // pred_check
          %p362 = pneg %p106
        $region18: #{tpu_custom_call.1} parent=11 // pred_check_branch
          %364 = sbr.rel (%p362) target = $region20
        $region19: #{tpu_custom_call.1} parent=11 // pred_region
          _
        $region20: #{tpu_custom_call.1} parent=11 // pred_fallthru
          _
        // Predicated region
        $region21: #{tpu_custom_call.1} parent=11 // pred_check
          %p365 = pneg %p127
        $region22: #{tpu_custom_call.1} parent=11 // pred_check_branch
          %367 = sbr.rel (%p365) target = $region24
        $region23: #{tpu_custom_call.1} parent=11 // pred_region
          _
        $region24: #{tpu_custom_call.1} parent=11 // pred_fallthru
          _
        // Predicated region
        $region25: #{tpu_custom_call.1} parent=11 // pred_check
          %p368 = pneg %p148
        $region26: #{tpu_custom_call.1} parent=11 // pred_check_branch
          %370 = sbr.rel (%p368) target = $region28
        $region27: #{tpu_custom_call.1} parent=11 // pred_region
          _
        $region28: #{tpu_custom_call.1} parent=11 // pred_fallthru
          _
        // Predicated region
        $region29: #{tpu_custom_call.1} parent=11 // pred_check
          %p371 = pneg %p169
        $region30: #{tpu_custom_call.1} parent=11 // pred_check_branch
          %373 = sbr.rel (%p371) target = $region32
        $region31: #{tpu_custom_call.1} parent=11 // pred_region
          _
        $region32: #{tpu_custom_call.1} parent=11 // pred_fallthru
          _
        // Predicated region
        $region33: #{tpu_custom_call.1} parent=11 // pred_check
          %p374 = pneg %p190
        $region34: #{tpu_custom_call.1} parent=11 // pred_check_branch
          %376 = sbr.rel (%p374) target = $region36
        $region35: #{tpu_custom_call.1} parent=11 // pred_region
          _
        $region36: #{tpu_custom_call.1} parent=11 // pred_fallthru
          _
        // Predicated region
        $region37: #{tpu_custom_call.1} parent=11 // pred_check
          %p377 = pneg %p211
        $region38: #{tpu_custom_call.1} parent=11 // pred_check_branch
          %379 = sbr.rel (%p377) target = $region40
        $region39: #{tpu_custom_call.1} parent=11 // pred_region
          _
        $region40: #{tpu_custom_call.1} parent=11 // pred_fallthru
          _
        // Predicated region
        $region41: #{tpu_custom_call.1} parent=11 // pred_check
          %p380 = pneg %p232
        $region42: #{tpu_custom_call.1} parent=11 // pred_check_branch
          %382 = sbr.rel (%p380) target = $region44
        $region43: #{tpu_custom_call.1} parent=11 // pred_region
          _
        $region44: #{tpu_custom_call.1} parent=11 // pred_fallthru
          _
        // Predicated region
        $region45: #{tpu_custom_call.1} parent=11 // pred_check
          %p383 = pneg %p253
        $region46: #{tpu_custom_call.1} parent=11 // pred_check_branch
          %385 = sbr.rel (%p383) target = $region48
        $region47: #{tpu_custom_call.1} parent=11 // pred_region
          _
        $region48: #{tpu_custom_call.1} parent=11 // pred_fallthru
          _
        // Predicated region
        $region49: #{tpu_custom_call.1} parent=11 // pred_check
          %p386 = pneg %p274
        $region50: #{tpu_custom_call.1} parent=11 // pred_check_branch
          %388 = sbr.rel (%p386) target = $region52
        $region51: #{tpu_custom_call.1} parent=11 // pred_region
          _
        $region52: #{tpu_custom_call.1} parent=11 // pred_fallthru
          _
        // Predicated region
        $region53: #{tpu_custom_call.1} parent=11 // pred_check
          %p389 = pneg %p295
        $region54: #{tpu_custom_call.1} parent=11 // pred_check_branch
          %391 = sbr.rel (%p389) target = $region56
        $region55: #{tpu_custom_call.1} parent=11 // pred_region
          _
        $region56: #{tpu_custom_call.1} parent=11 // pred_fallthru
          _
        // Predicated region
        $region57: #{tpu_custom_call.1} parent=11 // pred_check
          %p392 = pneg %p316
        $region58: #{tpu_custom_call.1} parent=11 // pred_check_branch
          %394 = sbr.rel (%p392) target = $region60
        $region59: #{tpu_custom_call.1} parent=11 // pred_region
          _
        $region60: #{tpu_custom_call.1} parent=11 // pred_fallthru
          _
      $region12: #{tpu_custom_call.1} parent=5 // pred_fallthru
        _
      %p395 = scmp.lt.s32.totalorder %s26, 2
      // Predicated region
      $region61: #{tpu_custom_call.1} parent=5 // pred_check
        %p396 = pneg %p395
      $region62: #{tpu_custom_call.1} parent=5 // pred_check_branch
        %398 = sbr.rel (%p396) target = $region64
      $region63: #{tpu_custom_call.1} parent=5 // pred_region
        // Predicated region
        $region65: #{tpu_custom_call.1} parent=63 // pred_check
          %p399 = pneg %p58
        $region66: #{tpu_custom_call.1} parent=63 // pred_check_branch
          %401 = sbr.rel (%p399) target = $region68
        $region67: #{tpu_custom_call.1} parent=63 // pred_region
          %p402 = scmp.lt.s32.totalorder %s33, 1
          %s403 = scalar_select %p402, %s33, 1
          %s404 = smul.addr %s403, 8
          %s405 = smul.addr %s404, 8
          %s406 = scalar_lea.vmem %s0, %s405
        $region68: #{tpu_custom_call.1} parent=63 // pred_fallthru
          _
      $region64: #{tpu_custom_call.1} parent=5 // pred_fallthru
        _
      %p407 = scmp.le.s32.totalorder 1, %s26
      %p408 = scmp.lt.s32.totalorder %s26, 3
      %p409 = pnand %p407, %p408
      %p410 = pneg %p409
      // Predicated region
      $region69: #{tpu_custom_call.1} parent=5 // pred_check
        _
      $region70: #{tpu_custom_call.1} parent=5 // pred_check_branch
        %412 = sbr.rel (%p409) target = $region72
      $region71: #{tpu_custom_call.1} parent=5 // pred_region
        %s413 = ssub.s32 %s26, 1
        %p414 = scmp.lt.s32.totalorder %s35, 1
        %s415 = scalar_select %p414, %s35, 1
        %s416 = smul.addr %s415, 8
        %s417 = smul.addr %s416, 8
        %s418 = scalar_lea.vmem %s0, %s417
        %p419 = pneg %p64
        %p420 = pneg %p61
        %p421 = pneg %p85
        %p422 = pneg %p82
        %p423 = pneg %p106
        %p424 = pneg %p103
        %p425 = pneg %p127
        %p426 = pneg %p124
        %p427 = pneg %p148
        %p428 = pneg %p145
        %p429 = pneg %p169
        %p430 = pneg %p166
        %p431 = pneg %p190
        %p432 = pneg %p187
        %p433 = pneg %p211
        %p434 = pneg %p208
        %p435 = pneg %p232
        %p436 = pneg %p229
        %p437 = pneg %p253
        %p438 = pneg %p250
        %p439 = pneg %p274
        %p440 = pneg %p271
        %p441 = pneg %p295
        %p442 = pneg %p292
        %p443 = pneg %p316
        %p444 = pneg %p313
        %p445 = pneg %p344
        %p446 = pneg %p341
        %s447 = sand.u32 %s331, 1
        %s448 = scalar_lea.sflag [#allocation7], %s447
        %s449 = sand.u32 %s331, 1
        %s450 = smul.addr %s449, 64
        %s451 = scalar_lea.vmem [#allocation6], %s450
        %p452 = scmp.lt.s32.totalorder %s35, 1
        %s453 = scalar_select %p452, %s35, 1
        %s454 = smul.addr %s453, 8
        %s455 = smul.addr %s454, 8
        %s456 = scalar_lea.vmem %s0, %s455
        %s457 = smul.u32 4, %s36
        %p458 = scmp.eq.s32.totalorder %s36, 0
        // Predicated region
        $region73: #{tpu_custom_call.1} parent=71 // pred_check
          %p459 = pneg %p458
        $region74: #{tpu_custom_call.1} parent=71 // pred_check_branch
          %461 = sbr.rel (%p459) target = $region76
        $region75: #{tpu_custom_call.1} parent=71 // pred_region
          %v462 = vld [vmem:[%s456] sm:$0xff]
          %v463 = vld [vmem:[%s456 + $0x8] sm:$0xff]
          %v464 = vld [vmem:[%s456 + $0x10] sm:$0xff]
          %v465 = vld [vmem:[%s456 + $0x18] sm:$0xff]
          %v466 = vld [vmem:[%s456 + $0x20] sm:$0xff]
          %v467 = vld [vmem:[%s456 + $0x28] sm:$0xff]
          %v468 = vld [vmem:[%s456 + $0x30] sm:$0xff]
          %v469 = vld [vmem:[%s456 + $0x38] sm:$0xff]
          %v470 = vld [vmem:[%s1] sm:$0xff]
          %v471 = vld [vmem:[%s1 + $0x8] sm:$0xff]
          %v472 = vld [vmem:[%s1 + $0x10] sm:$0xff]
          %v473 = vld [vmem:[%s1 + $0x18] sm:$0xff]
          %v474 = vld [vmem:[%s2] sm:$0xff]
          %v475 = vld [vmem:[%s2 + $0x8] sm:$0xff]
          %v476 = vld [vmem:[%s2 + $0x10] sm:$0xff]
          %v477 = vld [vmem:[%s2 + $0x18] sm:$0xff]
          %478 = vmatprep.subr.mxu0 %v471
          %479 = vmatpush1.xpose.msra.mxu0 %v470
          %480 = vmatprep.subr.mxu0 %v473
          %481 = vmatpush1.xpose.msra.mxu0 %v472
          %482 = vmatprep.subr.mxu0 0.0
          %483 = vmatpush1.xpose.msra.mxu0 0.0
          %484 = vmatprep.subr.mxu0 0.0
          %485 = vmatpush1.xpose.msra.mxu0 0.0
          %486 = vmatprep.subr.mxu0 0.0
          %487 = vmatpush1.xpose.msra.mxu0 0.0
          %488 = vmatprep.subr.mxu0 0.0
          %489 = vmatpush1.xpose.msra.mxu0 0.0
          %490 = vmatprep.subr.mxu0 0.0
          %491 = vmatpush1.xpose.msra.mxu0 0.0
          %492 = vmatprep.subr.mxu0 0.0
          %493 = vmatpush1.xpose.msra.mxu0 0.0
          %494 = vmatprep.subr.mxu0 0.0
          %495 = vmatpush1.xpose.msra.mxu0 0.0
          %496 = vmatprep.subr.mxu0 0.0
          %497 = vmatpush1.xpose.msra.mxu0 0.0
          %498 = vmatprep.subr.mxu0 0.0
          %499 = vmatpush1.xpose.msra.mxu0 0.0
          %500 = vmatprep.subr.mxu0 0.0
          %501 = vmatpush1.xpose.msra.mxu0 0.0
          %502 = vmatprep.subr.mxu0 0.0
          %503 = vmatpush1.xpose.msra.mxu0 0.0
          %504 = vmatprep.subr.mxu0 0.0
          %505 = vmatpush1.xpose.msra.mxu0 0.0
          %506 = vmatprep.subr.mxu0 0.0
          %507 = vmatpush1.xpose.msra.mxu0 0.0
          %508 = vmatprep.subr.mxu0 0.0
          %509 = vmatpush1.xpose.msra.mxu0 0.0
          %510 = vmatprep.subr.mxu0 0.0
          %511 = vmatpush1.xpose.msra.mxu0 0.0
          %512 = vmatprep.subr.mxu0 0.0
          %513 = vmatpush1.xpose.msra.mxu0 0.0
          %514 = vmatprep.subr.mxu0 0.0
          %515 = vmatpush1.xpose.msra.mxu0 0.0
          %516 = vmatprep.subr.mxu0 0.0
          %517 = vmatpush1.xpose.msra.mxu0 0.0
          %518 = vmatprep.subr.mxu0 0.0
          %519 = vmatpush1.xpose.msra.mxu0 0.0
          %520 = vmatprep.subr.mxu0 0.0
          %521 = vmatpush1.xpose.msra.mxu0 0.0
          %522 = vmatprep.subr.mxu0 0.0
          %523 = vmatpush1.xpose.msra.mxu0 0.0
          %524 = vmatprep.subr.mxu0 0.0
          %525 = vmatpush1.xpose.msra.mxu0 0.0
          %526 = vmatprep.subr.mxu0 0.0
          %527 = vmatpush1.xpose.msra.mxu0 0.0
          %528 = vmatprep.subr.mxu0 0.0
          %529 = vmatpush1.xpose.msra.mxu0 0.0
          %530 = vmatprep.subr.mxu0 0.0
          %531 = vmatpush1.xpose.msra.mxu0 0.0
          %532 = vmatprep.subr.mxu0 0.0
          %533 = vmatpush1.xpose.msra.mxu0 0.0
          %534 = vmatprep.subr.mxu0 0.0
          %535 = vmatpush1.xpose.msra.mxu0 0.0
          %536 = vmatprep.subr.mxu0 0.0
          %537 = vmatpush1.xpose.msra.mxu0 0.0
          %538 = vmatprep.subr.mxu0 0.0
          %539 = vmatpush1.xpose.msra.mxu0 0.0
          %540 = vmatprep.subr.mxu0 0.0
          %541 = vmatpush1.xpose.msra.mxu0 0.0
          %542 = vmatprep.mubr.f32.mxu0 %v463
          %543 = vmatmul.mubr.f32.gmra.mrb[0].mxu0 %v462
          %v544 = vpop.f32.mrb[0].mxu0
          %v545 = vadd.f32 0.0, %v544
          %v546 = vpop.f32.mrb[0].mxu0
          %547 = vmatprep.mubr.f32.mxu0 %v465
          %548 = vmatmul.mubr.f32.gmra.mrb[0].mxu0 %v464
          %v549 = vpop.f32.mrb[0].mxu0
          %v550 = vadd.f32 0.0, %v549
          %v551 = vpop.f32.mrb[0].mxu0
          %552 = vmatprep.mubr.f32.mxu0 %v467
          %553 = vmatmul.mubr.f32.gmra.mrb[0].mxu0 %v466
          %v554 = vpop.f32.mrb[0].mxu0
          %v555 = vadd.f32 0.0, %v554
          %v556 = vpop.f32.mrb[0].mxu0
          %557 = vmatprep.mubr.f32.mxu0 %v469
          %558 = vmatmul.mubr.f32.gmra.mrb[0].mxu0 %v468
          %v559 = vpop.f32.mrb[0].mxu0
          %v560 = vadd.f32 0.0, %v559
          %v561 = vpop.f32.mrb[0].mxu0
          %562 = vdwg.mxu0
          %v563 = vmul.f32 %v545, 0.0625
          %v564 = vmul.f32 %v550, 0.0625
          %v565 = vmul.f32 %v555, 0.0625
          %v566 = vmul.f32 %v560, 0.0625
          %567 = vmatprep.subr.mxu0 %v475
          %568 = vmatpush1.xpose.msra.mxu0 %v474
          %569 = vmatprep.subr.mxu0 %v477
          %570 = vmatpush1.xpose.msra.mxu0 %v476
          %571 = vmatprep.subr.mxu0 0.0
          %572 = vmatpush1.xpose.msra.mxu0 0.0
          %573 = vmatprep.subr.mxu0 0.0
          %574 = vmatpush1.xpose.msra.mxu0 0.0
          %575 = vmatprep.subr.mxu0 0.0
          %576 = vmatpush1.xpose.msra.mxu0 0.0
          %577 = vmatprep.subr.mxu0 0.0
          %578 = vmatpush1.xpose.msra.mxu0 0.0
          %579 = vmatprep.subr.mxu0 0.0
          %580 = vmatpush1.xpose.msra.mxu0 0.0
          %581 = vmatprep.subr.mxu0 0.0
          %582 = vmatpush1.xpose.msra.mxu0 0.0
          %583 = vmatprep.subr.mxu0 0.0
          %584 = vmatpush1.xpose.msra.mxu0 0.0
          %585 = vmatprep.subr.mxu0 0.0
          %586 = vmatpush1.xpose.msra.mxu0 0.0
          %587 = vmatprep.subr.mxu0 0.0
          %588 = vmatpush1.xpose.msra.mxu0 0.0
          %589 = vmatprep.subr.mxu0 0.0
          %590 = vmatpush1.xpose.msra.mxu0 0.0
          %591 = vmatprep.subr.mxu0 0.0
          %592 = vmatpush1.xpose.msra.mxu0 0.0
          %593 = vmatprep.subr.mxu0 0.0
          %594 = vmatpush1.xpose.msra.mxu0 0.0
          %595 = vmatprep.subr.mxu0 0.0
          %596 = vmatpush1.xpose.msra.mxu0 0.0
          %597 = vmatprep.subr.mxu0 0.0
          %598 = vmatpush1.xpose.msra.mxu0 0.0
          %599 = vmatprep.subr.mxu0 0.0
          %600 = vmatpush1.xpose.msra.mxu0 0.0
          %601 = vmatprep.subr.mxu0 0.0
          %602 = vmatpush1.xpose.msra.mxu0 0.0
          %603 = vmatprep.subr.mxu0 0.0
          %604 = vmatpush1.xpose.msra.mxu0 0.0
          %605 = vmatprep.subr.mxu0 0.0
          %606 = vmatpush1.xpose.msra.mxu0 0.0
          %607 = vmatprep.subr.mxu0 0.0
          %608 = vmatpush1.xpose.msra.mxu0 0.0
          %609 = vmatprep.subr.mxu0 0.0
          %610 = vmatpush1.xpose.msra.mxu0 0.0
          %611 = vmatprep.subr.mxu0 0.0
          %612 = vmatpush1.xpose.msra.mxu0 0.0
          %613 = vmatprep.subr.mxu0 0.0
          %614 = vmatpush1.xpose.msra.mxu0 0.0
          %615 = vmatprep.subr.mxu0 0.0
          %616 = vmatpush1.xpose.msra.mxu0 0.0
          %617 = vmatprep.subr.mxu0 0.0
          %618 = vmatpush1.xpose.msra.mxu0 0.0
          %619 = vmatprep.subr.mxu0 0.0
          %620 = vmatpush1.xpose.msra.mxu0 0.0
          %621 = vmatprep.subr.mxu0 0.0
          %622 = vmatpush1.xpose.msra.mxu0 0.0
          %623 = vmatprep.subr.mxu0 0.0
          %624 = vmatpush1.xpose.msra.mxu0 0.0
          %625 = vmatprep.subr.mxu0 0.0
          %626 = vmatpush1.xpose.msra.mxu0 0.0
          %627 = vmatprep.subr.mxu0 0.0
          %628 = vmatpush1.xpose.msra.mxu0 0.0
          %629 = vmatprep.subr.mxu0 0.0
          %630 = vmatpush1.xpose.msra.mxu0 0.0
          %631 = vmatprep.mubr.f32.mxu0 %v463
          %632 = vmatmul.mubr.f32.gmra.mrb[0].mxu0 %v462
          %v633 = vpop.f32.mrb[0].mxu0
          %v634 = vadd.f32 0.0, %v633
          %v635 = vpop.f32.mrb[0].mxu0
          %636 = vmatprep.mubr.f32.mxu0 %v465
          %637 = vmatmul.mubr.f32.gmra.mrb[0].mxu0 %v464
          %v638 = vpop.f32.mrb[0].mxu0
          %v639 = vadd.f32 0.0, %v638
          %v640 = vpop.f32.mrb[0].mxu0
          %641 = vmatprep.mubr.f32.mxu0 %v467
          %642 = vmatmul.mubr.f32.gmra.mrb[0].mxu0 %v466
          %v643 = vpop.f32.mrb[0].mxu0
          %v644 = vadd.f32 0.0, %v643
          %v645 = vpop.f32.mrb[0].mxu0
          %646 = vmatprep.mubr.f32.mxu0 %v469
          %647 = vmatmul.mubr.f32.gmra.mrb[0].mxu0 %v468
          %v648 = vpop.f32.mrb[0].mxu0
          %v649 = vadd.f32 0.0, %v648
          %v650 = vpop.f32.mrb[0].mxu0
          %651 = vdwg.mxu0
          %v652 = vmul.f32 %v634, 0.0625
          %v653 = vmul.f32 %v639, 0.0625
          %v654 = vmul.f32 %v644, 0.0625
          %v655 = vmul.f32 %v649, 0.0625
          %v656 = vld [vmem:[%s6] sm:$0xff]
          %v657 = vld [vmem:[%s6 + $0x8] sm:$0xff]
          %v658 = vld [vmem:[%s6 + $0x10] sm:$0xff]
          %v659 = vld [vmem:[%s6 + $0x18] sm:$0xff]
          %v660 = vld [vmem:[%s7] sm:$0xff]
          %v661 = vld [vmem:[%s7 + $0x8] sm:$0xff]
          %v662 = vld [vmem:[%s7 + $0x10] sm:$0xff]
          %v663 = vld [vmem:[%s7 + $0x18] sm:$0xff]
          %v664 = vld [vmem:[%s3] sm:$0xff]
          %v665 = vld [vmem:[%s3 + $0x8] sm:$0xff]
          %v666 = vld [vmem:[%s3 + $0x10] sm:$0xff]
          %v667 = vld [vmem:[%s3 + $0x18] sm:$0xff]
          %672 = vrot.lane.b32.xlu0 %v563, 1
          %v673 = vpop.permute.xlu0 %672
          %674 = vrot.lane.b32.xlu0 %v564, 1
          %v675 = vpop.permute.xlu0 %674
          %676 = vrot.lane.b32.xlu0 %v565, 1
          %v677 = vpop.permute.xlu0 %676
          %678 = vrot.lane.b32.xlu0 %v566, 1
          %v679 = vpop.permute.xlu0 %678
          %vm684 = vcmask 7168
          %v685 = vsel %vm684, 0.0, %v673
          %v686 = vsel %vm684, 0.0, %v675
          %v687 = vsel %vm684, 0.0, %v677
          %v688 = vsel %vm684, 0.0, %v679
          %vm689 = vcmask 138240
          %v690 = vsel %vm689, %v685, 0.0
          %v691 = vsel %vm689, %v686, 0.0
          %v692 = vsel %vm689, %v687, 0.0
          %v693 = vsel %vm689, %v688, 0.0
          %695 = vset.pattern.permute.xlu0 0
          %696 = vperm.xlu0 %695, %v664
          %v697 = vpop.permute.xlu0 %696
          %700 = vset.pattern.permute.xlu0 0
          %701 = vperm.xlu0 %700, %v665
          %v702 = vpop.permute.xlu0 %701
          %705 = vset.pattern.permute.xlu0 0
          %706 = vperm.xlu0 %705, %v666
          %v707 = vpop.permute.xlu0 %706
          %710 = vset.pattern.permute.xlu0 0
          %711 = vperm.xlu0 %710, %v667
          %v712 = vpop.permute.xlu0 %711
          %v714 = vmul.f32 %v697, %v690
          %v715 = vmul.f32 %v702, %v691
          %v716 = vmul.f32 %v707, %v692
          %v717 = vmul.f32 %v712, %v693
          %v718 = vadd.f32 %v714, 0.0
          %v719 = vadd.f32 %v715, 0.0
          %v720 = vadd.f32 %v716, 0.0
          %v721 = vadd.f32 %v717, 0.0
          %722 = vset.pattern.permute.xlu0 1
          %723 = vperm.xlu0 %722, %v664
          %v724 = vpop.permute.xlu0 %723
          %726 = vset.pattern.permute.xlu0 1
          %727 = vperm.xlu0 %726, %v665
          %v728 = vpop.permute.xlu0 %727
          %730 = vset.pattern.permute.xlu0 1
          %731 = vperm.xlu0 %730, %v666
          %v732 = vpop.permute.xlu0 %731
          %734 = vset.pattern.permute.xlu0 1
          %735 = vperm.xlu0 %734, %v667
          %v736 = vpop.permute.xlu0 %735
          %v738 = vmul.f32 %v724, %v690
          %v739 = vmul.f32 %v728, %v691
          %v740 = vmul.f32 %v732, %v692
          %v741 = vmul.f32 %v736, %v693
          %746 = vrot.lane.b32.xlu0 %v738, 127
          %v747 = vpop.permute.xlu0 %746
          %748 = vrot.lane.b32.xlu0 %v739, 127
          %v749 = vpop.permute.xlu0 %748
          %750 = vrot.lane.b32.xlu0 %v740, 127
          %v751 = vpop.permute.xlu0 %750
          %752 = vrot.lane.b32.xlu0 %v741, 127
          %v753 = vpop.permute.xlu0 %752
          %v758 = vadd.f32 %v718, %v747
          %v759 = vadd.f32 %v719, %v749
          %v760 = vadd.f32 %v720, %v751
          %v761 = vadd.f32 %v721, %v753
          %762 = vset.pattern.permute.xlu0 2
          %763 = vperm.xlu0 %762, %v664
          %v764 = vpop.permute.xlu0 %763
          %766 = vset.pattern.permute.xlu0 2
          %767 = vperm.xlu0 %766, %v665
          %v768 = vpop.permute.xlu0 %767
          %770 = vset.pattern.permute.xlu0 2
          %771 = vperm.xlu0 %770, %v666
          %v772 = vpop.permute.xlu0 %771
          %774 = vset.pattern.permute.xlu0 2
          %775 = vperm.xlu0 %774, %v667
          %v776 = vpop.permute.xlu0 %775
          %v778 = vmul.f32 %v764, %v690
          %v779 = vmul.f32 %v768, %v691
          %v780 = vmul.f32 %v772, %v692
          %v781 = vmul.f32 %v776, %v693
          %786 = vrot.lane.b32.xlu0 %v778, 126
          %v787 = vpop.permute.xlu0 %786
          %788 = vrot.lane.b32.xlu0 %v779, 126
          %v789 = vpop.permute.xlu0 %788
          %790 = vrot.lane.b32.xlu0 %v780, 126
          %v791 = vpop.permute.xlu0 %790
          %792 = vrot.lane.b32.xlu0 %v781, 126
          %v793 = vpop.permute.xlu0 %792
          %v798 = vadd.f32 %v758, %v787
          %v799 = vadd.f32 %v759, %v789
          %v800 = vadd.f32 %v760, %v791
          %v801 = vadd.f32 %v761, %v793
          %803 = vset.pattern.permute.xlu0 0
          %804 = vperm.xlu0 %803, %v656
          %v805 = vpop.permute.xlu0 %804
          %808 = vset.pattern.permute.xlu0 0
          %809 = vperm.xlu0 %808, %v657
          %v810 = vpop.permute.xlu0 %809
          %813 = vset.pattern.permute.xlu0 0
          %814 = vperm.xlu0 %813, %v658
          %v815 = vpop.permute.xlu0 %814
          %818 = vset.pattern.permute.xlu0 0
          %819 = vperm.xlu0 %818, %v659
          %v820 = vpop.permute.xlu0 %819
          %v822 = vmul.f32 %v798, %v805
          %v823 = vmul.f32 %v799, %v810
          %v824 = vmul.f32 %v800, %v815
          %v825 = vmul.f32 %v801, %v820
          %827 = vset.pattern.permute.xlu0 0
          %828 = vperm.xlu0 %827, %v660
          %v829 = vpop.permute.xlu0 %828
          %832 = vset.pattern.permute.xlu0 0
          %833 = vperm.xlu0 %832, %v661
          %v834 = vpop.permute.xlu0 %833
          %837 = vset.pattern.permute.xlu0 0
          %838 = vperm.xlu0 %837, %v662
          %v839 = vpop.permute.xlu0 %838
          %842 = vset.pattern.permute.xlu0 0
          %843 = vperm.xlu0 %842, %v663
          %v844 = vpop.permute.xlu0 %843
          %v846 = vadd.f32 %v822, %v829
          %v847 = vadd.f32 %v823, %v834
          %v848 = vadd.f32 %v824, %v839
          %v849 = vadd.f32 %v825, %v844
          %v850 = vld [vmem:[%s4] sm:$0xff]
          %v851 = vld [vmem:[%s4 + $0x8] sm:$0xff]
          %v852 = vld [vmem:[%s4 + $0x10] sm:$0xff]
          %v853 = vld [vmem:[%s4 + $0x18] sm:$0xff]
          %854 = vrot.lane.b32.xlu0 %v563, 3
          %v855 = vpop.permute.xlu0 %854
          %856 = vrot.lane.b32.xlu0 %v564, 3
          %v857 = vpop.permute.xlu0 %856
          %858 = vrot.lane.b32.xlu0 %v565, 3
          %v859 = vpop.permute.xlu0 %858
          %860 = vrot.lane.b32.xlu0 %v566, 3
          %v861 = vpop.permute.xlu0 %860
          %vm866 = vcmask 23552
          %v867 = vsel %vm866, 0.0, %v855
          %v868 = vsel %vm866, 0.0, %v857
          %v869 = vsel %vm866, 0.0, %v859
          %v870 = vsel %vm866, 0.0, %v861
          %vm871 = vcmask 154624
          %v872 = vsel %vm871, %v867, 0.0
          %v873 = vsel %vm871, %v868, 0.0
          %v874 = vsel %vm871, %v869, 0.0
          %v875 = vsel %vm871, %v870, 0.0
          %877 = vset.pattern.permute.xlu0 0
          %878 = vperm.xlu0 %877, %v850
          %v879 = vpop.permute.xlu0 %878
          %882 = vset.pattern.permute.xlu0 0
          %883 = vperm.xlu0 %882, %v851
          %v884 = vpop.permute.xlu0 %883
          %887 = vset.pattern.permute.xlu0 0
          %888 = vperm.xlu0 %887, %v852
          %v889 = vpop.permute.xlu0 %888
          %892 = vset.pattern.permute.xlu0 0
          %893 = vperm.xlu0 %892, %v853
          %v894 = vpop.permute.xlu0 %893
          %v896 = vmul.f32 %v879, %v872
          %v897 = vmul.f32 %v884, %v873
          %v898 = vmul.f32 %v889, %v874
          %v899 = vmul.f32 %v894, %v875
          %v900 = vadd.f32 %v896, 0.0
          %v901 = vadd.f32 %v897, 0.0
          %v902 = vadd.f32 %v898, 0.0
          %v903 = vadd.f32 %v899, 0.0
          %904 = vset.pattern.permute.xlu0 1
          %905 = vperm.xlu0 %904, %v850
          %v906 = vpop.permute.xlu0 %905
          %908 = vset.pattern.permute.xlu0 1
          %909 = vperm.xlu0 %908, %v851
          %v910 = vpop.permute.xlu0 %909
          %912 = vset.pattern.permute.xlu0 1
          %913 = vperm.xlu0 %912, %v852
          %v914 = vpop.permute.xlu0 %913
          %916 = vset.pattern.permute.xlu0 1
          %917 = vperm.xlu0 %916, %v853
          %v918 = vpop.permute.xlu0 %917
          %v920 = vmul.f32 %v906, %v872
          %v921 = vmul.f32 %v910, %v873
          %v922 = vmul.f32 %v914, %v874
          %v923 = vmul.f32 %v918, %v875
          %928 = vrot.lane.b32.xlu0 %v920, 127
          %v929 = vpop.permute.xlu0 %928
          %930 = vrot.lane.b32.xlu0 %v921, 127
          %v931 = vpop.permute.xlu0 %930
          %932 = vrot.lane.b32.xlu0 %v922, 127
          %v933 = vpop.permute.xlu0 %932
          %934 = vrot.lane.b32.xlu0 %v923, 127
          %v935 = vpop.permute.xlu0 %934
          %v940 = vadd.f32 %v900, %v929
          %v941 = vadd.f32 %v901, %v931
          %v942 = vadd.f32 %v902, %v933
          %v943 = vadd.f32 %v903, %v935
          %944 = vset.pattern.permute.xlu0 2
          %945 = vperm.xlu0 %944, %v850
          %v946 = vpop.permute.xlu0 %945
          %948 = vset.pattern.permute.xlu0 2
          %949 = vperm.xlu0 %948, %v851
          %v950 = vpop.permute.xlu0 %949
          %952 = vset.pattern.permute.xlu0 2
          %953 = vperm.xlu0 %952, %v852
          %v954 = vpop.permute.xlu0 %953
          %956 = vset.pattern.permute.xlu0 2
          %957 = vperm.xlu0 %956, %v853
          %v958 = vpop.permute.xlu0 %957
          %v960 = vmul.f32 %v946, %v872
          %v961 = vmul.f32 %v950, %v873
          %v962 = vmul.f32 %v954, %v874
          %v963 = vmul.f32 %v958, %v875
          %968 = vrot.lane.b32.xlu0 %v960, 126
          %v969 = vpop.permute.xlu0 %968
          %970 = vrot.lane.b32.xlu0 %v961, 126
          %v971 = vpop.permute.xlu0 %970
          %972 = vrot.lane.b32.xlu0 %v962, 126
          %v973 = vpop.permute.xlu0 %972
          %974 = vrot.lane.b32.xlu0 %v963, 126
          %v975 = vpop.permute.xlu0 %974
          %v980 = vadd.f32 %v940, %v969
          %v981 = vadd.f32 %v941, %v971
          %v982 = vadd.f32 %v942, %v973
          %v983 = vadd.f32 %v943, %v975
          %984 = vset.pattern.permute.xlu0 3
          %985 = vperm.xlu0 %984, %v850
          %v986 = vpop.permute.xlu0 %985
          %988 = vset.pattern.permute.xlu0 3
          %989 = vperm.xlu0 %988, %v851
          %v990 = vpop.permute.xlu0 %989
          %992 = vset.pattern.permute.xlu0 3
          %993 = vperm.xlu0 %992, %v852
          %v994 = vpop.permute.xlu0 %993
          %996 = vset.pattern.permute.xlu0 3
          %997 = vperm.xlu0 %996, %v853
          %v998 = vpop.permute.xlu0 %997
          %v1000 = vmul.f32 %v986, %v872
          %v1001 = vmul.f32 %v990, %v873
          %v1002 = vmul.f32 %v994, %v874
          %v1003 = vmul.f32 %v998, %v875
          %1008 = vrot.lane.b32.xlu0 %v1000, 125
          %v1009 = vpop.permute.xlu0 %1008
          %1010 = vrot.lane.b32.xlu0 %v1001, 125
          %v1011 = vpop.permute.xlu0 %1010
          %1012 = vrot.lane.b32.xlu0 %v1002, 125
          %v1013 = vpop.permute.xlu0 %1012
          %1014 = vrot.lane.b32.xlu0 %v1003, 125
          %v1015 = vpop.permute.xlu0 %1014
          %v1020 = vadd.f32 %v980, %v1009
          %v1021 = vadd.f32 %v981, %v1011
          %v1022 = vadd.f32 %v982, %v1013
          %v1023 = vadd.f32 %v983, %v1015
          %1024 = vset.pattern.permute.xlu0 4
          %1025 = vperm.xlu0 %1024, %v850
          %v1026 = vpop.permute.xlu0 %1025
          %1028 = vset.pattern.permute.xlu0 4
          %1029 = vperm.xlu0 %1028, %v851
          %v1030 = vpop.permute.xlu0 %1029
          %1032 = vset.pattern.permute.xlu0 4
          %1033 = vperm.xlu0 %1032, %v852
          %v1034 = vpop.permute.xlu0 %1033
          %1036 = vset.pattern.permute.xlu0 4
          %1037 = vperm.xlu0 %1036, %v853
          %v1038 = vpop.permute.xlu0 %1037
          %v1040 = vmul.f32 %v1026, %v872
          %v1041 = vmul.f32 %v1030, %v873
          %v1042 = vmul.f32 %v1034, %v874
          %v1043 = vmul.f32 %v1038, %v875
          %1048 = vrot.lane.b32.xlu0 %v1040, 124
          %v1049 = vpop.permute.xlu0 %1048
          %1050 = vrot.lane.b32.xlu0 %v1041, 124
          %v1051 = vpop.permute.xlu0 %1050
          %1052 = vrot.lane.b32.xlu0 %v1042, 124
          %v1053 = vpop.permute.xlu0 %1052
          %1054 = vrot.lane.b32.xlu0 %v1043, 124
          %v1055 = vpop.permute.xlu0 %1054
          %v1060 = vadd.f32 %v1020, %v1049
          %v1061 = vadd.f32 %v1021, %v1051
          %v1062 = vadd.f32 %v1022, %v1053
          %v1063 = vadd.f32 %v1023, %v1055
          %1064 = vset.pattern.permute.xlu0 5
          %1065 = vperm.xlu0 %1064, %v850
          %v1066 = vpop.permute.xlu0 %1065
          %1068 = vset.pattern.permute.xlu0 5
          %1069 = vperm.xlu0 %1068, %v851
          %v1070 = vpop.permute.xlu0 %1069
          %1072 = vset.pattern.permute.xlu0 5
          %1073 = vperm.xlu0 %1072, %v852
          %v1074 = vpop.permute.xlu0 %1073
          %1076 = vset.pattern.permute.xlu0 5
          %1077 = vperm.xlu0 %1076, %v853
          %v1078 = vpop.permute.xlu0 %1077
          %v1080 = vmul.f32 %v1066, %v872
          %v1081 = vmul.f32 %v1070, %v873
          %v1082 = vmul.f32 %v1074, %v874
          %v1083 = vmul.f32 %v1078, %v875
          %1088 = vrot.lane.b32.xlu0 %v1080, 123
          %v1089 = vpop.permute.xlu0 %1088
          %1090 = vrot.lane.b32.xlu0 %v1081, 123
          %v1091 = vpop.permute.xlu0 %1090
          %1092 = vrot.lane.b32.xlu0 %v1082, 123
          %v1093 = vpop.permute.xlu0 %1092
          %1094 = vrot.lane.b32.xlu0 %v1083, 123
          %v1095 = vpop.permute.xlu0 %1094
          %v1100 = vadd.f32 %v1060, %v1089
          %v1101 = vadd.f32 %v1061, %v1091
          %v1102 = vadd.f32 %v1062, %v1093
          %v1103 = vadd.f32 %v1063, %v1095
          %1104 = vset.pattern.permute.xlu0 6
          %1105 = vperm.xlu0 %1104, %v850
          %v1106 = vpop.permute.xlu0 %1105
          %1108 = vset.pattern.permute.xlu0 6
          %1109 = vperm.xlu0 %1108, %v851
          %v1110 = vpop.permute.xlu0 %1109
          %1112 = vset.pattern.permute.xlu0 6
          %1113 = vperm.xlu0 %1112, %v852
          %v1114 = vpop.permute.xlu0 %1113
          %1116 = vset.pattern.permute.xlu0 6
          %1117 = vperm.xlu0 %1116, %v853
          %v1118 = vpop.permute.xlu0 %1117
          %v1120 = vmul.f32 %v1106, %v872
          %v1121 = vmul.f32 %v1110, %v873
          %v1122 = vmul.f32 %v1114, %v874
          %v1123 = vmul.f32 %v1118, %v875
          %1128 = vrot.lane.b32.xlu0 %v1120, 122
          %v1129 = vpop.permute.xlu0 %1128
          %1130 = vrot.lane.b32.xlu0 %v1121, 122
          %v1131 = vpop.permute.xlu0 %1130
          %1132 = vrot.lane.b32.xlu0 %v1122, 122
          %v1133 = vpop.permute.xlu0 %1132
          %1134 = vrot.lane.b32.xlu0 %v1123, 122
          %v1135 = vpop.permute.xlu0 %1134
          %v1140 = vadd.f32 %v1100, %v1129
          %v1141 = vadd.f32 %v1101, %v1131
          %v1142 = vadd.f32 %v1102, %v1133
          %v1143 = vadd.f32 %v1103, %v1135
          %v1144 = vmul.f32 %v1140, %v805
          %v1145 = vmul.f32 %v1141, %v810
          %v1146 = vmul.f32 %v1142, %v815
          %v1147 = vmul.f32 %v1143, %v820
          %v1148 = vadd.f32 %v1144, %v829
          %v1149 = vadd.f32 %v1145, %v834
          %v1150 = vadd.f32 %v1146, %v839
          %v1151 = vadd.f32 %v1147, %v844
          %v1152 = vld [vmem:[%s5] sm:$0xff]
          %v1153 = vld [vmem:[%s5 + $0x8] sm:$0xff]
          %v1154 = vld [vmem:[%s5 + $0x10] sm:$0xff]
          %v1155 = vld [vmem:[%s5 + $0x18] sm:$0xff]
          %1156 = vrot.lane.b32.xlu0 %v563, 5
          %v1157 = vpop.permute.xlu0 %1156
          %1158 = vrot.lane.b32.xlu0 %v564, 5
          %v1159 = vpop.permute.xlu0 %1158
          %1160 = vrot.lane.b32.xlu0 %v565, 5
          %v1161 = vpop.permute.xlu0 %1160
          %1162 = vrot.lane.b32.xlu0 %v566, 5
          %v1163 = vpop.permute.xlu0 %1162
          %vm1168 = vcmask 39936
          %v1169 = vsel %vm1168, 0.0, %v1157
          %v1170 = vsel %vm1168, 0.0, %v1159
          %v1171 = vsel %vm1168, 0.0, %v1161
          %v1172 = vsel %vm1168, 0.0, %v1163
          %vm1173 = vcmask 171008
          %v1174 = vsel %vm1173, %v1169, 0.0
          %v1175 = vsel %vm1173, %v1170, 0.0
          %v1176 = vsel %vm1173, %v1171, 0.0
          %v1177 = vsel %vm1173, %v1172, 0.0
          %1179 = vset.pattern.permute.xlu0 0
          %1180 = vperm.xlu0 %1179, %v1152
          %v1181 = vpop.permute.xlu0 %1180
          %1184 = vset.pattern.permute.xlu0 0
          %1185 = vperm.xlu0 %1184, %v1153
          %v1186 = vpop.permute.xlu0 %1185
          %1189 = vset.pattern.permute.xlu0 0
          %1190 = vperm.xlu0 %1189, %v1154
          %v1191 = vpop.permute.xlu0 %1190
          %1194 = vset.pattern.permute.xlu0 0
          %1195 = vperm.xlu0 %1194, %v1155
          %v1196 = vpop.permute.xlu0 %1195
          %v1198 = vmul.f32 %v1181, %v1174
          %v1199 = vmul.f32 %v1186, %v1175
          %v1200 = vmul.f32 %v1191, %v1176
          %v1201 = vmul.f32 %v1196, %v1177
          %v1202 = vadd.f32 %v1198, 0.0
          %v1203 = vadd.f32 %v1199, 0.0
          %v1204 = vadd.f32 %v1200, 0.0
          %v1205 = vadd.f32 %v1201, 0.0
          %1206 = vset.pattern.permute.xlu0 1
          %1207 = vperm.xlu0 %1206, %v1152
          %v1208 = vpop.permute.xlu0 %1207
          %1210 = vset.pattern.permute.xlu0 1
          %1211 = vperm.xlu0 %1210, %v1153
          %v1212 = vpop.permute.xlu0 %1211
          %1214 = vset.pattern.permute.xlu0 1
          %1215 = vperm.xlu0 %1214, %v1154
          %v1216 = vpop.permute.xlu0 %1215
          %1218 = vset.pattern.permute.xlu0 1
          %1219 = vperm.xlu0 %1218, %v1155
          %v1220 = vpop.permute.xlu0 %1219
          %v1222 = vmul.f32 %v1208, %v1174
          %v1223 = vmul.f32 %v1212, %v1175
          %v1224 = vmul.f32 %v1216, %v1176
          %v1225 = vmul.f32 %v1220, %v1177
          %1230 = vrot.lane.b32.xlu0 %v1222, 127
          %v1231 = vpop.permute.xlu0 %1230
          %1232 = vrot.lane.b32.xlu0 %v1223, 127
          %v1233 = vpop.permute.xlu0 %1232
          %1234 = vrot.lane.b32.xlu0 %v1224, 127
          %v1235 = vpop.permute.xlu0 %1234
          %1236 = vrot.lane.b32.xlu0 %v1225, 127
          %v1237 = vpop.permute.xlu0 %1236
          %v1242 = vadd.f32 %v1202, %v1231
          %v1243 = vadd.f32 %v1203, %v1233
          %v1244 = vadd.f32 %v1204, %v1235
          %v1245 = vadd.f32 %v1205, %v1237
          %1246 = vset.pattern.permute.xlu0 2
          %1247 = vperm.xlu0 %1246, %v1152
          %v1248 = vpop.permute.xlu0 %1247
          %1250 = vset.pattern.permute.xlu0 2
          %1251 = vperm.xlu0 %1250, %v1153
          %v1252 = vpop.permute.xlu0 %1251
          %1254 = vset.pattern.permute.xlu0 2
          %1255 = vperm.xlu0 %1254, %v1154
          %v1256 = vpop.permute.xlu0 %1255
          %1258 = vset.pattern.permute.xlu0 2
          %1259 = vperm.xlu0 %1258, %v1155
          %v1260 = vpop.permute.xlu0 %1259
          %v1262 = vmul.f32 %v1248, %v1174
          %v1263 = vmul.f32 %v1252, %v1175
          %v1264 = vmul.f32 %v1256, %v1176
          %v1265 = vmul.f32 %v1260, %v1177
          %1270 = vrot.lane.b32.xlu0 %v1262, 126
          %v1271 = vpop.permute.xlu0 %1270
          %1272 = vrot.lane.b32.xlu0 %v1263, 126
          %v1273 = vpop.permute.xlu0 %1272
          %1274 = vrot.lane.b32.xlu0 %v1264, 126
          %v1275 = vpop.permute.xlu0 %1274
          %1276 = vrot.lane.b32.xlu0 %v1265, 126
          %v1277 = vpop.permute.xlu0 %1276
          %v1282 = vadd.f32 %v1242, %v1271
          %v1283 = vadd.f32 %v1243, %v1273
          %v1284 = vadd.f32 %v1244, %v1275
          %v1285 = vadd.f32 %v1245, %v1277
          %1286 = vset.pattern.permute.xlu0 3
          %1287 = vperm.xlu0 %1286, %v1152
          %v1288 = vpop.permute.xlu0 %1287
          %1290 = vset.pattern.permute.xlu0 3
          %1291 = vperm.xlu0 %1290, %v1153
          %v1292 = vpop.permute.xlu0 %1291
          %1294 = vset.pattern.permute.xlu0 3
          %1295 = vperm.xlu0 %1294, %v1154
          %v1296 = vpop.permute.xlu0 %1295
          %1298 = vset.pattern.permute.xlu0 3
          %1299 = vperm.xlu0 %1298, %v1155
          %v1300 = vpop.permute.xlu0 %1299
          %v1302 = vmul.f32 %v1288, %v1174
          %v1303 = vmul.f32 %v1292, %v1175
          %v1304 = vmul.f32 %v1296, %v1176
          %v1305 = vmul.f32 %v1300, %v1177
          %1310 = vrot.lane.b32.xlu0 %v1302, 125
          %v1311 = vpop.permute.xlu0 %1310
          %1312 = vrot.lane.b32.xlu0 %v1303, 125
          %v1313 = vpop.permute.xlu0 %1312
          %1314 = vrot.lane.b32.xlu0 %v1304, 125
          %v1315 = vpop.permute.xlu0 %1314
          %1316 = vrot.lane.b32.xlu0 %v1305, 125
          %v1317 = vpop.permute.xlu0 %1316
          %v1322 = vadd.f32 %v1282, %v1311
          %v1323 = vadd.f32 %v1283, %v1313
          %v1324 = vadd.f32 %v1284, %v1315
          %v1325 = vadd.f32 %v1285, %v1317
          %1326 = vset.pattern.permute.xlu0 4
          %1327 = vperm.xlu0 %1326, %v1152
          %v1328 = vpop.permute.xlu0 %1327
          %1330 = vset.pattern.permute.xlu0 4
          %1331 = vperm.xlu0 %1330, %v1153
          %v1332 = vpop.permute.xlu0 %1331
          %1334 = vset.pattern.permute.xlu0 4
          %1335 = vperm.xlu0 %1334, %v1154
          %v1336 = vpop.permute.xlu0 %1335
          %1338 = vset.pattern.permute.xlu0 4
          %1339 = vperm.xlu0 %1338, %v1155
          %v1340 = vpop.permute.xlu0 %1339
          %v1342 = vmul.f32 %v1328, %v1174
          %v1343 = vmul.f32 %v1332, %v1175
          %v1344 = vmul.f32 %v1336, %v1176
          %v1345 = vmul.f32 %v1340, %v1177
          %1350 = vrot.lane.b32.xlu0 %v1342, 124
          %v1351 = vpop.permute.xlu0 %1350
          %1352 = vrot.lane.b32.xlu0 %v1343, 124
          %v1353 = vpop.permute.xlu0 %1352
          %1354 = vrot.lane.b32.xlu0 %v1344, 124
          %v1355 = vpop.permute.xlu0 %1354
          %1356 = vrot.lane.b32.xlu0 %v1345, 124
          %v1357 = vpop.permute.xlu0 %1356
          %v1362 = vadd.f32 %v1322, %v1351
          %v1363 = vadd.f32 %v1323, %v1353
          %v1364 = vadd.f32 %v1324, %v1355
          %v1365 = vadd.f32 %v1325, %v1357
          %1366 = vset.pattern.permute.xlu0 5
          %1367 = vperm.xlu0 %1366, %v1152
          %v1368 = vpop.permute.xlu0 %1367
          %1370 = vset.pattern.permute.xlu0 5
          %1371 = vperm.xlu0 %1370, %v1153
          %v1372 = vpop.permute.xlu0 %1371
          %1374 = vset.pattern.permute.xlu0 5
          %1375 = vperm.xlu0 %1374, %v1154
          %v1376 = vpop.permute.xlu0 %1375
          %1378 = vset.pattern.permute.xlu0 5
          %1379 = vperm.xlu0 %1378, %v1155
          %v1380 = vpop.permute.xlu0 %1379
          %v1382 = vmul.f32 %v1368, %v1174
          %v1383 = vmul.f32 %v1372, %v1175
          %v1384 = vmul.f32 %v1376, %v1176
          %v1385 = vmul.f32 %v1380, %v1177
          %1390 = vrot.lane.b32.xlu0 %v1382, 123
          %v1391 = vpop.permute.xlu0 %1390
          %1392 = vrot.lane.b32.xlu0 %v1383, 123
          %v1393 = vpop.permute.xlu0 %1392
          %1394 = vrot.lane.b32.xlu0 %v1384, 123
          %v1395 = vpop.permute.xlu0 %1394
          %1396 = vrot.lane.b32.xlu0 %v1385, 123
          %v1397 = vpop.permute.xlu0 %1396
          %v1402 = vadd.f32 %v1362, %v1391
          %v1403 = vadd.f32 %v1363, %v1393
          %v1404 = vadd.f32 %v1364, %v1395
          %v1405 = vadd.f32 %v1365, %v1397
          %1406 = vset.pattern.permute.xlu0 6
          %1407 = vperm.xlu0 %1406, %v1152
          %v1408 = vpop.permute.xlu0 %1407
          %1410 = vset.pattern.permute.xlu0 6
          %1411 = vperm.xlu0 %1410, %v1153
          %v1412 = vpop.permute.xlu0 %1411
          %1414 = vset.pattern.permute.xlu0 6
          %1415 = vperm.xlu0 %1414, %v1154
          %v1416 = vpop.permute.xlu0 %1415
          %1418 = vset.pattern.permute.xlu0 6
          %1419 = vperm.xlu0 %1418, %v1155
          %v1420 = vpop.permute.xlu0 %1419
          %v1422 = vmul.f32 %v1408, %v1174
          %v1423 = vmul.f32 %v1412, %v1175
          %v1424 = vmul.f32 %v1416, %v1176
          %v1425 = vmul.f32 %v1420, %v1177
          %1430 = vrot.lane.b32.xlu0 %v1422, 122
          %v1431 = vpop.permute.xlu0 %1430
          %1432 = vrot.lane.b32.xlu0 %v1423, 122
          %v1433 = vpop.permute.xlu0 %1432
          %1434 = vrot.lane.b32.xlu0 %v1424, 122
          %v1435 = vpop.permute.xlu0 %1434
          %1436 = vrot.lane.b32.xlu0 %v1425, 122
          %v1437 = vpop.permute.xlu0 %1436
          %v1442 = vadd.f32 %v1402, %v1431
          %v1443 = vadd.f32 %v1403, %v1433
          %v1444 = vadd.f32 %v1404, %v1435
          %v1445 = vadd.f32 %v1405, %v1437
          %1446 = vset.pattern.permute.xlu0 7
          %1447 = vperm.xlu0 %1446, %v1152
          %v1448 = vpop.permute.xlu0 %1447
          %1450 = vset.pattern.permute.xlu0 7
          %1451 = vperm.xlu0 %1450, %v1153
          %v1452 = vpop.permute.xlu0 %1451
          %1454 = vset.pattern.permute.xlu0 7
          %1455 = vperm.xlu0 %1454, %v1154
          %v1456 = vpop.permute.xlu0 %1455
          %1458 = vset.pattern.permute.xlu0 7
          %1459 = vperm.xlu0 %1458, %v1155
          %v1460 = vpop.permute.xlu0 %1459
          %v1462 = vmul.f32 %v1448, %v1174
          %v1463 = vmul.f32 %v1452, %v1175
          %v1464 = vmul.f32 %v1456, %v1176
          %v1465 = vmul.f32 %v1460, %v1177
          %1470 = vrot.lane.b32.xlu0 %v1462, 121
          %v1471 = vpop.permute.xlu0 %1470
          %1472 = vrot.lane.b32.xlu0 %v1463, 121
          %v1473 = vpop.permute.xlu0 %1472
          %1474 = vrot.lane.b32.xlu0 %v1464, 121
          %v1475 = vpop.permute.xlu0 %1474
          %1476 = vrot.lane.b32.xlu0 %v1465, 121
          %v1477 = vpop.permute.xlu0 %1476
          %v1482 = vadd.f32 %v1442, %v1471
          %v1483 = vadd.f32 %v1443, %v1473
          %v1484 = vadd.f32 %v1444, %v1475
          %v1485 = vadd.f32 %v1445, %v1477
          %1486 = vset.pattern.permute.xlu0 8
          %1487 = vperm.xlu0 %1486, %v1152
          %v1488 = vpop.permute.xlu0 %1487
          %1490 = vset.pattern.permute.xlu0 8
          %1491 = vperm.xlu0 %1490, %v1153
          %v1492 = vpop.permute.xlu0 %1491
          %1494 = vset.pattern.permute.xlu0 8
          %1495 = vperm.xlu0 %1494, %v1154
          %v1496 = vpop.permute.xlu0 %1495
          %1498 = vset.pattern.permute.xlu0 8
          %1499 = vperm.xlu0 %1498, %v1155
          %v1500 = vpop.permute.xlu0 %1499
          %v1502 = vmul.f32 %v1488, %v1174
          %v1503 = vmul.f32 %v1492, %v1175
          %v1504 = vmul.f32 %v1496, %v1176
          %v1505 = vmul.f32 %v1500, %v1177
          %1510 = vrot.lane.b32.xlu0 %v1502, 120
          %v1511 = vpop.permute.xlu0 %1510
          %1512 = vrot.lane.b32.xlu0 %v1503, 120
          %v1513 = vpop.permute.xlu0 %1512
          %1514 = vrot.lane.b32.xlu0 %v1504, 120
          %v1515 = vpop.permute.xlu0 %1514
          %1516 = vrot.lane.b32.xlu0 %v1505, 120
          %v1517 = vpop.permute.xlu0 %1516
          %v1522 = vadd.f32 %v1482, %v1511
          %v1523 = vadd.f32 %v1483, %v1513
          %v1524 = vadd.f32 %v1484, %v1515
          %v1525 = vadd.f32 %v1485, %v1517
          %1526 = vset.pattern.permute.xlu0 9
          %1527 = vperm.xlu0 %1526, %v1152
          %v1528 = vpop.permute.xlu0 %1527
          %1530 = vset.pattern.permute.xlu0 9
          %1531 = vperm.xlu0 %1530, %v1153
          %v1532 = vpop.permute.xlu0 %1531
          %1534 = vset.pattern.permute.xlu0 9
          %1535 = vperm.xlu0 %1534, %v1154
          %v1536 = vpop.permute.xlu0 %1535
          %1538 = vset.pattern.permute.xlu0 9
          %1539 = vperm.xlu0 %1538, %v1155
          %v1540 = vpop.permute.xlu0 %1539
          %v1542 = vmul.f32 %v1528, %v1174
          %v1543 = vmul.f32 %v1532, %v1175
          %v1544 = vmul.f32 %v1536, %v1176
          %v1545 = vmul.f32 %v1540, %v1177
          %1550 = vrot.lane.b32.xlu0 %v1542, 119
          %v1551 = vpop.permute.xlu0 %1550
          %1552 = vrot.lane.b32.xlu0 %v1543, 119
          %v1553 = vpop.permute.xlu0 %1552
          %1554 = vrot.lane.b32.xlu0 %v1544, 119
          %v1555 = vpop.permute.xlu0 %1554
          %1556 = vrot.lane.b32.xlu0 %v1545, 119
          %v1557 = vpop.permute.xlu0 %1556
          %v1562 = vadd.f32 %v1522, %v1551
          %v1563 = vadd.f32 %v1523, %v1553
          %v1564 = vadd.f32 %v1524, %v1555
          %v1565 = vadd.f32 %v1525, %v1557
          %1566 = vset.pattern.permute.xlu0 10
          %1567 = vperm.xlu0 %1566, %v1152
          %v1568 = vpop.permute.xlu0 %1567
          %1570 = vset.pattern.permute.xlu0 10
          %1571 = vperm.xlu0 %1570, %v1153
          %v1572 = vpop.permute.xlu0 %1571
          %1574 = vset.pattern.permute.xlu0 10
          %1575 = vperm.xlu0 %1574, %v1154
          %v1576 = vpop.permute.xlu0 %1575
          %1578 = vset.pattern.permute.xlu0 10
          %1579 = vperm.xlu0 %1578, %v1155
          %v1580 = vpop.permute.xlu0 %1579
          %v1582 = vmul.f32 %v1568, %v1174
          %v1583 = vmul.f32 %v1572, %v1175
          %v1584 = vmul.f32 %v1576, %v1176
          %v1585 = vmul.f32 %v1580, %v1177
          %1590 = vrot.lane.b32.xlu0 %v1582, 118
          %v1591 = vpop.permute.xlu0 %1590
          %1592 = vrot.lane.b32.xlu0 %v1583, 118
          %v1593 = vpop.permute.xlu0 %1592
          %1594 = vrot.lane.b32.xlu0 %v1584, 118
          %v1595 = vpop.permute.xlu0 %1594
          %1596 = vrot.lane.b32.xlu0 %v1585, 118
          %v1597 = vpop.permute.xlu0 %1596
          %v1602 = vadd.f32 %v1562, %v1591
          %v1603 = vadd.f32 %v1563, %v1593
          %v1604 = vadd.f32 %v1564, %v1595
          %v1605 = vadd.f32 %v1565, %v1597
          %v1606 = vmul.f32 %v1602, %v805
          %v1607 = vmul.f32 %v1603, %v810
          %v1608 = vmul.f32 %v1604, %v815
          %v1609 = vmul.f32 %v1605, %v820
          %v1610 = vadd.f32 %v1606, %v829
          %v1611 = vadd.f32 %v1607, %v834
          %v1612 = vadd.f32 %v1608, %v839
          %v1613 = vadd.f32 %v1609, %v844
          %1618 = vrot.lane.b32.xlu0 %v652, 1
          %v1619 = vpop.permute.xlu0 %1618
          %1620 = vrot.lane.b32.xlu0 %v653, 1
          %v1621 = vpop.permute.xlu0 %1620
          %1622 = vrot.lane.b32.xlu0 %v654, 1
          %v1623 = vpop.permute.xlu0 %1622
          %1624 = vrot.lane.b32.xlu0 %v655, 1
          %v1625 = vpop.permute.xlu0 %1624
          %v1630 = vsel %vm684, 0.0, %v1619
          %v1631 = vsel %vm684, 0.0, %v1621
          %v1632 = vsel %vm684, 0.0, %v1623
          %v1633 = vsel %vm684, 0.0, %v1625
          %v1634 = vsel %vm689, %v1630, 0.0
          %v1635 = vsel %vm689, %v1631, 0.0
          %v1636 = vsel %vm689, %v1632, 0.0
          %v1637 = vsel %vm689, %v1633, 0.0
          %v1638 = vmul.f32 %v697, %v1634
          %v1639 = vmul.f32 %v702, %v1635
          %v1640 = vmul.f32 %v707, %v1636
          %v1641 = vmul.f32 %v712, %v1637
          %v1642 = vadd.f32 %v1638, 0.0
          %v1643 = vadd.f32 %v1639, 0.0
          %v1644 = vadd.f32 %v1640, 0.0
          %v1645 = vadd.f32 %v1641, 0.0
          %v1646 = vmul.f32 %v724, %v1634
          %v1647 = vmul.f32 %v728, %v1635
          %v1648 = vmul.f32 %v732, %v1636
          %v1649 = vmul.f32 %v736, %v1637
          %1654 = vrot.lane.b32.xlu0 %v1646, 127
          %v1655 = vpop.permute.xlu0 %1654
          %1656 = vrot.lane.b32.xlu0 %v1647, 127
          %v1657 = vpop.permute.xlu0 %1656
          %1658 = vrot.lane.b32.xlu0 %v1648, 127
          %v1659 = vpop.permute.xlu0 %1658
          %1660 = vrot.lane.b32.xlu0 %v1649, 127
          %v1661 = vpop.permute.xlu0 %1660
          %v1666 = vadd.f32 %v1642, %v1655
          %v1667 = vadd.f32 %v1643, %v1657
          %v1668 = vadd.f32 %v1644, %v1659
          %v1669 = vadd.f32 %v1645, %v1661
          %v1670 = vmul.f32 %v764, %v1634
          %v1671 = vmul.f32 %v768, %v1635
          %v1672 = vmul.f32 %v772, %v1636
          %v1673 = vmul.f32 %v776, %v1637
          %1678 = vrot.lane.b32.xlu0 %v1670, 126
          %v1679 = vpop.permute.xlu0 %1678
          %1680 = vrot.lane.b32.xlu0 %v1671, 126
          %v1681 = vpop.permute.xlu0 %1680
          %1682 = vrot.lane.b32.xlu0 %v1672, 126
          %v1683 = vpop.permute.xlu0 %1682
          %1684 = vrot.lane.b32.xlu0 %v1673, 126
          %v1685 = vpop.permute.xlu0 %1684
          %v1690 = vadd.f32 %v1666, %v1679
          %v1691 = vadd.f32 %v1667, %v1681
          %v1692 = vadd.f32 %v1668, %v1683
          %v1693 = vadd.f32 %v1669, %v1685
          %v1694 = vmul.f32 %v1690, %v805
          %v1695 = vmul.f32 %v1691, %v810
          %v1696 = vmul.f32 %v1692, %v815
          %v1697 = vmul.f32 %v1693, %v820
          %v1698 = vadd.f32 %v1694, %v829
          %v1699 = vadd.f32 %v1695, %v834
          %v1700 = vadd.f32 %v1696, %v839
          %v1701 = vadd.f32 %v1697, %v844
          %1702 = vrot.lane.b32.xlu0 %v652, 3
          %v1703 = vpop.permute.xlu0 %1702
          %1704 = vrot.lane.b32.xlu0 %v653, 3
          %v1705 = vpop.permute.xlu0 %1704
          %1706 = vrot.lane.b32.xlu0 %v654, 3
          %v1707 = vpop.permute.xlu0 %1706
          %1708 = vrot.lane.b32.xlu0 %v655, 3
          %v1709 = vpop.permute.xlu0 %1708
          %v1714 = vsel %vm866, 0.0, %v1703
          %v1715 = vsel %vm866, 0.0, %v1705
          %v1716 = vsel %vm866, 0.0, %v1707
          %v1717 = vsel %vm866, 0.0, %v1709
          %v1718 = vsel %vm871, %v1714, 0.0
          %v1719 = vsel %vm871, %v1715, 0.0
          %v1720 = vsel %vm871, %v1716, 0.0
          %v1721 = vsel %vm871, %v1717, 0.0
          %v1722 = vmul.f32 %v879, %v1718
          %v1723 = vmul.f32 %v884, %v1719
          %v1724 = vmul.f32 %v889, %v1720
          %v1725 = vmul.f32 %v894, %v1721
          %v1726 = vadd.f32 %v1722, 0.0
          %v1727 = vadd.f32 %v1723, 0.0
          %v1728 = vadd.f32 %v1724, 0.0
          %v1729 = vadd.f32 %v1725, 0.0
          %v1730 = vmul.f32 %v906, %v1718
          %v1731 = vmul.f32 %v910, %v1719
          %v1732 = vmul.f32 %v914, %v1720
          %v1733 = vmul.f32 %v918, %v1721
          %1738 = vrot.lane.b32.xlu0 %v1730, 127
          %v1739 = vpop.permute.xlu0 %1738
          %1740 = vrot.lane.b32.xlu0 %v1731, 127
          %v1741 = vpop.permute.xlu0 %1740
          %1742 = vrot.lane.b32.xlu0 %v1732, 127
          %v1743 = vpop.permute.xlu0 %1742
          %1744 = vrot.lane.b32.xlu0 %v1733, 127
          %v1745 = vpop.permute.xlu0 %1744
          %v1750 = vadd.f32 %v1726, %v1739
          %v1751 = vadd.f32 %v1727, %v1741
          %v1752 = vadd.f32 %v1728, %v1743
          %v1753 = vadd.f32 %v1729, %v1745
          %v1754 = vmul.f32 %v946, %v1718
          %v1755 = vmul.f32 %v950, %v1719
          %v1756 = vmul.f32 %v954, %v1720
          %v1757 = vmul.f32 %v958, %v1721
          %1762 = vrot.lane.b32.xlu0 %v1754, 126
          %v1763 = vpop.permute.xlu0 %1762
          %1764 = vrot.lane.b32.xlu0 %v1755, 126
          %v1765 = vpop.permute.xlu0 %1764
          %1766 = vrot.lane.b32.xlu0 %v1756, 126
          %v1767 = vpop.permute.xlu0 %1766
          %1768 = vrot.lane.b32.xlu0 %v1757, 126
          %v1769 = vpop.permute.xlu0 %1768
          %v1774 = vadd.f32 %v1750, %v1763
          %v1775 = vadd.f32 %v1751, %v1765
          %v1776 = vadd.f32 %v1752, %v1767
          %v1777 = vadd.f32 %v1753, %v1769
          %v1778 = vmul.f32 %v986, %v1718
          %v1779 = vmul.f32 %v990, %v1719
          %v1780 = vmul.f32 %v994, %v1720
          %v1781 = vmul.f32 %v998, %v1721
          %1786 = vrot.lane.b32.xlu0 %v1778, 125
          %v1787 = vpop.permute.xlu0 %1786
          %1788 = vrot.lane.b32.xlu0 %v1779, 125
          %v1789 = vpop.permute.xlu0 %1788
          %1790 = vrot.lane.b32.xlu0 %v1780, 125
          %v1791 = vpop.permute.xlu0 %1790
          %1792 = vrot.lane.b32.xlu0 %v1781, 125
          %v1793 = vpop.permute.xlu0 %1792
          %v1798 = vadd.f32 %v1774, %v1787
          %v1799 = vadd.f32 %v1775, %v1789
          %v1800 = vadd.f32 %v1776, %v1791
          %v1801 = vadd.f32 %v1777, %v1793
          %v1802 = vmul.f32 %v1026, %v1718
          %v1803 = vmul.f32 %v1030, %v1719
          %v1804 = vmul.f32 %v1034, %v1720
          %v1805 = vmul.f32 %v1038, %v1721
          %1810 = vrot.lane.b32.xlu0 %v1802, 124
          %v1811 = vpop.permute.xlu0 %1810
          %1812 = vrot.lane.b32.xlu0 %v1803, 124
          %v1813 = vpop.permute.xlu0 %1812
          %1814 = vrot.lane.b32.xlu0 %v1804, 124
          %v1815 = vpop.permute.xlu0 %1814
          %1816 = vrot.lane.b32.xlu0 %v1805, 124
          %v1817 = vpop.permute.xlu0 %1816
          %v1822 = vadd.f32 %v1798, %v1811
          %v1823 = vadd.f32 %v1799, %v1813
          %v1824 = vadd.f32 %v1800, %v1815
          %v1825 = vadd.f32 %v1801, %v1817
          %v1826 = vmul.f32 %v1066, %v1718
          %v1827 = vmul.f32 %v1070, %v1719
          %v1828 = vmul.f32 %v1074, %v1720
          %v1829 = vmul.f32 %v1078, %v1721
          %1834 = vrot.lane.b32.xlu0 %v1826, 123
          %v1835 = vpop.permute.xlu0 %1834
          %1836 = vrot.lane.b32.xlu0 %v1827, 123
          %v1837 = vpop.permute.xlu0 %1836
          %1838 = vrot.lane.b32.xlu0 %v1828, 123
          %v1839 = vpop.permute.xlu0 %1838
          %1840 = vrot.lane.b32.xlu0 %v1829, 123
          %v1841 = vpop.permute.xlu0 %1840
          %v1846 = vadd.f32 %v1822, %v1835
          %v1847 = vadd.f32 %v1823, %v1837
          %v1848 = vadd.f32 %v1824, %v1839
          %v1849 = vadd.f32 %v1825, %v1841
          %v1850 = vmul.f32 %v1106, %v1718
          %v1851 = vmul.f32 %v1110, %v1719
          %v1852 = vmul.f32 %v1114, %v1720
          %v1853 = vmul.f32 %v1118, %v1721
          %1858 = vrot.lane.b32.xlu0 %v1850, 122
          %v1859 = vpop.permute.xlu0 %1858
          %1860 = vrot.lane.b32.xlu0 %v1851, 122
          %v1861 = vpop.permute.xlu0 %1860
          %1862 = vrot.lane.b32.xlu0 %v1852, 122
          %v1863 = vpop.permute.xlu0 %1862
          %1864 = vrot.lane.b32.xlu0 %v1853, 122
          %v1865 = vpop.permute.xlu0 %1864
          %v1870 = vadd.f32 %v1846, %v1859
          %v1871 = vadd.f32 %v1847, %v1861
          %v1872 = vadd.f32 %v1848, %v1863
          %v1873 = vadd.f32 %v1849, %v1865
          %v1874 = vmul.f32 %v1870, %v805
          %v1875 = vmul.f32 %v1871, %v810
          %v1876 = vmul.f32 %v1872, %v815
          %v1877 = vmul.f32 %v1873, %v820
          %v1878 = vadd.f32 %v1874, %v829
          %v1879 = vadd.f32 %v1875, %v834
          %v1880 = vadd.f32 %v1876, %v839
          %v1881 = vadd.f32 %v1877, %v844
          %1882 = vrot.lane.b32.xlu0 %v652, 5
          %v1883 = vpop.permute.xlu0 %1882
          %1884 = vrot.lane.b32.xlu0 %v653, 5
          %v1885 = vpop.permute.xlu0 %1884
          %1886 = vrot.lane.b32.xlu0 %v654, 5
          %v1887 = vpop.permute.xlu0 %1886
          %1888 = vrot.lane.b32.xlu0 %v655, 5
          %v1889 = vpop.permute.xlu0 %1888
          %v1894 = vsel %vm1168, 0.0, %v1883
          %v1895 = vsel %vm1168, 0.0, %v1885
          %v1896 = vsel %vm1168, 0.0, %v1887
          %v1897 = vsel %vm1168, 0.0, %v1889
          %v1898 = vsel %vm1173, %v1894, 0.0
          %v1899 = vsel %vm1173, %v1895, 0.0
          %v1900 = vsel %vm1173, %v1896, 0.0
          %v1901 = vsel %vm1173, %v1897, 0.0
          %v1902 = vmul.f32 %v1181, %v1898
          %v1903 = vmul.f32 %v1186, %v1899
          %v1904 = vmul.f32 %v1191, %v1900
          %v1905 = vmul.f32 %v1196, %v1901
          %v1906 = vadd.f32 %v1902, 0.0
          %v1907 = vadd.f32 %v1903, 0.0
          %v1908 = vadd.f32 %v1904, 0.0
          %v1909 = vadd.f32 %v1905, 0.0
          %v1910 = vmul.f32 %v1208, %v1898
          %v1911 = vmul.f32 %v1212, %v1899
          %v1912 = vmul.f32 %v1216, %v1900
          %v1913 = vmul.f32 %v1220, %v1901
          %1918 = vrot.lane.b32.xlu0 %v1910, 127
          %v1919 = vpop.permute.xlu0 %1918
          %1920 = vrot.lane.b32.xlu0 %v1911, 127
          %v1921 = vpop.permute.xlu0 %1920
          %1922 = vrot.lane.b32.xlu0 %v1912, 127
          %v1923 = vpop.permute.xlu0 %1922
          %1924 = vrot.lane.b32.xlu0 %v1913, 127
          %v1925 = vpop.permute.xlu0 %1924
          %v1930 = vadd.f32 %v1906, %v1919
          %v1931 = vadd.f32 %v1907, %v1921
          %v1932 = vadd.f32 %v1908, %v1923
          %v1933 = vadd.f32 %v1909, %v1925
          %v1934 = vmul.f32 %v1248, %v1898
          %v1935 = vmul.f32 %v1252, %v1899
          %v1936 = vmul.f32 %v1256, %v1900
          %v1937 = vmul.f32 %v1260, %v1901
          %1942 = vrot.lane.b32.xlu0 %v1934, 126
          %v1943 = vpop.permute.xlu0 %1942
          %1944 = vrot.lane.b32.xlu0 %v1935, 126
          %v1945 = vpop.permute.xlu0 %1944
          %1946 = vrot.lane.b32.xlu0 %v1936, 126
          %v1947 = vpop.permute.xlu0 %1946
          %1948 = vrot.lane.b32.xlu0 %v1937, 126
          %v1949 = vpop.permute.xlu0 %1948
          %v1954 = vadd.f32 %v1930, %v1943
          %v1955 = vadd.f32 %v1931, %v1945
          %v1956 = vadd.f32 %v1932, %v1947
          %v1957 = vadd.f32 %v1933, %v1949
          %v1958 = vmul.f32 %v1288, %v1898
          %v1959 = vmul.f32 %v1292, %v1899
          %v1960 = vmul.f32 %v1296, %v1900
          %v1961 = vmul.f32 %v1300, %v1901
          %1966 = vrot.lane.b32.xlu0 %v1958, 125
          %v1967 = vpop.permute.xlu0 %1966
          %1968 = vrot.lane.b32.xlu0 %v1959, 125
          %v1969 = vpop.permute.xlu0 %1968
          %1970 = vrot.lane.b32.xlu0 %v1960, 125
          %v1971 = vpop.permute.xlu0 %1970
          %1972 = vrot.lane.b32.xlu0 %v1961, 125
          %v1973 = vpop.permute.xlu0 %1972
          %v1978 = vadd.f32 %v1954, %v1967
          %v1979 = vadd.f32 %v1955, %v1969
          %v1980 = vadd.f32 %v1956, %v1971
          %v1981 = vadd.f32 %v1957, %v1973
          %v1982 = vmul.f32 %v1328, %v1898
          %v1983 = vmul.f32 %v1332, %v1899
          %v1984 = vmul.f32 %v1336, %v1900
          %v1985 = vmul.f32 %v1340, %v1901
          %1990 = vrot.lane.b32.xlu0 %v1982, 124
          %v1991 = vpop.permute.xlu0 %1990
          %1992 = vrot.lane.b32.xlu0 %v1983, 124
          %v1993 = vpop.permute.xlu0 %1992
          %1994 = vrot.lane.b32.xlu0 %v1984, 124
          %v1995 = vpop.permute.xlu0 %1994
          %1996 = vrot.lane.b32.xlu0 %v1985, 124
          %v1997 = vpop.permute.xlu0 %1996
          %v2002 = vadd.f32 %v1978, %v1991
          %v2003 = vadd.f32 %v1979, %v1993
          %v2004 = vadd.f32 %v1980, %v1995
          %v2005 = vadd.f32 %v1981, %v1997
          %v2006 = vmul.f32 %v1368, %v1898
          %v2007 = vmul.f32 %v1372, %v1899
          %v2008 = vmul.f32 %v1376, %v1900
          %v2009 = vmul.f32 %v1380, %v1901
          %2014 = vrot.lane.b32.xlu0 %v2006, 123
          %v2015 = vpop.permute.xlu0 %2014
          %2016 = vrot.lane.b32.xlu0 %v2007, 123
          %v2017 = vpop.permute.xlu0 %2016
          %2018 = vrot.lane.b32.xlu0 %v2008, 123
          %v2019 = vpop.permute.xlu0 %2018
          %2020 = vrot.lane.b32.xlu0 %v2009, 123
          %v2021 = vpop.permute.xlu0 %2020
          %v2026 = vadd.f32 %v2002, %v2015
          %v2027 = vadd.f32 %v2003, %v2017
          %v2028 = vadd.f32 %v2004, %v2019
          %v2029 = vadd.f32 %v2005, %v2021
          %v2030 = vmul.f32 %v1408, %v1898
          %v2031 = vmul.f32 %v1412, %v1899
          %v2032 = vmul.f32 %v1416, %v1900
          %v2033 = vmul.f32 %v1420, %v1901
          %2038 = vrot.lane.b32.xlu0 %v2030, 122
          %v2039 = vpop.permute.xlu0 %2038
          %2040 = vrot.lane.b32.xlu0 %v2031, 122
          %v2041 = vpop.permute.xlu0 %2040
          %2042 = vrot.lane.b32.xlu0 %v2032, 122
          %v2043 = vpop.permute.xlu0 %2042
          %2044 = vrot.lane.b32.xlu0 %v2033, 122
          %v2045 = vpop.permute.xlu0 %2044
          %v2050 = vadd.f32 %v2026, %v2039
          %v2051 = vadd.f32 %v2027, %v2041
          %v2052 = vadd.f32 %v2028, %v2043
          %v2053 = vadd.f32 %v2029, %v2045
          %v2054 = vmul.f32 %v1448, %v1898
          %v2055 = vmul.f32 %v1452, %v1899
          %v2056 = vmul.f32 %v1456, %v1900
          %v2057 = vmul.f32 %v1460, %v1901
          %2062 = vrot.lane.b32.xlu0 %v2054, 121
          %v2063 = vpop.permute.xlu0 %2062
          %2064 = vrot.lane.b32.xlu0 %v2055, 121
          %v2065 = vpop.permute.xlu0 %2064
          %2066 = vrot.lane.b32.xlu0 %v2056, 121
          %v2067 = vpop.permute.xlu0 %2066
          %2068 = vrot.lane.b32.xlu0 %v2057, 121
          %v2069 = vpop.permute.xlu0 %2068
          %v2074 = vadd.f32 %v2050, %v2063
          %v2075 = vadd.f32 %v2051, %v2065
          %v2076 = vadd.f32 %v2052, %v2067
          %v2077 = vadd.f32 %v2053, %v2069
          %v2078 = vmul.f32 %v1488, %v1898
          %v2079 = vmul.f32 %v1492, %v1899
          %v2080 = vmul.f32 %v1496, %v1900
          %v2081 = vmul.f32 %v1500, %v1901
          %2086 = vrot.lane.b32.xlu0 %v2078, 120
          %v2087 = vpop.permute.xlu0 %2086
          %2088 = vrot.lane.b32.xlu0 %v2079, 120
          %v2089 = vpop.permute.xlu0 %2088
          %2090 = vrot.lane.b32.xlu0 %v2080, 120
          %v2091 = vpop.permute.xlu0 %2090
          %2092 = vrot.lane.b32.xlu0 %v2081, 120
          %v2093 = vpop.permute.xlu0 %2092
          %v2098 = vadd.f32 %v2074, %v2087
          %v2099 = vadd.f32 %v2075, %v2089
          %v2100 = vadd.f32 %v2076, %v2091
          %v2101 = vadd.f32 %v2077, %v2093
          %v2102 = vmul.f32 %v1528, %v1898
          %v2103 = vmul.f32 %v1532, %v1899
          %v2104 = vmul.f32 %v1536, %v1900
          %v2105 = vmul.f32 %v1540, %v1901
          %2110 = vrot.lane.b32.xlu0 %v2102, 119
          %v2111 = vpop.permute.xlu0 %2110
          %2112 = vrot.lane.b32.xlu0 %v2103, 119
          %v2113 = vpop.permute.xlu0 %2112
          %2114 = vrot.lane.b32.xlu0 %v2104, 119
          %v2115 = vpop.permute.xlu0 %2114
          %2116 = vrot.lane.b32.xlu0 %v2105, 119
          %v2117 = vpop.permute.xlu0 %2116
          %v2122 = vadd.f32 %v2098, %v2111
          %v2123 = vadd.f32 %v2099, %v2113
          %v2124 = vadd.f32 %v2100, %v2115
          %v2125 = vadd.f32 %v2101, %v2117
          %v2126 = vmul.f32 %v1568, %v1898
          %v2127 = vmul.f32 %v1572, %v1899
          %v2128 = vmul.f32 %v1576, %v1900
          %v2129 = vmul.f32 %v1580, %v1901
          %2134 = vrot.lane.b32.xlu0 %v2126, 118
          %v2135 = vpop.permute.xlu0 %2134
          %2136 = vrot.lane.b32.xlu0 %v2127, 118
          %v2137 = vpop.permute.xlu0 %2136
          %2138 = vrot.lane.b32.xlu0 %v2128, 118
          %v2139 = vpop.permute.xlu0 %2138
          %2140 = vrot.lane.b32.xlu0 %v2129, 118
          %v2141 = vpop.permute.xlu0 %2140
          %v2146 = vadd.f32 %v2122, %v2135
          %v2147 = vadd.f32 %v2123, %v2137
          %v2148 = vadd.f32 %v2124, %v2139
          %v2149 = vadd.f32 %v2125, %v2141
          %v2150 = vmul.f32 %v2146, %v805
          %v2151 = vmul.f32 %v2147, %v810
          %v2152 = vmul.f32 %v2148, %v815
          %v2153 = vmul.f32 %v2149, %v820
          %v2154 = vadd.f32 %v2150, %v829
          %v2155 = vadd.f32 %v2151, %v834
          %v2156 = vadd.f32 %v2152, %v839
          %v2157 = vadd.f32 %v2153, %v844
          %v2158 = vld [vmem:[%s8] sm:$0xff]
          %v2159 = vld [vmem:[%s8 + $0x8] sm:$0xff]
          %v2160 = vld [vmem:[%s8 + $0x10] sm:$0xff]
          %v2161 = vld [vmem:[%s8 + $0x18] sm:$0xff]
          %2174 = vrot.lane.b32.xlu0 %v1698, 16
          %v2175 = vpop.permute.xlu0 %2174
          %2176 = vrot.lane.b32.xlu0 %v1699, 16
          %v2177 = vpop.permute.xlu0 %2176
          %2178 = vrot.lane.b32.xlu0 %v1700, 16
          %v2179 = vpop.permute.xlu0 %2178
          %2180 = vrot.lane.b32.xlu0 %v1701, 16
          %v2181 = vpop.permute.xlu0 %2180
          %2182 = vrot.lane.b32.xlu0 %v1878, 16
          %v2183 = vpop.permute.xlu0 %2182
          %2184 = vrot.lane.b32.xlu0 %v1879, 16
          %v2185 = vpop.permute.xlu0 %2184
          %2186 = vrot.lane.b32.xlu0 %v1880, 16
          %v2187 = vpop.permute.xlu0 %2186
          %2188 = vrot.lane.b32.xlu0 %v1881, 16
          %v2189 = vpop.permute.xlu0 %2188
          %2190 = vrot.lane.b32.xlu0 %v2154, 16
          %v2191 = vpop.permute.xlu0 %2190
          %2192 = vrot.lane.b32.xlu0 %v2155, 16
          %v2193 = vpop.permute.xlu0 %2192
          %2194 = vrot.lane.b32.xlu0 %v2156, 16
          %v2195 = vpop.permute.xlu0 %2194
          %2196 = vrot.lane.b32.xlu0 %v2157, 16
          %v2197 = vpop.permute.xlu0 %2196
          %vm2210 = vcmask 130048
          %v2211 = vsel %vm2210, %v846, %v2175
          %v2212 = vsel %vm2210, %v847, %v2177
          %v2213 = vsel %vm2210, %v848, %v2179
          %v2214 = vsel %vm2210, %v849, %v2181
          %v2215 = vsel %vm2210, %v1148, %v2183
          %v2216 = vsel %vm2210, %v1149, %v2185
          %v2217 = vsel %vm2210, %v1150, %v2187
          %v2218 = vsel %vm2210, %v1151, %v2189
          %v2219 = vsel %vm2210, %v1610, %v2191
          %v2220 = vsel %vm2210, %v1611, %v2193
          %v2221 = vsel %vm2210, %v1612, %v2195
          %v2222 = vsel %vm2210, %v1613, %v2197
          %vm2223 = vcmask 785408
          %v2225 = vsel %vm2223, %v2158, 0
          %v2228 = vsel %vm2223, %v2159, 0
          %v2231 = vsel %vm2223, %v2160, 0
          %v2234 = vsel %vm2223, %v2161, 0
          %2236 = vmatprep.subr.mxu0 0.0
          %2237 = vmatpush1.msra.mxu0 %v2211
          %2238 = vmatprep.subr.mxu0 0.0
          %2239 = vmatpush1.msra.mxu0 %v2212
          %2240 = vmatprep.subr.mxu0 0.0
          %2241 = vmatpush1.msra.mxu0 %v2213
          %2242 = vmatprep.subr.mxu0 0.0
          %2243 = vmatpush1.msra.mxu0 %v2214
          %2244 = vmatprep.subr.mxu0 0.0
          %2245 = vmatpush1.msra.mxu0 %v2215
          %2246 = vmatprep.subr.mxu0 0.0
          %2247 = vmatpush1.msra.mxu0 %v2216
          %2248 = vmatprep.subr.mxu0 0.0
          %2249 = vmatpush1.msra.mxu0 %v2217
          %2250 = vmatprep.subr.mxu0 0.0
          %2251 = vmatpush1.msra.mxu0 %v2218
          %2252 = vmatprep.subr.mxu0 0.0
          %2253 = vmatpush1.msra.mxu0 %v2219
          %2254 = vmatprep.subr.mxu0 0.0
          %2255 = vmatpush1.msra.mxu0 %v2220
          %2256 = vmatprep.subr.mxu0 0.0
          %2257 = vmatpush1.msra.mxu0 %v2221
          %2258 = vmatprep.subr.mxu0 0.0
          %2259 = vmatpush1.msra.mxu0 %v2222
          %2260 = vmatprep.subr.mxu0 0.0
          %2261 = vmatpush1.msra.mxu0 0.0
          %2262 = vmatprep.subr.mxu0 0.0
          %2263 = vmatpush1.msra.mxu0 0.0
          %2264 = vmatprep.subr.mxu0 0.0
          %2265 = vmatpush1.msra.mxu0 0.0
          %2266 = vmatprep.subr.mxu0 0.0
          %2267 = vmatpush1.msra.mxu0 0.0
          %2268 = vmatprep.subr.mxu0 0.0
          %2269 = vmatpush1.msra.mxu0 0.0
          %2270 = vmatprep.subr.mxu0 0.0
          %2271 = vmatpush1.msra.mxu0 0.0
          %2272 = vmatprep.subr.mxu0 0.0
          %2273 = vmatpush1.msra.mxu0 0.0
          %2274 = vmatprep.subr.mxu0 0.0
          %2275 = vmatpush1.msra.mxu0 0.0
          %2276 = vmatprep.subr.mxu0 0.0
          %2277 = vmatpush1.msra.mxu0 0.0
          %2278 = vmatprep.subr.mxu0 0.0
          %2279 = vmatpush1.msra.mxu0 0.0
          %2280 = vmatprep.subr.mxu0 0.0
          %2281 = vmatpush1.msra.mxu0 0.0
          %2282 = vmatprep.subr.mxu0 0.0
          %2283 = vmatpush1.msra.mxu0 0.0
          %2284 = vmatprep.subr.mxu0 0.0
          %2285 = vmatpush1.msra.mxu0 0.0
          %2286 = vmatprep.subr.mxu0 0.0
          %2287 = vmatpush1.msra.mxu0 0.0
          %2288 = vmatprep.subr.mxu0 0.0
          %2289 = vmatpush1.msra.mxu0 0.0
          %2290 = vmatprep.subr.mxu0 0.0
          %2291 = vmatpush1.msra.mxu0 0.0
          %2292 = vmatprep.subr.mxu0 0.0
          %2293 = vmatpush1.msra.mxu0 0.0
          %2294 = vmatprep.subr.mxu0 0.0
          %2295 = vmatpush1.msra.mxu0 0.0
          %2296 = vmatprep.subr.mxu0 0.0
          %2297 = vmatpush1.msra.mxu0 0.0
          %2298 = vmatprep.subr.mxu0 0.0
          %2299 = vmatpush1.msra.mxu0 0.0
          %2300 = vmatprep.mubr.f32.mxu0 0.0
          %2301 = vmatmul.mubr.f32.gmra.mrb[0].mxu0 %v2225
          %v2302 = vpop.f32.mrb[0].mxu0
          %v2303 = vadd.f32 0.0, %v2302
          %v2304 = vpop.f32.mrb[0].mxu0
          %2305 = vmatprep.mubr.f32.mxu0 0.0
          %2306 = vmatmul.mubr.f32.gmra.mrb[0].mxu0 %v2228
          %v2307 = vpop.f32.mrb[0].mxu0
          %v2308 = vadd.f32 0.0, %v2307
          %v2309 = vpop.f32.mrb[0].mxu0
          %2310 = vmatprep.mubr.f32.mxu0 0.0
          %2311 = vmatmul.mubr.f32.gmra.mrb[0].mxu0 %v2231
          %v2312 = vpop.f32.mrb[0].mxu0
          %v2313 = vadd.f32 0.0, %v2312
          %v2314 = vpop.f32.mrb[0].mxu0
          %2315 = vmatprep.mubr.f32.mxu0 0.0
          %2316 = vmatmul.mubr.f32.gmra.mrb[0].mxu0 %v2234
          %v2317 = vpop.f32.mrb[0].mxu0
          %v2318 = vadd.f32 0.0, %v2317
          %v2319 = vpop.f32.mrb[0].mxu0
          %2320 = vdwg.mxu0
          %v2321 = vld [vmem:[#allocation4] sm:$0x1]
          %v2322 = vld [vmem:[#allocation5] sm:$0x1]
          %v2323 = vsel %vm2210, %v2303, 0.0
          %2324 = vadd.xlane.f32.xlu0 %v2323
          %v2325 = vpop.xlane.xlu0 %2324
          %v2326 = vsel %vm2210, %v2308, 0.0
          %2327 = vadd.xlane.f32.xlu0 %v2326
          %v2328 = vpop.xlane.xlu0 %2327
          %v2329 = vsel %vm2210, %v2313, 0.0
          %2330 = vadd.xlane.f32.xlu0 %v2329
          %v2331 = vpop.xlane.xlu0 %2330
          %v2332 = vsel %vm2210, %v2318, 0.0
          %2333 = vadd.xlane.f32.xlu0 %v2332
          %v2334 = vpop.xlane.xlu0 %2333
          %v2335 = vrcp.pop 16.0
          %v2336 = vmul.f32 %v2325, %v2335
          %v2337 = vmul.f32 %v2328, %v2335
          %v2338 = vmul.f32 %v2331, %v2335
          %v2339 = vmul.f32 %v2334, %v2335
          %v2341 = vlaneseq
          %v2342 = vshrl.u32 %v2341, 7
          %v2343 = vsub.s32 0, %v2342
          %v2344 = vrot.slane %v2321, %v2343
          %v2346 = vmul.f32 %v2344, %v2336
          %v2347 = vmul.f32 %v2344, %v2337
          %v2348 = vmul.f32 %v2344, %v2338
          %v2349 = vmul.f32 %v2344, %v2339
          %2354 = vrot.lane.b32.xlu0 %v2303, 112
          %v2355 = vpop.permute.xlu0 %2354
          %2356 = vrot.lane.b32.xlu0 %v2308, 112
          %v2357 = vpop.permute.xlu0 %2356
          %2358 = vrot.lane.b32.xlu0 %v2313, 112
          %v2359 = vpop.permute.xlu0 %2358
          %2360 = vrot.lane.b32.xlu0 %v2318, 112
          %v2361 = vpop.permute.xlu0 %2360
          %v2366 = vsel %vm2210, %v2355, 0.0
          %2367 = vadd.xlane.f32.xlu0 %v2366
          %v2368 = vpop.xlane.xlu0 %2367
          %v2369 = vsel %vm2210, %v2357, 0.0
          %2370 = vadd.xlane.f32.xlu0 %v2369
          %v2371 = vpop.xlane.xlu0 %2370
          %v2372 = vsel %vm2210, %v2359, 0.0
          %2373 = vadd.xlane.f32.xlu0 %v2372
          %v2374 = vpop.xlane.xlu0 %2373
          %v2375 = vsel %vm2210, %v2361, 0.0
          %2376 = vadd.xlane.f32.xlu0 %v2375
          %v2377 = vpop.xlane.xlu0 %2376
          %v2378 = vmul.f32 %v2368, %v2335
          %v2379 = vmul.f32 %v2371, %v2335
          %v2380 = vmul.f32 %v2374, %v2335
          %v2381 = vmul.f32 %v2377, %v2335
          %v2383 = vlaneseq
          %v2384 = vshrl.u32 %v2383, 7
          %v2385 = vsub.s32 0, %v2384
          %v2386 = vrot.slane %v2322, %v2385
          %v2388 = vmul.f32 %v2386, %v2378
          %v2389 = vmul.f32 %v2386, %v2379
          %v2390 = vmul.f32 %v2386, %v2380
          %v2391 = vmul.f32 %v2386, %v2381
          %v2392 = vadd.f32 %v2346, %v2388
          %v2393 = vadd.f32 %v2347, %v2389
          %v2394 = vadd.f32 %v2348, %v2390
          %v2395 = vadd.f32 %v2349, %v2391
          %v2396 = vld [vmem:[%s9] sm:$0x3]
          %vm2397 = vcmask 261120
          %v2399 = vsel %vm2397, %v2396, 0
          %2401 = vmatprep.subr.mxu0 0.0
          %2402 = vmatpush1.msra.mxu0 %v2392
          %2403 = vmatprep.subr.mxu0 0.0
          %2404 = vmatpush1.msra.mxu0 %v2393
          %2405 = vmatprep.subr.mxu0 0.0
          %2406 = vmatpush1.msra.mxu0 %v2394
          %2407 = vmatprep.subr.mxu0 0.0
          %2408 = vmatpush1.msra.mxu0 %v2395
          %2409 = vmatprep.subr.mxu0 0.0
          %2410 = vmatpush1.msra.mxu0 0.0
          %2411 = vmatprep.subr.mxu0 0.0
          %2412 = vmatpush1.msra.mxu0 0.0
          %2413 = vmatprep.subr.mxu0 0.0
          %2414 = vmatpush1.msra.mxu0 0.0
          %2415 = vmatprep.subr.mxu0 0.0
          %2416 = vmatpush1.msra.mxu0 0.0
          %2417 = vmatprep.subr.mxu0 0.0
          %2418 = vmatpush1.msra.mxu0 0.0
          %2419 = vmatprep.subr.mxu0 0.0
          %2420 = vmatpush1.msra.mxu0 0.0
          %2421 = vmatprep.subr.mxu0 0.0
          %2422 = vmatpush1.msra.mxu0 0.0
          %2423 = vmatprep.subr.mxu0 0.0
          %2424 = vmatpush1.msra.mxu0 0.0
          %2425 = vmatprep.subr.mxu0 0.0
          %2426 = vmatpush1.msra.mxu0 0.0
          %2427 = vmatprep.subr.mxu0 0.0
          %2428 = vmatpush1.msra.mxu0 0.0
          %2429 = vmatprep.subr.mxu0 0.0
          %2430 = vmatpush1.msra.mxu0 0.0
          %2431 = vmatprep.subr.mxu0 0.0
          %2432 = vmatpush1.msra.mxu0 0.0
          %2433 = vmatprep.subr.mxu0 0.0
          %2434 = vmatpush1.msra.mxu0 0.0
          %2435 = vmatprep.subr.mxu0 0.0
          %2436 = vmatpush1.msra.mxu0 0.0
          %2437 = vmatprep.subr.mxu0 0.0
          %2438 = vmatpush1.msra.mxu0 0.0
          %2439 = vmatprep.subr.mxu0 0.0
          %2440 = vmatpush1.msra.mxu0 0.0
          %2441 = vmatprep.subr.mxu0 0.0
          %2442 = vmatpush1.msra.mxu0 0.0
          %2443 = vmatprep.subr.mxu0 0.0
          %2444 = vmatpush1.msra.mxu0 0.0
          %2445 = vmatprep.subr.mxu0 0.0
          %2446 = vmatpush1.msra.mxu0 0.0
          %2447 = vmatprep.subr.mxu0 0.0
          %2448 = vmatpush1.msra.mxu0 0.0
          %2449 = vmatprep.subr.mxu0 0.0
          %2450 = vmatpush1.msra.mxu0 0.0
          %2451 = vmatprep.subr.mxu0 0.0
          %2452 = vmatpush1.msra.mxu0 0.0
          %2453 = vmatprep.subr.mxu0 0.0
          %2454 = vmatpush1.msra.mxu0 0.0
          %2455 = vmatprep.subr.mxu0 0.0
          %2456 = vmatpush1.msra.mxu0 0.0
          %2457 = vmatprep.subr.mxu0 0.0
          %2458 = vmatpush1.msra.mxu0 0.0
          %2459 = vmatprep.subr.mxu0 0.0
          %2460 = vmatpush1.msra.mxu0 0.0
          %2461 = vmatprep.subr.mxu0 0.0
          %2462 = vmatpush1.msra.mxu0 0.0
          %2463 = vmatprep.subr.mxu0 0.0
          %2464 = vmatpush1.msra.mxu0 0.0
          %2465 = vmatprep.mubr.f32.mxu0 0.0
          %2466 = vmatmul.mubr.f32.gmra.mrb[0].mxu0 %v2399
          %v2467 = vpop.f32.mrb[0].mxu0
          %v2468 = vadd.f32 0.0, %v2467
          %v2469 = vpop.f32.mrb[0].mxu0
          %2470 = vdwg.mxu0
          %v2471 = vxor.u32 %v2468, 2147483648
          %v2472 = vmul.f32 %v2471, 1.442695
          %v2473 = vpow.pop %v2472
          %v2474 = vadd.f32 %v2473, 1.0
          %v2475 = vrcp.pop %v2474
          %v2476 = vmul.f32 1.0, %v2475
          %v2477 = vmul.f32 %v2468, %v2476
          %v2478 = vld [vmem:[%s10] sm:$0xff]
          %v2479 = vld [vmem:[%s10 + $0x8] sm:$0xff]
          %v2480 = vld [vmem:[%s10 + $0x10] sm:$0xff]
          %v2481 = vld [vmem:[%s10 + $0x18] sm:$0xff]
          %vm2482 = vcmask 15360
          %v2484 = vsel %vm2482, %v2478, 0
          %v2487 = vsel %vm2482, %v2479, 0
          %v2490 = vsel %vm2482, %v2480, 0
          %v2493 = vsel %vm2482, %v2481, 0
          %vm2495 = vcmask 1041408
          %v2497 = vsel %vm2495, %v2477, 0
          %2499 = vmatprep.subr.mxu0 0.0
          %2500 = vmatpush1.msra.mxu0 %v2497
          %2501 = vmatprep.subr.mxu0 0.0
          %2502 = vmatpush1.msra.mxu0 0.0
          %2503 = vmatprep.subr.mxu0 0.0
          %2504 = vmatpush1.msra.mxu0 0.0
          %2505 = vmatprep.subr.mxu0 0.0
          %2506 = vmatpush1.msra.mxu0 0.0
          %2507 = vmatprep.subr.mxu0 0.0
          %2508 = vmatpush1.msra.mxu0 0.0
          %2509 = vmatprep.subr.mxu0 0.0
          %2510 = vmatpush1.msra.mxu0 0.0
          %2511 = vmatprep.subr.mxu0 0.0
          %2512 = vmatpush1.msra.mxu0 0.0
          %2513 = vmatprep.subr.mxu0 0.0
          %2514 = vmatpush1.msra.mxu0 0.0
          %2515 = vmatprep.subr.mxu0 0.0
          %2516 = vmatpush1.msra.mxu0 0.0
          %2517 = vmatprep.subr.mxu0 0.0
          %2518 = vmatpush1.msra.mxu0 0.0
          %2519 = vmatprep.subr.mxu0 0.0
          %2520 = vmatpush1.msra.mxu0 0.0
          %2521 = vmatprep.subr.mxu0 0.0
          %2522 = vmatpush1.msra.mxu0 0.0
          %2523 = vmatprep.subr.mxu0 0.0
          %2524 = vmatpush1.msra.mxu0 0.0
          %2525 = vmatprep.subr.mxu0 0.0
          %2526 = vmatpush1.msra.mxu0 0.0
          %2527 = vmatprep.subr.mxu0 0.0
          %2528 = vmatpush1.msra.mxu0 0.0
          %2529 = vmatprep.subr.mxu0 0.0
          %2530 = vmatpush1.msra.mxu0 0.0
          %2531 = vmatprep.subr.mxu0 0.0
          %2532 = vmatpush1.msra.mxu0 0.0
          %2533 = vmatprep.subr.mxu0 0.0
          %2534 = vmatpush1.msra.mxu0 0.0
          %2535 = vmatprep.subr.mxu0 0.0
          %2536 = vmatpush1.msra.mxu0 0.0
          %2537 = vmatprep.subr.mxu0 0.0
          %2538 = vmatpush1.msra.mxu0 0.0
          %2539 = vmatprep.subr.mxu0 0.0
          %2540 = vmatpush1.msra.mxu0 0.0
          %2541 = vmatprep.subr.mxu0 0.0
          %2542 = vmatpush1.msra.mxu0 0.0
          %2543 = vmatprep.subr.mxu0 0.0
          %2544 = vmatpush1.msra.mxu0 0.0
          %2545 = vmatprep.subr.mxu0 0.0
          %2546 = vmatpush1.msra.mxu0 0.0
          %2547 = vmatprep.subr.mxu0 0.0
          %2548 = vmatpush1.msra.mxu0 0.0
          %2549 = vmatprep.subr.mxu0 0.0
          %2550 = vmatpush1.msra.mxu0 0.0
          %2551 = vmatprep.subr.mxu0 0.0
          %2552 = vmatpush1.msra.mxu0 0.0
          %2553 = vmatprep.subr.mxu0 0.0
          %2554 = vmatpush1.msra.mxu0 0.0
          %2555 = vmatprep.subr.mxu0 0.0
          %2556 = vmatpush1.msra.mxu0 0.0
          %2557 = vmatprep.subr.mxu0 0.0
          %2558 = vmatpush1.msra.mxu0 0.0
          %2559 = vmatprep.subr.mxu0 0.0
          %2560 = vmatpush1.msra.mxu0 0.0
          %2561 = vmatprep.subr.mxu0 0.0
          %2562 = vmatpush1.msra.mxu0 0.0
          %2563 = vmatprep.mubr.f32.mxu0 0.0
          %2564 = vmatmul.mubr.f32.gmra.mrb[0].mxu0 %v2484
          %v2565 = vpop.f32.mrb[0].mxu0
          %v2566 = vadd.f32 0.0, %v2565
          %v2567 = vpop.f32.mrb[0].mxu0
          %2568 = vmatprep.mubr.f32.mxu0 0.0
          %2569 = vmatmul.mubr.f32.gmra.mrb[0].mxu0 %v2487
          %v2570 = vpop.f32.mrb[0].mxu0
          %v2571 = vadd.f32 0.0, %v2570
          %v2572 = vpop.f32.mrb[0].mxu0
          %2573 = vmatprep.mubr.f32.mxu0 0.0
          %2574 = vmatmul.mubr.f32.gmra.mrb[0].mxu0 %v2490
          %v2575 = vpop.f32.mrb[0].mxu0
          %v2576 = vadd.f32 0.0, %v2575
          %v2577 = vpop.f32.mrb[0].mxu0
          %2578 = vmatprep.mubr.f32.mxu0 0.0
          %2579 = vmatmul.mubr.f32.gmra.mrb[0].mxu0 %v2493
          %v2580 = vpop.f32.mrb[0].mxu0
          %v2581 = vadd.f32 0.0, %v2580
          %v2582 = vpop.f32.mrb[0].mxu0
          %2583 = vdwg.mxu0
          %v2584 = vxor.u32 %v2566, 2147483648
          %v2585 = vxor.u32 %v2571, 2147483648
          %v2586 = vxor.u32 %v2576, 2147483648
          %v2587 = vxor.u32 %v2581, 2147483648
          %v2588 = vmul.f32 %v2584, 1.442695
          %v2589 = vpow.pop %v2588
          %v2590 = vmul.f32 %v2585, 1.442695
          %v2591 = vpow.pop %v2590
          %v2592 = vmul.f32 %v2586, 1.442695
          %v2593 = vpow.pop %v2592
          %v2594 = vmul.f32 %v2587, 1.442695
          %v2595 = vpow.pop %v2594
          %v2596 = vadd.f32 %v2589, 1.0
          %v2597 = vadd.f32 %v2591, 1.0
          %v2598 = vadd.f32 %v2593, 1.0
          %v2599 = vadd.f32 %v2595, 1.0
          %v2600 = vrcp.pop %v2596
          %v2601 = vmul.f32 1.0, %v2600
          %v2602 = vrcp.pop %v2597
          %v2603 = vmul.f32 1.0, %v2602
          %v2604 = vrcp.pop %v2598
          %v2605 = vmul.f32 1.0, %v2604
          %v2606 = vrcp.pop %v2599
          %v2607 = vmul.f32 1.0, %v2606
          %2608 = vset.pattern.permute.xlu0 0
          %2609 = vperm.xlu0 %2608, %v2344
          %v2610 = vpop.permute.xlu0 %2609
          %v2612 = vmul.f32 %v2610, %v2303
          %v2613 = vmul.f32 %v2610, %v2308
          %v2614 = vmul.f32 %v2610, %v2313
          %v2615 = vmul.f32 %v2610, %v2318
          %2617 = vset.pattern.permute.xlu0 0
          %2618 = vperm.xlu0 %2617, %v2601
          %v2619 = vpop.permute.xlu0 %2618
          %2622 = vset.pattern.permute.xlu0 0
          %2623 = vperm.xlu0 %2622, %v2603
          %v2624 = vpop.permute.xlu0 %2623
          %2627 = vset.pattern.permute.xlu0 0
          %2628 = vperm.xlu0 %2627, %v2605
          %v2629 = vpop.permute.xlu0 %2628
          %2632 = vset.pattern.permute.xlu0 0
          %2633 = vperm.xlu0 %2632, %v2607
          %v2634 = vpop.permute.xlu0 %2633
          %v2636 = vmul.f32 %v2612, %v2619
          %v2637 = vmul.f32 %v2613, %v2624
          %v2638 = vmul.f32 %v2614, %v2629
          %v2639 = vmul.f32 %v2615, %v2634
          %2640 = vst.msk [vmem:[#allocation2] sm:$0xff] %vm2210, %v2636
          %2641 = vst.msk [vmem:[#allocation2 + $0x8] sm:$0xff] %vm2210, %v2637
          %2642 = vst.msk [vmem:[#allocation2 + $0x10] sm:$0xff] %vm2210, %v2638
          %2643 = vst.msk [vmem:[#allocation2 + $0x18] sm:$0xff] %vm2210, %v2639
          %2644 = vset.pattern.permute.xlu0 0
          %2645 = vperm.xlu0 %2644, %v2386
          %v2646 = vpop.permute.xlu0 %2645
          %v2648 = vmul.f32 %v2646, %v2303
          %v2649 = vmul.f32 %v2646, %v2308
          %v2650 = vmul.f32 %v2646, %v2313
          %v2651 = vmul.f32 %v2646, %v2318
          %v2652 = vmul.f32 %v2648, %v2619
          %v2653 = vmul.f32 %v2649, %v2624
          %v2654 = vmul.f32 %v2650, %v2629
          %v2655 = vmul.f32 %v2651, %v2634
          %2660 = vrot.lane.b32.xlu0 %v2652, 112
          %v2661 = vpop.permute.xlu0 %2660
          %2662 = vrot.lane.b32.xlu0 %v2653, 112
          %v2663 = vpop.permute.xlu0 %2662
          %2664 = vrot.lane.b32.xlu0 %v2654, 112
          %v2665 = vpop.permute.xlu0 %2664
          %2666 = vrot.lane.b32.xlu0 %v2655, 112
          %v2667 = vpop.permute.xlu0 %2666
          %2672 = vst.msk [vmem:[#allocation3] sm:$0xff] %vm2210, %v2661
          %2673 = vst.msk [vmem:[#allocation3 + $0x8] sm:$0xff] %vm2210, %v2663
          %2674 = vst.msk [vmem:[#allocation3 + $0x10] sm:$0xff] %vm2210, %v2665
          %2675 = vst.msk [vmem:[#allocation3 + $0x18] sm:$0xff] %vm2210, %v2667
        $region76: #{tpu_custom_call.1} parent=71 // pred_fallthru
          _
        %s2676 = smul.u32 %s36, 32
        %v2677 = vld [vmem:[%s1] sm:$0xff]
        %v2678 = vld [vmem:[%s1 + $0x8] sm:$0xff]
        %v2679 = vld [vmem:[%s1 + $0x10] sm:$0xff]
        %v2680 = vld [vmem:[%s1 + $0x18] sm:$0xff]
        %v2681 = vld [vmem:[%s2] sm:$0xff]
        %v2682 = vld [vmem:[%s2 + $0x8] sm:$0xff]
        %v2683 = vld [vmem:[%s2 + $0x10] sm:$0xff]
        %v2684 = vld [vmem:[%s2 + $0x18] sm:$0xff]
        %s2685 = scalar_lea.vmem [#allocation2], %s2676
        %v2686 = vld [vmem:[%s2685] sm:$0xff]
        %v2687 = vld [vmem:[%s2685 + $0x8] sm:$0xff]
        %v2688 = vld [vmem:[%s2685 + $0x10] sm:$0xff]
        %v2689 = vld [vmem:[%s2685 + $0x18] sm:$0xff]
        %s2690 = scalar_lea.vmem [#allocation3], %s2676
        %v2691 = vld [vmem:[%s2690] sm:$0xff]
        %v2692 = vld [vmem:[%s2690 + $0x8] sm:$0xff]
        %v2693 = vld [vmem:[%s2690 + $0x10] sm:$0xff]
        %v2694 = vld [vmem:[%s2690 + $0x18] sm:$0xff]
        %vm2695 = vcmask 130048
        %v2697 = vsel %vm2695, %v2691, 0
        %v2700 = vsel %vm2695, %v2692, 0
        %v2703 = vsel %vm2695, %v2693, 0
        %v2706 = vsel %vm2695, %v2694, 0
        %2708 = vmatprep.subr.mxu0 %v2682
        %2709 = vmatpush1.msra.mxu0 %v2681
        %2710 = vmatprep.subr.mxu0 %v2684
        %2711 = vmatpush1.msra.mxu0 %v2683
        %2712 = vmatprep.subr.mxu0 0.0
        %2713 = vmatpush1.msra.mxu0 0.0
        %2714 = vmatprep.subr.mxu0 0.0
        %2715 = vmatpush1.msra.mxu0 0.0
        %2716 = vmatprep.subr.mxu0 0.0
        %2717 = vmatpush1.msra.mxu0 0.0
        %2718 = vmatprep.subr.mxu0 0.0
        %2719 = vmatpush1.msra.mxu0 0.0
        %2720 = vmatprep.subr.mxu0 0.0
        %2721 = vmatpush1.msra.mxu0 0.0
        %2722 = vmatprep.subr.mxu0 0.0
        %2723 = vmatpush1.msra.mxu0 0.0
        %2724 = vmatprep.subr.mxu0 0.0
        %2725 = vmatpush1.msra.mxu0 0.0
        %2726 = vmatprep.subr.mxu0 0.0
        %2727 = vmatpush1.msra.mxu0 0.0
        %2728 = vmatprep.subr.mxu0 0.0
        %2729 = vmatpush1.msra.mxu0 0.0
        %2730 = vmatprep.subr.mxu0 0.0
        %2731 = vmatpush1.msra.mxu0 0.0
        %2732 = vmatprep.subr.mxu0 0.0
        %2733 = vmatpush1.msra.mxu0 0.0
        %2734 = vmatprep.subr.mxu0 0.0
        %2735 = vmatpush1.msra.mxu0 0.0
        %2736 = vmatprep.subr.mxu0 0.0
        %2737 = vmatpush1.msra.mxu0 0.0
        %2738 = vmatprep.subr.mxu0 0.0
        %2739 = vmatpush1.msra.mxu0 0.0
        %2740 = vmatprep.subr.mxu0 0.0
        %2741 = vmatpush1.msra.mxu0 0.0
        %2742 = vmatprep.subr.mxu0 0.0
        %2743 = vmatpush1.msra.mxu0 0.0
        %2744 = vmatprep.subr.mxu0 0.0
        %2745 = vmatpush1.msra.mxu0 0.0
        %2746 = vmatprep.subr.mxu0 0.0
        %2747 = vmatpush1.msra.mxu0 0.0
        %2748 = vmatprep.subr.mxu0 0.0
        %2749 = vmatpush1.msra.mxu0 0.0
        %2750 = vmatprep.subr.mxu0 0.0
        %2751 = vmatpush1.msra.mxu0 0.0
        %2752 = vmatprep.subr.mxu0 0.0
        %2753 = vmatpush1.msra.mxu0 0.0
        %2754 = vmatprep.subr.mxu0 0.0
        %2755 = vmatpush1.msra.mxu0 0.0
        %2756 = vmatprep.subr.mxu0 0.0
        %2757 = vmatpush1.msra.mxu0 0.0
        %2758 = vmatprep.subr.mxu0 0.0
        %2759 = vmatpush1.msra.mxu0 0.0
        %2760 = vmatprep.subr.mxu0 0.0
        %2761 = vmatpush1.msra.mxu0 0.0
        %2762 = vmatprep.subr.mxu0 0.0
        %2763 = vmatpush1.msra.mxu0 0.0
        %2764 = vmatprep.subr.mxu0 0.0
        %2765 = vmatpush1.msra.mxu0 0.0
        %2766 = vmatprep.subr.mxu0 0.0
        %2767 = vmatpush1.msra.mxu0 0.0
        %2768 = vmatprep.subr.mxu0 0.0
        %2769 = vmatpush1.msra.mxu0 0.0
        %2770 = vmatprep.subr.mxu0 0.0
        %2771 = vmatpush1.msra.mxu0 0.0
        %2772 = vmatprep.mubr.f32.mxu0 0.0
        %2773 = vmatmul.mubr.f32.gmra.mrb[0].mxu0 %v2697
        %v2774 = vpop.f32.mrb[0].mxu0
        %v2775 = vadd.f32 0.0, %v2774
        %v2776 = vpop.f32.mrb[0].mxu0
        %v2777 = vadd.f32 0.0, %v2776
        %2778 = vmatprep.mubr.f32.mxu0 0.0
        %2779 = vmatmul.mubr.f32.gmra.mrb[0].mxu0 %v2700
        %v2780 = vpop.f32.mrb[0].mxu0
        %v2781 = vadd.f32 0.0, %v2780
        %v2782 = vpop.f32.mrb[0].mxu0
        %v2783 = vadd.f32 0.0, %v2782
        %2784 = vmatprep.mubr.f32.mxu0 0.0
        %2785 = vmatmul.mubr.f32.gmra.mrb[0].mxu0 %v2703
        %v2786 = vpop.f32.mrb[0].mxu0
        %v2787 = vadd.f32 0.0, %v2786
        %v2788 = vpop.f32.mrb[0].mxu0
        %v2789 = vadd.f32 0.0, %v2788
        %2790 = vmatprep.mubr.f32.mxu0 0.0
        %2791 = vmatmul.mubr.f32.gmra.mrb[0].mxu0 %v2706
        %v2792 = vpop.f32.mrb[0].mxu0
        %v2793 = vadd.f32 0.0, %v2792
        %v2794 = vpop.f32.mrb[0].mxu0
        %v2795 = vadd.f32 0.0, %v2794
        %2796 = vdwg.mxu0
        %v2798 = vsel %vm2695, %v2686, 0
        %v2801 = vsel %vm2695, %v2687, 0
        %v2804 = vsel %vm2695, %v2688, 0
        %v2807 = vsel %vm2695, %v2689, 0
        %2809 = vmatprep.subr.mxu0 %v2678
        %2810 = vmatpush1.msra.mxu0 %v2677
        %2811 = vmatprep.subr.mxu0 %v2680
        %2812 = vmatpush1.msra.mxu0 %v2679
        %2813 = vmatprep.subr.mxu0 0.0
        %2814 = vmatpush1.msra.mxu0 0.0
        %2815 = vmatprep.subr.mxu0 0.0
        %2816 = vmatpush1.msra.mxu0 0.0
        %2817 = vmatprep.subr.mxu0 0.0
        %2818 = vmatpush1.msra.mxu0 0.0
        %2819 = vmatprep.subr.mxu0 0.0
        %2820 = vmatpush1.msra.mxu0 0.0
        %2821 = vmatprep.subr.mxu0 0.0
        %2822 = vmatpush1.msra.mxu0 0.0
        %2823 = vmatprep.subr.mxu0 0.0
        %2824 = vmatpush1.msra.mxu0 0.0
        %2825 = vmatprep.subr.mxu0 0.0
        %2826 = vmatpush1.msra.mxu0 0.0
        %2827 = vmatprep.subr.mxu0 0.0
        %2828 = vmatpush1.msra.mxu0 0.0
        %2829 = vmatprep.subr.mxu0 0.0
        %2830 = vmatpush1.msra.mxu0 0.0
        %2831 = vmatprep.subr.mxu0 0.0
        %2832 = vmatpush1.msra.mxu0 0.0
        %2833 = vmatprep.subr.mxu0 0.0
        %2834 = vmatpush1.msra.mxu0 0.0
        %2835 = vmatprep.subr.mxu0 0.0
        %2836 = vmatpush1.msra.mxu0 0.0
        %2837 = vmatprep.subr.mxu0 0.0
        %2838 = vmatpush1.msra.mxu0 0.0
        %2839 = vmatprep.subr.mxu0 0.0
        %2840 = vmatpush1.msra.mxu0 0.0
        %2841 = vmatprep.subr.mxu0 0.0
        %2842 = vmatpush1.msra.mxu0 0.0
        %2843 = vmatprep.subr.mxu0 0.0
        %2844 = vmatpush1.msra.mxu0 0.0
        %2845 = vmatprep.subr.mxu0 0.0
        %2846 = vmatpush1.msra.mxu0 0.0
        %2847 = vmatprep.subr.mxu0 0.0
        %2848 = vmatpush1.msra.mxu0 0.0
        %2849 = vmatprep.subr.mxu0 0.0
        %2850 = vmatpush1.msra.mxu0 0.0
        %2851 = vmatprep.subr.mxu0 0.0
        %2852 = vmatpush1.msra.mxu0 0.0
        %2853 = vmatprep.subr.mxu0 0.0
        %2854 = vmatpush1.msra.mxu0 0.0
        %2855 = vmatprep.subr.mxu0 0.0
        %2856 = vmatpush1.msra.mxu0 0.0
        %2857 = vmatprep.subr.mxu0 0.0
        %2858 = vmatpush1.msra.mxu0 0.0
        %2859 = vmatprep.subr.mxu0 0.0
        %2860 = vmatpush1.msra.mxu0 0.0
        %2861 = vmatprep.subr.mxu0 0.0
        %2862 = vmatpush1.msra.mxu0 0.0
        %2863 = vmatprep.subr.mxu0 0.0
        %2864 = vmatpush1.msra.mxu0 0.0
        %2865 = vmatprep.subr.mxu0 0.0
        %2866 = vmatpush1.msra.mxu0 0.0
        %2867 = vmatprep.subr.mxu0 0.0
        %2868 = vmatpush1.msra.mxu0 0.0
        %2869 = vmatprep.subr.mxu0 0.0
        %2870 = vmatpush1.msra.mxu0 0.0
        %2871 = vmatprep.subr.mxu0 0.0
        %2872 = vmatpush1.msra.mxu0 0.0
        %2873 = vmatprep.mubr.f32.mxu0 0.0
        %2874 = vmatmul.mubr.f32.gmra.mrb[0].mxu0 %v2798
        %v2875 = vpop.f32.mrb[0].mxu0
        %v2876 = vadd.f32 %v2775, %v2875
        %v2877 = vpop.f32.mrb[0].mxu0
        %v2878 = vadd.f32 %v2777, %v2877
        %2879 = vmatprep.mubr.f32.mxu0 0.0
        %2880 = vmatmul.mubr.f32.gmra.mrb[0].mxu0 %v2801
        %v2881 = vpop.f32.mrb[0].mxu0
        %v2882 = vadd.f32 %v2781, %v2881
        %v2883 = vpop.f32.mrb[0].mxu0
        %v2884 = vadd.f32 %v2783, %v2883
        %2885 = vmatprep.mubr.f32.mxu0 0.0
        %2886 = vmatmul.mubr.f32.gmra.mrb[0].mxu0 %v2804
        %v2887 = vpop.f32.mrb[0].mxu0
        %v2888 = vadd.f32 %v2787, %v2887
        %v2889 = vpop.f32.mrb[0].mxu0
        %v2890 = vadd.f32 %v2789, %v2889
        %2891 = vmatprep.mubr.f32.mxu0 0.0
        %2892 = vmatmul.mubr.f32.gmra.mrb[0].mxu0 %v2807
        %v2893 = vpop.f32.mrb[0].mxu0
        %v2894 = vadd.f32 %v2793, %v2893
        %v2895 = vpop.f32.mrb[0].mxu0
        %v2896 = vadd.f32 %v2795, %v2895
        %2897 = vdwg.mxu0
        %s2898 = sshra.s32 %s2676, 3
        %s2899 = sand.u32 %s2676, 7
        %s2900 = smul.u32 %s2898, 2
        %s2901 = smul.addr %s2900, 8
        %s2902 = scalar_lea.vmem %s456, %s2901
        %v2903 = vld [vmem:[%s2902] sm:$0xff]
        %v2904 = vld [vmem:[%s2902 + $0x8] sm:$0xff]
        %v2905 = vld [vmem:[%s2902 + $0x10] sm:$0xff]
        %v2906 = vld [vmem:[%s2902 + $0x18] sm:$0xff]
        %v2907 = vld [vmem:[%s2902 + $0x20] sm:$0xff]
        %v2908 = vld [vmem:[%s2902 + $0x28] sm:$0xff]
        %v2909 = vld [vmem:[%s2902 + $0x30] sm:$0xff]
        %v2910 = vld [vmem:[%s2902 + $0x38] sm:$0xff]
        %v2911 = vmul.f32 %v2903, %v2876
        %v2912 = vmul.f32 %v2904, %v2878
        %v2913 = vmul.f32 %v2905, %v2882
        %v2914 = vmul.f32 %v2906, %v2884
        %v2915 = vmul.f32 %v2907, %v2888
        %v2916 = vmul.f32 %v2908, %v2890
        %v2917 = vmul.f32 %v2909, %v2894
        %v2918 = vmul.f32 %v2910, %v2896
        %2919 = vst [vmem:[%s451] sm:$0xff] %v2911
        %2920 = vst [vmem:[%s451 + $0x8] sm:$0xff] %v2912
        %2921 = vst [vmem:[%s451 + $0x10] sm:$0xff] %v2913
        %2922 = vst [vmem:[%s451 + $0x18] sm:$0xff] %v2914
        %2923 = vst [vmem:[%s451 + $0x20] sm:$0xff] %v2915
        %2924 = vst [vmem:[%s451 + $0x28] sm:$0xff] %v2916
        %2925 = vst [vmem:[%s451 + $0x30] sm:$0xff] %v2917
        %2926 = vst [vmem:[%s451 + $0x38] sm:$0xff] %v2918
        %s2927 = sand.u32 %s331, 1
        %s2928 = scalar_lea.sflag [#allocation7], %s2927
        %s2929 = sand.u32 %s331, 1
        %s2930 = smul.addr %s2929, 64
        %s2931 = scalar_lea.vmem [#allocation6], %s2930
        // Predicated region
        $region77: #{tpu_custom_call.1} parent=71 // pred_check
          %p2932 = pneg %p341
        $region78: #{tpu_custom_call.1} parent=71 // pred_check_branch
          %2934 = sbr.rel (%p2932) target = $region80
        $region79: #{tpu_custom_call.1} parent=71 // pred_region
          %s2935 = smul.u32 4, %s36
          %s2937 = ssub.s32 1024, 1024
          %2938 = vsyncadd %s2928, %s2937
          %s2939 = smul.addr %s2935, 2
          %s2940 = smul.addr %s35, 8
          %s2941 = sadd.s32 %s2939, %s2940
          %s2942 = smul.addr %s2941, 128
          %s2943 = scalar_lea.hbm %s13, %s2942
          %s2944 = sshll.u32 %s2931, 4
          %s2945 = int_to_ptr.vmem [resolvable:$true] %s2944
          %2950 = dma.vmem_to_hbm [thread:$0]  %s2945, 1024, %s2943, %s2928, 256, 256, 16
        $region80: #{tpu_custom_call.1} parent=71 // pred_fallthru
          _
      $region72: #{tpu_custom_call.1} parent=5 // pred_fallthru
        _
      %p2951 = scmp.le.s32.totalorder 2, %s26
      // Predicated region
      $region81: #{tpu_custom_call.1} parent=5 // pred_check
        %p2952 = pneg %p2951
      $region82: #{tpu_custom_call.1} parent=5 // pred_check_branch
        %2954 = sbr.rel (%p2952) target = $region84
      $region83: #{tpu_custom_call.1} parent=5 // pred_region
        %s2955 = ssub.s32 %s26, 2
        // Predicated region
        $region85: #{tpu_custom_call.1} parent=83 // pred_check
          %p2956 = pneg %p347
        $region86: #{tpu_custom_call.1} parent=83 // pred_check_branch
          %2958 = sbr.rel (%p2956) target = $region88
        $region87: #{tpu_custom_call.1} parent=83 // pred_region
          %s2959 = sand.u32 %s332, 1
          %s2960 = scalar_lea.sflag [#allocation7], %s2959
          %s2961 = sand.u32 %s332, 1
          %s2962 = smul.addr %s2961, 64
          %s2963 = scalar_lea.vmem [#allocation6], %s2962
          %2964 = dma.done %s2960, 1024
        $region88: #{tpu_custom_call.1} parent=83 // pred_fallthru
          _
      $region84: #{tpu_custom_call.1} parent=5 // pred_fallthru
        _
    $region6: #{tpu_custom_call.1} parent=1 // loop_footer
      %s30 = sadd.s32 1, %s26
    $region7: #{tpu_custom_call.1} parent=1 // loop_footer_branch
      %25 = sbr.rel target = $region3
    $region8: #{tpu_custom_call.1} parent=1 // loop_exit
      _
    %2965 = vsyncpa [#allocation7], 1
    %s2966 = scalar_lea.sflag [#allocation7], 1
    %2967 = vsyncpa %s2966, 1

</llo_original>
